<compile_context>
chip_gen: v7x
topology: tpu7x:2x2x1
jax: 0.10.0
libtpu: 0.0.40
codegen_flags: <defaults>
</compile_context>

<pallas_src>
import math
from functools import partial

import jax
import jax.numpy as jnp
from jax import lax
from jax.experimental import pallas as pl
from jax.experimental.pallas import tpu as pltpu


# ----------------------------------------------------------------------------
# In-kernel helpers
# ----------------------------------------------------------------------------

def _ln_body(x, g, b):
    """LayerNorm over the channel (last) dim, eps=1e-4 (attentions.LayerNorm)."""
    mean = jnp.mean(x, axis=-1, keepdims=True)
    var = jnp.mean(jnp.square(x - mean), axis=-1, keepdims=True)
    return (x - mean) * lax.rsqrt(var + 1e-4) * g + b


def _conv_taps(xm, w_flat, b_row, *, K):
    """Conv1d (stride 1, 'same' padding, odd K) on a channels-last (T, Cin) tile.

    xm     : (T, Cin) f32, already multiplied by the length mask (so taps reaching past
             the valid region and the zero padding region both contribute zeros).
    w_flat : (K*Cin, Cout) bf16  -- tap-major rows, i.e. rows [k*Cin:(k+1)*Cin] are tap k.
    b_row  : (1, Cout) f32.
    The K shifted views are built with pltpu.roll (XLU) + an iota edge mask (no
    sublane-unaligned slices), lane-concatenated, cast to bf16 once and fed to a single
    K*Cin-deep MXU matmul.
    """
    T = xm.shape[0]
    if K == 1:
        acc = jnp.dot(xm.astype(jnp.bfloat16), w_flat,
                      preferred_element_type=jnp.float32)
        return acc + b_row
    pad = K // 2
    rid = lax.broadcasted_iota(jnp.int32, (T, 1), 0)
    parts = []
    for k in range(K):
        s = k - pad                                   # out[t] += x[t + s] @ w[k]
        if s == 0:
            parts.append(xm)
        else:
            rolled = pltpu.roll(xm, shift=(-s) % T, axis=0)    # rolled[t] = xm[(t+s) % T]
            ok = (rid + s >= 0) & (rid + s < T)                # zero the wrapped rows
            parts.append(jnp.where(ok, rolled, 0.0))
    xcat = jnp.concatenate(parts, axis=-1).astype(jnp.bfloat16)   # (T, K*Cin), one cast
    acc = jnp.dot(xcat, w_flat, preferred_element_type=jnp.float32)
    return acc + b_row


# ----------------------------------------------------------------------------
# Pallas kernels
# ----------------------------------------------------------------------------

def _attn_ln_kernel(lens_ref, x_ref, wqkv_ref, bqkv_ref, wo_ref, bo_ref,
                    g_ref, beta_ref, o_ref, *, n_heads):
    """Per-batch fused: qkv 1x1 conv + MHA + output projection + LN1(x*mask + attn)."""
    T, H = x_ref.shape[1], x_ref.shape[2]
    d = H // n_heads
    L = lens_ref[pl.program_id(0)]
    valid = lax.broadcasted_iota(jnp.int32, (T, 1), 0) < L
    xm = jnp.where(valid, x_ref[0], 0.0)                         # x * x_mask (f32)

    qkv = jnp.dot(xm.astype(jnp.bfloat16), wqkv_ref[...],
                  preferred_element_type=jnp.float32) + bqkv_ref[...]   # (T, 3H)

    # mask predicate built once (no (T,T) per-head compares, no mask DMA at all)
    invalid = ((lax.broadcasted_iota(jnp.int32, (T, T), 0) >= L) |
               (lax.broadcasted_iota(jnp.int32, (T, T), 1) >= L))
    scale = 1.0 / math.sqrt(d)

    ctxs = []
    for h in range(n_heads):
        lo = h * d
        q = (qkv[:, lo:lo + d] * scale).astype(jnp.bfloat16)     # scale folded into q
        k = qkv[:, H + lo:H + lo + d].astype(jnp.bfloat16)
        v = qkv[:, 2 * H + lo:2 * H + lo + d].astype(jnp.bfloat16)
        s = lax.dot_general(q, k, (((1,), (1,)), ((), ())),
                            preferred_element_type=jnp.float32)  # (T, T)
        s = jnp.where(invalid, jnp.float32(-1e4), s)             # masked_fill(mask==0,-1e4)
        s = s - jnp.max(s, axis=-1, keepdims=True)
        e = jnp.exp(s)
        p = e * pl.reciprocal(jnp.sum(e, axis=-1, keepdims=True), approx=True)
        ctxs.append(jnp.dot(p.astype(jnp.bfloat16), v,
                            preferred_element_type=jnp.float32))  # (T, d)

    ctx = jnp.concatenate(ctxs, axis=-1).astype(jnp.bfloat16)     # (T, H)
    y = jnp.dot(ctx, wo_ref[...],                                 # one H-deep projection
                preferred_element_type=jnp.float32) + bo_ref[...]
    o_ref[...] = _ln_body(xm + y, g_ref[...], beta_ref[...])[None]


def _ffn_ln_kernel(lens_ref, x_ref, w1_ref, b1_ref, w2_ref, b2_ref,
                   g_ref, beta_ref, o_ref, *, K):
    """Per-batch fused FFN: conv1(x*m)+ReLU, conv2(h*m)*m, LN2(x + ffn)."""
    T = x_ref.shape[1]
    L = lens_ref[pl.program_id(0)]
    valid = lax.broadcasted_iota(jnp.int32, (T, 1), 0) < L
    x = x_ref[0]
    xm = jnp.where(valid, x, 0.0)
    h = jnp.maximum(_conv_taps(xm, w1_ref[...], b1_ref[...], K=K), 0.0)
    hm = jnp.where(valid, h, 0.0)
    y = _conv_taps(hm, w2_ref[...], b2_ref[...], K=K)
    y = jnp.where(valid, y, 0.0)                                  # FFN output * x_mask
    o_ref[...] = _ln_body(x + y, g_ref[...], beta_ref[...])[None]


def _proj_mask_kernel(lens_ref, x_ref, w_ref, b_ref, o_ref):
    """Per-batch fused 1x1 conv (proj_m | proj_s stacked on Cout) with output mask."""
    T = x_ref.shape[1]
    L = lens_ref[pl.program_id(0)]
    valid = lax.broadcasted_iota(jnp.int32, (T, 1), 0) < L
    xm = jnp.where(valid, x_ref[0], 0.0)
    y = jnp.dot(xm.astype(jnp.bfloat16), w_ref[...],
                preferred_element_type=jnp.float32) + b_ref[...]
    o_ref[...] = jnp.where(valid, y, 0.0)[None]


def _predictor_kernel(lens_ref, x_ref, w1_ref, b1_ref, g1_ref, be1_ref,
                      w2_ref, b2_ref, g2_ref, be2_ref, wp_ref, bp_ref, o_ref, *, K):
    """One full Duration/Pitch/Energy predictor per grid step (grid = (B, 3)).

    conv1+ReLU+LN, conv2+ReLU+LN, 1x1 proj, all masks from the prefetched length.
    The final single-channel result is emitted lane-dense as a (1, T) row via a
    transposed dot_general (no (T, 1) single-lane stores).
    """
    T = x_ref.shape[1]
    L = lens_ref[pl.program_id(0)]
    valid = lax.broadcasted_iota(jnp.int32, (T, 1), 0) < L
    xm = jnp.where(valid, x_ref[0], 0.0)
    h = _ln_body(jnp.maximum(_conv_taps(xm, w1_ref[0], b1_ref[0], K=K), 0.0),
                 g1_ref[0], be1_ref[0])
    hm = jnp.where(valid, h, 0.0)
    h = _ln_body(jnp.maximum(_conv_taps(hm, w2_ref[0], b2_ref[0], K=K), 0.0),
                 g2_ref[0], be2_ref[0])
    hm = jnp.where(valid, h, 0.0).astype(jnp.bfloat16)
    y = lax.dot_general(wp_ref[0], hm, (((1,), (1,)), ((), ())),
                        preferred_element_type=jnp.float32) + bp_ref[0]     # (1, T)
    y = jnp.where(lax.broadcasted_iota(jnp.int32, (1, T), 1) < L, y, 0.0)
    o_ref[...] = y[None, None]


# ----------------------------------------------------------------------------
# pallas_call wrappers (scalar-prefetched lengths, channels-last activations)
# ----------------------------------------------------------------------------

def attn_block(x, lens, lw, n_heads):
    B, T, H = x.shape
    const = lambda b, l: (0, 0)
    return pl.pallas_call(
        partial(_attn_ln_kernel, n_heads=n_heads),
        out_shape=jax.ShapeDtypeStruct((B, T, H), jnp.float32),
        grid_spec=pltpu.PrefetchScalarGridSpec(
            num_scalar_prefetch=1, grid=(B,),
            in_specs=[
                pl.BlockSpec((1, T, H), lambda b, l: (b, 0, 0)),
                pl.BlockSpec((H, 3 * H), const),
                pl.BlockSpec((1, 3 * H), const),
                pl.BlockSpec((H, H), const),
                pl.BlockSpec((1, H), const),
                pl.BlockSpec((1, H), const),
                pl.BlockSpec((1, H), const),
            ],
            out_specs=pl.BlockSpec((1, T, H), lambda b, l: (b, 0, 0)),
        ),
        compiler_params=pltpu.CompilerParams(dimension_semantics=("parallel",)),
    )(lens, x, lw['qkv_w'], lw['qkv_b'], lw['o_w'], lw['o_b'], lw['ln1_g'], lw['ln1_b'])


def ffn_block(x, lens, lw, K):
    B, T, H = x.shape
    F = lw['ffn_b1'].shape[-1]
    const = lambda b, l: (0, 0)
    return pl.pallas_call(
        partial(_ffn_ln_kernel, K=K),
        out_shape=jax.ShapeDtypeStruct((B, T, H), jnp.float32),
        grid_spec=pltpu.PrefetchScalarGridSpec(
            num_scalar_prefetch=1, grid=(B,),
            in_specs=[
                pl.BlockSpec((1, T, H), lambda b, l: (b, 0, 0)),
                pl.BlockSpec(lw['ffn_w1'].shape, const),
                pl.BlockSpec((1, F), const),
                pl.BlockSpec(lw['ffn_w2'].shape, const),
                pl.BlockSpec((1, H), const),
                pl.BlockSpec((1, H), const),
                pl.BlockSpec((1, H), const),
            ],
            out_specs=pl.BlockSpec((1, T, H), lambda b, l: (b, 0, 0)),
        ),
        compiler_params=pltpu.CompilerParams(dimension_semantics=("parallel",)),
    )(lens, x, lw['ffn_w1'], lw['ffn_b1'], lw['ffn_w2'], lw['ffn_b2'],
      lw['ln2_g'], lw['ln2_b'])


def proj_block(x, lens, w, b):
    B, T, H = x.shape
    Co = w.shape[-1]
    const = lambda i, l: (0, 0)
    return pl.pallas_call(
        _proj_mask_kernel,
        out_shape=jax.ShapeDtypeStruct((B, T, Co), jnp.float32),
        grid_spec=pltpu.PrefetchScalarGridSpec(
            num_scalar_prefetch=1, grid=(B,),
            in_specs=[
                pl.BlockSpec((1, T, H), lambda i, l: (i, 0, 0)),
                pl.BlockSpec((H, Co), const),
                pl.BlockSpec((1, Co), const),
            ],
            out_specs=pl.BlockSpec((1, T, Co), lambda i, l: (i, 0, 0)),
        ),
        compiler_params=pltpu.CompilerParams(dimension_semantics=("parallel",)),
    )(lens, x, w, b)


def predictor_block(x, lens, pp, K):
    """All three predictors in one pallas_call; returns (3, B, 1, T) f32."""
    B, T, H = x.shape
    F = pp['b1'].shape[-1]
    sel = lambda b, p, l: (p, 0, 0)
    return pl.pallas_call(
        partial(_predictor_kernel, K=K),
        out_shape=jax.ShapeDtypeStruct((3, B, 1, T), jnp.float32),
        grid_spec=pltpu.PrefetchScalarGridSpec(
            num_scalar_prefetch=1, grid=(B, 3),
            in_specs=[
                pl.BlockSpec((1, T, H), lambda b, p, l: (b, 0, 0)),
                pl.BlockSpec((1,) + pp['w1'].shape[1:], sel),
                pl.BlockSpec((1, 1, F), sel),
                pl.BlockSpec((1, 1, F), sel),
                pl.BlockSpec((1, 1, F), sel),
                pl.BlockSpec((1,) + pp['w2'].shape[1:], sel),
                pl.BlockSpec((1, 1, F), sel),
                pl.BlockSpec((1, 1, F), sel),
                pl.BlockSpec((1, 1, F), sel),
                pl.BlockSpec((1, 1, F), sel),
                pl.BlockSpec((1, 1, 1), sel),
            ],
            out_specs=pl.BlockSpec((1, 1, 1, T), lambda b, p, l: (p, b, 0, 0)),
        ),
        compiler_params=pltpu.CompilerParams(
            dimension_semantics=("parallel", "arbitrary")),
    )(lens, x, pp['w1'], pp['b1'], pp['g1'], pp['be1'],
      pp['w2'], pp['b2'], pp['g2'], pp['be2'], pp['wp'], pp['bp'])


# ----------------------------------------------------------------------------
# Model forward (channels-last activations end-to-end)
# ----------------------------------------------------------------------------

def text_encoder(kp, x_tokens, x_lengths, cfg):
    H, O = cfg['hidden_channels'], cfg['out_channels']
    lens = x_lengths.astype(jnp.int32)
    # TODO(synk): nn.Embedding gather has no clean blockwise Pallas mapping; left in plain JAX.
    x = kp['emb'][x_tokens] * math.sqrt(H)                                    # (B, T, H)
    B, T, _ = x.shape
    for i in range(cfg['n_layers']):
        lw = kp[f'layer_{i}']
        x = attn_block(x, lens, lw, cfg['n_heads'])                           # LN1 fused in
        x = ffn_block(x, lens, lw, cfg['kernel_size'])                        # LN2 fused in
    ms = proj_block(x, lens, kp['proj_ms_w'], kp['proj_ms_b'])                # (B, T, 2O)
    preds = predictor_block(x, lens, kp['pred'], cfg['kernel_size'])          # (3, B, 1, T)
    mask = (jnp.arange(T)[None, :] < lens[:, None]).astype(jnp.float32)
    nct = lambda u: jnp.transpose(u, (0, 2, 1))                               # -> (B, C, T)
    return (nct(ms[..., :O]), nct(ms[..., O:]),
            preds[0], preds[1], preds[2], mask[:, None, :])


# ----------------------------------------------------------------------------
# Parameters: PyTorch-layout init + one-time kernel-layout preparation
# ----------------------------------------------------------------------------

def init_params(key, cfg):
    H, F, Fdp = cfg['hidden_channels'], cfg['filter_channels'], cfg['filter_channels_dp']
    O, ks, V = cfg['out_channels'], cfg['kernel_size'], cfg['n_vocab']
    keys = iter(jax.random.split(key, 512))
    nk = lambda: next(keys)

    def conv(cout, cin, kk):
        std = 1.0 / math.sqrt(cin * kk)
        return (jax.random.normal(nk(), (cout, cin, kk), jnp.float32) * std,
                jax.random.normal(nk(), (cout,), jnp.float32) * std)

    p = {'emb': jax.random.normal(nk(), (V, H), jnp.float32) * (H ** -0.5)}
    for i in range(cfg['n_layers']):
        lp = {}
        lp['q_w'], lp['q_b'] = conv(H, H, 1)
        lp['k_w'], lp['k_b'] = conv(H, H, 1)
        lp['v_w'], lp['v_b'] = conv(H, H, 1)
        lp['o_w'], lp['o_b'] = conv(H, H, 1)
        lp['ln1_g'], lp['ln1_b'] = jnp.ones((H,), jnp.float32), jnp.zeros((H,), jnp.float32)
        lp['ffn_w1'], lp['ffn_b1'] = conv(F, H, ks)
        lp['ffn_w2'], lp['ffn_b2'] = conv(H, F, ks)
        lp['ln2_g'], lp['ln2_b'] = jnp.ones((H,), jnp.float32), jnp.zeros((H,), jnp.float32)
        p[f'layer_{i}'] = lp
    p['proj_m_w'], p['proj_m_b'] = conv(O, H, 1)
    p['proj_s_w'], p['proj_s_b'] = conv(O, H, 1)

    def pred():
        q = {}
        q['w1'], q['b1'] = conv(Fdp, H, ks)
        q['ln1_g'], q['ln1_b'] = jnp.ones((Fdp,), jnp.float32), jnp.zeros((Fdp,), jnp.float32)
        q['w2'], q['b2'] = conv(Fdp, Fdp, ks)
        q['ln2_g'], q['ln2_b'] = jnp.ones((Fdp,), jnp.float32), jnp.zeros((Fdp,), jnp.float32)
        q['wp'], q['bp'] = conv(1, Fdp, 1)
        return q

    p['dp'], p['pitch'], p['energy'] = pred(), pred(), pred()
    return p


def prepare_kernel_params(p, cfg):
    """One-time (outside jit) conversion to kernel layout: bf16 channels-last weights,
    tap-flattened conv kernels, fused qkv / proj_m|s stacks, stacked predictor slabs."""
    def wcl(w):                       # torch (Cout, Cin, K) -> (K*Cin, Cout) bf16
        cout, cin, kk = w.shape
        return jnp.transpose(w, (2, 1, 0)).reshape(kk * cin, cout).astype(jnp.bfloat16)

    def row(v):
        return v.reshape(1, -1).astype(jnp.float32)

    kp = {'emb': p['emb']}
    for i in range(cfg['n_layers']):
        lp = p[f'layer_{i}']
        kp[f'layer_{i}'] = dict(
            qkv_w=wcl(jnp.concatenate([lp['q_w'], lp['k_w'], lp['v_w']], axis=0)),
            qkv_b=row(jnp.concatenate([lp['q_b'], lp['k_b'], lp['v_b']], axis=0)),
            o_w=wcl(lp['o_w']), o_b=row(lp['o_b']),
            ln1_g=row(lp['ln1_g']), ln1_b=row(lp['ln1_b']),
            ffn_w1=wcl(lp['ffn_w1']), ffn_b1=row(lp['ffn_b1']),
            ffn_w2=wcl(lp['ffn_w2']), ffn_b2=row(lp['ffn_b2']),
            ln2_g=row(lp['ln2_g']), ln2_b=row(lp['ln2_b']),
        )
    kp['proj_ms_w'] = wcl(jnp.concatenate([p['proj_m_w'], p['proj_s_w']], axis=0))
    kp['proj_ms_b'] = row(jnp.concatenate([p['proj_m_b'], p['proj_s_b']], axis=0))
    preds = [p['dp'], p['pitch'], p['energy']]          # -> logw, pitch, energy
    kp['pred'] = dict(
        w1=jnp.stack([wcl(q['w1']) for q in preds]),
        b1=jnp.stack([row(q['b1']) for q in preds]),
        g1=jnp.stack([row(q['ln1_g']) for q in preds]),
        be1=jnp.stack([row(q['ln1_b']) for q in preds]),
        w2=jnp.stack([wcl(q['w2']) for q in preds]),
        b2=jnp.stack([row(q['b2']) for q in preds]),
        g2=jnp.stack([row(q['ln2_g']) for q in preds]),
        be2=jnp.stack([row(q['ln2_b']) for q in preds]),
        wp=jnp.stack([q['wp'][:, :, 0].astype(jnp.bfloat16) for q in preds]),   # (3,1,F)
        bp=jnp.stack([q['bp'].reshape(1, 1).astype(jnp.float32) for q in preds]),  # (3,1,1)
    )
    return kp


# ----------------------------------------------------------------------------
# Pure-JAX reference (follows the PyTorch module exactly) for a tolerance check
# ----------------------------------------------------------------------------

def reference_forward(params, x_tokens, x_lengths, cfg):
    H, O, K = cfg['hidden_channels'], cfg['out_channels'], cfg['kernel_size']
    nh = cfg['n_heads']
    d = H // nh
    x = params['emb'][x_tokens] * math.sqrt(H)                      # (B, T, H)
    B, T, _ = x.shape
    mask = (jnp.arange(T)[None, :] < x_lengths[:, None]).astype(jnp.float32)
    m = mask[:, :, None]
    amask = mask[:, None, :, None] * mask[:, None, None, :]         # (B,1,T,T)

    def conv1d(h, w, b, pad):
        cout, cin, kk = w.shape
        hp = jnp.pad(h, ((0, 0), (pad, pad), (0, 0)))
        y = sum(jnp.einsum('btc,oc->bto', hp[:, k:k + h.shape[1], :], w[:, :, k])
                for k in range(kk))
        return y + b[None, None, :]

    def ln(h, g, b):
        mu = jnp.mean(h, -1, keepdims=True)
        var = jnp.mean(jnp.square(h - mu), -1, keepdims=True)
        return (h - mu) * lax.rsqrt(var + 1e-4) * g + b

    for i in range(cfg['n_layers']):
        lp = params[f'layer_{i}']
        xm = x * m
        q = conv1d(xm, lp['q_w'], lp['q_b'], 0)
        k = conv1d(xm, lp['k_w'], lp['k_b'], 0)
        v = conv1d(xm, lp['v_w'], lp['v_b'], 0)
        qh, kh, vh = (t.reshape(B, T, nh, d) for t in (q, k, v))
        s = jnp.einsum('bqnd,bknd->bnqk', qh, kh) / math.sqrt(d)
        s = jnp.where(amask == 0.0, -1e4, s)
        pattn = jax.nn.softmax(s, axis=-1)
        ctx = jnp.einsum('bnqk,bknd->bqnd', pattn, vh).reshape(B, T, H)
        y = conv1d(ctx, lp['o_w'], lp['o_b'], 0)
        x = ln(xm + y, lp['ln1_g'], lp['ln1_b'])
        h1 = jnp.maximum(conv1d(x * m, lp['ffn_w1'], lp['ffn_b1'], K // 2), 0.0)
        y = conv1d(h1 * m, lp['ffn_w2'], lp['ffn_b2'], K // 2) * m
        x = ln(x + y, lp['ln2_g'], lp['ln2_b'])
    x = x * m

    x_m = conv1d(x, params['proj_m_w'], params['proj_m_b'], 0) * m
    x_logs = conv1d(x, params['proj_s_w'], params['proj_s_b'], 0) * m

    def predictor(px, pp):
        h = jnp.maximum(conv1d(px * m, pp['w1'], pp['b1'], K // 2), 0.0)
        h = ln(h, pp['ln1_g'], pp['ln1_b'])
        h = jnp.maximum(conv1d(h * m, pp['w2'], pp['b2'], K // 2), 0.0)
        h = ln(h, pp['ln2_g'], pp['ln2_b'])
        return conv1d(h * m, pp['wp'], pp['bp'], 0) * m

    logw = predictor(x, params['dp'])
    pitch = predictor(x, params['pitch'])
    energy = predictor(x, params['energy'])
    nct = lambda u: jnp.transpose(u, (0, 2, 1))
    return (nct(x_m), nct(x_logs), nct(logw), nct(pitch), nct(energy), mask[:, None, :])


# ----------------------------------------------------------------------------
# Main
# ----------------------------------------------------------------------------

if __name__ == "__main__":
    cfg = dict(
        n_vocab=40,
        out_channels=16,
        hidden_channels=32,
        filter_channels=64,
        filter_channels_dp=32,
        n_heads=2,
        n_layers=2,
        kernel_size=3,
        p_dropout=0.0,          # dropout == identity in this forward
    )

    key = jax.random.PRNGKey(0)
    kparam_key, ktok_key = jax.random.split(key)
    params = init_params(kparam_key, cfg)
    kparams = prepare_kernel_params(params, cfg)       # one-time kernel-layout conversion

    B, T = 2, 8
    x_tokens = jax.random.randint(ktok_key, (B, T), 0, cfg['n_vocab'])
    x_lengths = jnp.array([8, 6], jnp.int32)

    fwd = jax.jit(lambda p, a, b: text_encoder(p, a, b, cfg))
    out = fwd(kparams, x_tokens, x_lengths)
    out = jax.tree_util.tree_map(jax.block_until_ready, out)

    x_m, x_logs, logw, pitch, energy, x_mask = out
    assert x_m.shape == (B, cfg['out_channels'], T)
    assert x_logs.shape == (B, cfg['out_channels'], T)
    assert logw.shape == (B, 1, T)
    assert pitch.shape == (B, 1, T)
    assert energy.shape == (B, 1, T)
    assert x_mask.shape == (B, 1, T)
    for a in out:
        assert bool(jnp.all(jnp.isfinite(a)))

    # Tolerance-asserted check against a pure-JAX reference of the PyTorch forward
    # (kernel uses bf16 MXU operands + approx reciprocal -> small numerical drift).
    ref = reference_forward(params, x_tokens, x_lengths, cfg)
    max_diff = max(float(jnp.max(jnp.abs(a - b))) for a, b in zip(out, ref))
    assert max_diff < 0.2, f"kernel/reference mismatch: max abs diff = {max_diff}"

    print("KERNEL_OK")
</pallas_src>

<mosaic_0001>
module attributes {stable_mosaic.version = 11 : i64} {
  func.func @_attn_ln_kernel(%arg0: i32, %arg1: memref<2xi32, #tpu.memory_space<smem>>, %arg2: memref<1x8x32xf32, #tpu.memory_space<vmem>>, %arg3: memref<32x96xbf16, #tpu.memory_space<vmem>>, %arg4: memref<1x96xf32, #tpu.memory_space<vmem>>, %arg5: memref<32x32xbf16, #tpu.memory_space<vmem>>, %arg6: memref<1x32xf32, #tpu.memory_space<vmem>>, %arg7: memref<1x32xf32, #tpu.memory_space<vmem>>, %arg8: memref<1x32xf32, #tpu.memory_space<vmem>>, %arg9: memref<1x8x32xf32, #tpu.memory_space<vmem>>) attributes {dimension_semantics = [#tpu.dimension_semantics<parallel>], iteration_bounds = array<i64: 2>, scalar_prefetch = 1 : i64, scratch_operands = 0 : i64, tpu.core_type = #tpu.core_type<tc>, window_params = [{transform_indices = @transform_0, window_bounds = array<i64: 1, 8, 32>}, {pipeline_mode = #tpu.pipeline_mode<synchronous>, transform_indices = @transform_1, window_bounds = array<i64: 32, 96>}, {pipeline_mode = #tpu.pipeline_mode<synchronous>, transform_indices = @transform_2, window_bounds = array<i64: 1, 96>}, {pipeline_mode = #tpu.pipeline_mode<synchronous>, transform_indices = @transform_3, window_bounds = array<i64: 32, 32>}, {pipeline_mode = #tpu.pipeline_mode<synchronous>, transform_indices = @transform_4, window_bounds = array<i64: 1, 32>}, {pipeline_mode = #tpu.pipeline_mode<synchronous>, transform_indices = @transform_5, window_bounds = array<i64: 1, 32>}, {pipeline_mode = #tpu.pipeline_mode<synchronous>, transform_indices = @transform_6, window_bounds = array<i64: 1, 32>}, {transform_indices = @transform_7, window_bounds = array<i64: 1, 8, 32>}]} {
    %0 = arith.index_cast %arg0 : i32 to index
    %1 = memref.load %arg1[%0] : memref<2xi32, #tpu.memory_space<smem>>
    %2 = tpu.iota {dimensions = array<i32: 0>} : vector<8x1xi32>
    %3 = vector.broadcast %1 : i32 to vector<8x1xi32>
    %4 = arith.cmpi slt, %2, %3 : vector<8x1xi32>
    %c0 = arith.constant 0 : index
    %c0_0 = arith.constant 0 : index
    %c0_1 = arith.constant 0 : index
    %5 = vector.load %arg2[%c0, %c0_0, %c0_1] : memref<1x8x32xf32, #tpu.memory_space<vmem>>, vector<1x8x32xf32>
    %6 = vector.shape_cast %5 : vector<1x8x32xf32> to vector<8x32xf32>
    %cst = arith.constant 0.000000e+00 : f32
    %7 = vector.shape_cast %4 : vector<8x1xi1> to vector<8x1xi1>
    %8 = vector.broadcast %7 : vector<8x1xi1> to vector<8x32xi1>
    %9 = vector.broadcast %cst : f32 to vector<8x32xf32>
    %10 = arith.select %8, %6, %9 : vector<8x32xi1>, vector<8x32xf32>
    %11 = arith.truncf %10 : vector<8x32xf32> to vector<8x32xbf16>
    %c0_2 = arith.constant 0 : index
    %c0_3 = arith.constant 0 : index
    %12 = vector.load %arg3[%c0_2, %c0_3] : memref<32x96xbf16, #tpu.memory_space<vmem>>, vector<32x96xbf16>
    %cst_4 = arith.constant dense<0.000000e+00> : vector<8x96xf32>
    %13 = tpu.matmul %11, %12, %cst_4 {dimension_numbers = #tpu.dot_dimension_numbers<[1], [0], [0], [1], [0, 0, 1, 1], [], []>} : vector<8x32xbf16>, vector<32x96xbf16>, vector<8x96xf32> -> vector<8x96xf32>
    %c0_5 = arith.constant 0 : index
    %c0_6 = arith.constant 0 : index
    %14 = vector.load %arg4[%c0_5, %c0_6] : memref<1x96xf32, #tpu.memory_space<vmem>>, vector<1x96xf32>
    %15 = vector.broadcast %14 : vector<1x96xf32> to vector<8x96xf32>
    %16 = arith.addf %13, %15 : vector<8x96xf32>
    %17 = tpu.iota {dimensions = array<i32: 0>} : vector<8x8xi32>
    %18 = vector.broadcast %1 : i32 to vector<8x8xi32>
    %19 = arith.cmpi sge, %17, %18 : vector<8x8xi32>
    %20 = tpu.iota {dimensions = array<i32: 1>} : vector<8x8xi32>
    %21 = vector.broadcast %1 : i32 to vector<8x8xi32>
    %22 = arith.cmpi sge, %20, %21 : vector<8x8xi32>
    %23 = arith.ori %19, %22 : vector<8x8xi1>
    %24 = vector.extract_strided_slice %16 {offsets = [0, 0], sizes = [8, 16], strides = [1, 1]} : vector<8x96xf32> to vector<8x16xf32>
    %cst_7 = arith.constant 2.500000e-01 : f32
    %25 = vector.broadcast %cst_7 : f32 to vector<8x16xf32>
    %26 = arith.mulf %24, %25 : vector<8x16xf32>
    %27 = arith.truncf %26 : vector<8x16xf32> to vector<8x16xbf16>
    %28 = vector.extract_strided_slice %16 {offsets = [0, 32], sizes = [8, 16], strides = [1, 1]} : vector<8x96xf32> to vector<8x16xf32>
    %29 = arith.truncf %28 : vector<8x16xf32> to vector<8x16xbf16>
    %30 = vector.extract_strided_slice %16 {offsets = [0, 64], sizes = [8, 16], strides = [1, 1]} : vector<8x96xf32> to vector<8x16xf32>
    %31 = arith.truncf %30 : vector<8x16xf32> to vector<8x16xbf16>
    %cst_8 = arith.constant dense<0.000000e+00> : vector<8x8xf32>
    %32 = tpu.matmul %27, %29, %cst_8 {dimension_numbers = #tpu.dot_dimension_numbers<[1], [1], [0], [0], [0, 0, 1, 0], [], []>} : vector<8x16xbf16>, vector<8x16xbf16>, vector<8x8xf32> -> vector<8x8xf32>
    %cst_9 = arith.constant -1.000000e+04 : f32
    %33 = vector.broadcast %cst_9 : f32 to vector<8x8xf32>
    %34 = arith.select %23, %33, %32 : vector<8x8xi1>, vector<8x8xf32>
    %cst_10 = arith.constant dense<0xFF800000> : vector<8xf32>
    %35 = vector.multi_reduction <maximumf>, %34, %cst_10 [1] : vector<8x8xf32> to vector<8xf32>
    %36 = vector.shape_cast %35 : vector<8xf32> to vector<8x1xf32>
    %37 = vector.broadcast %36 : vector<8x1xf32> to vector<8x8xf32>
    %38 = arith.subf %34, %37 : vector<8x8xf32>
    %39 = math.exp %38 : vector<8x8xf32>
    %cst_11 = arith.constant dense<0.000000e+00> : vector<8xf32>
    %40 = vector.multi_reduction <add>, %39, %cst_11 [1] : vector<8x8xf32> to vector<8xf32>
    %41 = vector.shape_cast %40 : vector<8xf32> to vector<8x1xf32>
    %42 = tpu.reciprocal %41 {approx = true} : vector<8x1xf32> -> vector<8x1xf32>
    %43 = vector.broadcast %42 : vector<8x1xf32> to vector<8x8xf32>
    %44 = arith.mulf %39, %43 : vector<8x8xf32>
    %45 = arith.truncf %44 : vector<8x8xf32> to vector<8x8xbf16>
    %cst_12 = arith.constant dense<0.000000e+00> : vector<8x16xf32>
    %46 = tpu.matmul %45, %31, %cst_12 {dimension_numbers = #tpu.dot_dimension_numbers<[1], [0], [0], [1], [0, 0, 1, 1], [], []>} : vector<8x8xbf16>, vector<8x16xbf16>, vector<8x16xf32> -> vector<8x16xf32>
    %47 = vector.extract_strided_slice %16 {offsets = [0, 16], sizes = [8, 16], strides = [1, 1]} : vector<8x96xf32> to vector<8x16xf32>
    %cst_13 = arith.constant 2.500000e-01 : f32
    %48 = vector.broadcast %cst_13 : f32 to vector<8x16xf32>
    %49 = arith.mulf %47, %48 : vector<8x16xf32>
    %50 = arith.truncf %49 : vector<8x16xf32> to vector<8x16xbf16>
    %51 = vector.extract_strided_slice %16 {offsets = [0, 48], sizes = [8, 16], strides = [1, 1]} : vector<8x96xf32> to vector<8x16xf32>
    %52 = arith.truncf %51 : vector<8x16xf32> to vector<8x16xbf16>
    %53 = vector.extract_strided_slice %16 {offsets = [0, 80], sizes = [8, 16], strides = [1, 1]} : vector<8x96xf32> to vector<8x16xf32>
    %54 = arith.truncf %53 : vector<8x16xf32> to vector<8x16xbf16>
    %cst_14 = arith.constant dense<0.000000e+00> : vector<8x8xf32>
    %55 = tpu.matmul %50, %52, %cst_14 {dimension_numbers = #tpu.dot_dimension_numbers<[1], [1], [0], [0], [0, 0, 1, 0], [], []>} : vector<8x16xbf16>, vector<8x16xbf16>, vector<8x8xf32> -> vector<8x8xf32>
    %cst_15 = arith.constant -1.000000e+04 : f32
    %56 = vector.broadcast %cst_15 : f32 to vector<8x8xf32>
    %57 = arith.select %23, %56, %55 : vector<8x8xi1>, vector<8x8xf32>
    %cst_16 = arith.constant dense<0xFF800000> : vector<8xf32>
    %58 = vector.multi_reduction <maximumf>, %57, %cst_16 [1] : vector<8x8xf32> to vector<8xf32>
    %59 = vector.shape_cast %58 : vector<8xf32> to vector<8x1xf32>
    %60 = vector.broadcast %59 : vector<8x1xf32> to vector<8x8xf32>
    %61 = arith.subf %57, %60 : vector<8x8xf32>
    %62 = math.exp %61 : vector<8x8xf32>
    %cst_17 = arith.constant dense<0.000000e+00> : vector<8xf32>
    %63 = vector.multi_reduction <add>, %62, %cst_17 [1] : vector<8x8xf32> to vector<8xf32>
    %64 = vector.shape_cast %63 : vector<8xf32> to vector<8x1xf32>
    %65 = tpu.reciprocal %64 {approx = true} : vector<8x1xf32> -> vector<8x1xf32>
    %66 = vector.broadcast %65 : vector<8x1xf32> to vector<8x8xf32>
    %67 = arith.mulf %62, %66 : vector<8x8xf32>
    %68 = arith.truncf %67 : vector<8x8xf32> to vector<8x8xbf16>
    %cst_18 = arith.constant dense<0.000000e+00> : vector<8x16xf32>
    %69 = tpu.matmul %68, %54, %cst_18 {dimension_numbers = #tpu.dot_dimension_numbers<[1], [0], [0], [1], [0, 0, 1, 1], [], []>} : vector<8x8xbf16>, vector<8x16xbf16>, vector<8x16xf32> -> vector<8x16xf32>
    %70 = tpu.concatenate %46, %69 in 1 : vector<8x16xf32>, vector<8x16xf32> -> vector<8x32xf32>
    %71 = arith.truncf %70 : vector<8x32xf32> to vector<8x32xbf16>
    %c0_19 = arith.constant 0 : index
    %c0_20 = arith.constant 0 : index
    %72 = vector.load %arg5[%c0_19, %c0_20] : memref<32x32xbf16, #tpu.memory_space<vmem>>, vector<32x32xbf16>
    %cst_21 = arith.constant dense<0.000000e+00> : vector<8x32xf32>
    %73 = tpu.matmul %71, %72, %cst_21 {dimension_numbers = #tpu.dot_dimension_numbers<[1], [0], [0], [1], [0, 0, 1, 1], [], []>} : vector<8x32xbf16>, vector<32x32xbf16>, vector<8x32xf32> -> vector<8x32xf32>
    %c0_22 = arith.constant 0 : index
    %c0_23 = arith.constant 0 : index
    %74 = vector.load %arg6[%c0_22, %c0_23] : memref<1x32xf32, #tpu.memory_space<vmem>>, vector<1x32xf32>
    %75 = vector.broadcast %74 : vector<1x32xf32> to vector<8x32xf32>
    %76 = arith.addf %73, %75 : vector<8x32xf32>
    %77 = arith.addf %10, %76 : vector<8x32xf32>
    %c0_24 = arith.constant 0 : index
    %c0_25 = arith.constant 0 : index
    %78 = vector.load %arg7[%c0_24, %c0_25] : memref<1x32xf32, #tpu.memory_space<vmem>>, vector<1x32xf32>
    %c0_26 = arith.constant 0 : index
    %c0_27 = arith.constant 0 : index
    %79 = vector.load %arg8[%c0_26, %c0_27] : memref<1x32xf32, #tpu.memory_space<vmem>>, vector<1x32xf32>
    %cst_28 = arith.constant dense<0.000000e+00> : vector<8xf32>
    %80 = vector.multi_reduction <add>, %77, %cst_28 [1] : vector<8x32xf32> to vector<8xf32>
    %81 = vector.shape_cast %80 : vector<8xf32> to vector<8x1xf32>
    %cst_29 = arith.constant 3.200000e+01 : f32
    %82 = vector.broadcast %cst_29 : f32 to vector<8x1xf32>
    %83 = arith.divf %81, %82 : vector<8x1xf32>
    %84 = vector.broadcast %83 : vector<8x1xf32> to vector<8x32xf32>
    %85 = arith.subf %77, %84 : vector<8x32xf32>
    %86 = arith.mulf %85, %85 : vector<8x32xf32>
    %cst_30 = arith.constant dense<0.000000e+00> : vector<8xf32>
    %87 = vector.multi_reduction <add>, %86, %cst_30 [1] : vector<8x32xf32> to vector<8xf32>
    %88 = vector.shape_cast %87 : vector<8xf32> to vector<8x1xf32>
    %cst_31 = arith.constant 3.200000e+01 : f32
    %89 = vector.broadcast %cst_31 : f32 to vector<8x1xf32>
    %90 = arith.divf %88, %89 : vector<8x1xf32>
    %91 = vector.broadcast %83 : vector<8x1xf32> to vector<8x32xf32>
    %92 = arith.subf %77, %91 : vector<8x32xf32>
    %cst_32 = arith.constant 9.99999974E-5 : f32
    %93 = vector.broadcast %cst_32 : f32 to vector<8x1xf32>
    %94 = arith.addf %90, %93 : vector<8x1xf32>
    %95 = math.rsqrt %94 : vector<8x1xf32>
    %96 = vector.broadcast %95 : vector<8x1xf32> to vector<8x32xf32>
    %97 = arith.mulf %92, %96 : vector<8x32xf32>
    %98 = vector.broadcast %78 : vector<1x32xf32> to vector<8x32xf32>
    %99 = arith.mulf %97, %98 : vector<8x32xf32>
    %100 = vector.broadcast %79 : vector<1x32xf32> to vector<8x32xf32>
    %101 = arith.addf %99, %100 : vector<8x32xf32>
    %102 = vector.shape_cast %101 : vector<8x32xf32> to vector<1x8x32xf32>
    %c0_33 = arith.constant 0 : index
    %c0_34 = arith.constant 0 : index
    %c0_35 = arith.constant 0 : index
    %103 = vector.load %arg9[%c0_33, %c0_34, %c0_35] : memref<1x8x32xf32, #tpu.memory_space<vmem>>, vector<1x8x32xf32>
    tpu.vector_store %arg9[%c0_33, %c0_34, %c0_35], %102 {strides = array<i32>} : memref<1x8x32xf32, #tpu.memory_space<vmem>>, vector<1x8x32xf32>,
    return
  }
  func.func @transform_0(%arg0: i32, %arg1: memref<2xi32, #tpu.memory_space<smem>>) -> (i32, i32, i32) {
    %c0_i32 = arith.constant 0 : i32
    %c0_i32_0 = arith.constant 0 : i32
    %c0_i32_1 = arith.constant 0 : i32
    return %arg0, %c0_i32, %c0_i32_0 : i32, i32, i32
  }
  func.func @transform_1(%arg0: i32, %arg1: memref<2xi32, #tpu.memory_space<smem>>) -> (i32, i32) {
    %c0_i32 = arith.constant 0 : i32
    %c0_i32_0 = arith.constant 0 : i32
    %c0_i32_1 = arith.constant 0 : i32
    return %c0_i32, %c0_i32_0 : i32, i32
  }
  func.func @transform_2(%arg0: i32, %arg1: memref<2xi32, #tpu.memory_space<smem>>) -> (i32, i32) {
    %c0_i32 = arith.constant 0 : i32
    %c0_i32_0 = arith.constant 0 : i32
    %c0_i32_1 = arith.constant 0 : i32
    return %c0_i32, %c0_i32_0 : i32, i32
  }
  func.func @transform_3(%arg0: i32, %arg1: memref<2xi32, #tpu.memory_space<smem>>) -> (i32, i32) {
    %c0_i32 = arith.constant 0 : i32
    %c0_i32_0 = arith.constant 0 : i32
    %c0_i32_1 = arith.constant 0 : i32
    return %c0_i32, %c0_i32_0 : i32, i32
  }
  func.func @transform_4(%arg0: i32, %arg1: memref<2xi32, #tpu.memory_space<smem>>) -> (i32, i32) {
    %c0_i32 = arith.constant 0 : i32
    %c0_i32_0 = arith.constant 0 : i32
    %c0_i32_1 = arith.constant 0 : i32
    return %c0_i32, %c0_i32_0 : i32, i32
  }
  func.func @transform_5(%arg0: i32, %arg1: memref<2xi32, #tpu.memory_space<smem>>) -> (i32, i32) {
    %c0_i32 = arith.constant 0 : i32
    %c0_i32_0 = arith.constant 0 : i32
    %c0_i32_1 = arith.constant 0 : i32
    return %c0_i32, %c0_i32_0 : i32, i32
  }
  func.func @transform_6(%arg0: i32, %arg1: memref<2xi32, #tpu.memory_space<smem>>) -> (i32, i32) {
    %c0_i32 = arith.constant 0 : i32
    %c0_i32_0 = arith.constant 0 : i32
    %c0_i32_1 = arith.constant 0 : i32
    return %c0_i32, %c0_i32_0 : i32, i32
  }
  func.func @transform_7(%arg0: i32, %arg1: memref<2xi32, #tpu.memory_space<smem>>) -> (i32, i32, i32) {
    %c0_i32 = arith.constant 0 : i32
    %c0_i32_0 = arith.constant 0 : i32
    %c0_i32_1 = arith.constant 0 : i32
    return %arg0, %c0_i32, %c0_i32_0 : i32, i32, i32
  }
}

module attributes {stable_mosaic.version = 11 : i64} {
  func.func @_ffn_ln_kernel(%arg0: i32, %arg1: memref<2xi32, #tpu.memory_space<smem>>, %arg2: memref<1x8x32xf32, #tpu.memory_space<vmem>>, %arg3: memref<96x64xbf16, #tpu.memory_space<vmem>>, %arg4: memref<1x64xf32, #tpu.memory_space<vmem>>, %arg5: memref<192x32xbf16, #tpu.memory_space<vmem>>, %arg6: memref<1x32xf32, #tpu.memory_space<vmem>>, %arg7: memref<1x32xf32, #tpu.memory_space<vmem>>, %arg8: memref<1x32xf32, #tpu.memory_space<vmem>>, %arg9: memref<1x8x32xf32, #tpu.memory_space<vmem>>) attributes {dimension_semantics = [#tpu.dimension_semantics<parallel>], iteration_bounds = array<i64: 2>, scalar_prefetch = 1 : i64, scratch_operands = 0 : i64, tpu.core_type = #tpu.core_type<tc>, window_params = [{transform_indices = @transform_0, window_bounds = array<i64: 1, 8, 32>}, {pipeline_mode = #tpu.pipeline_mode<synchronous>, transform_indices = @transform_1, window_bounds = array<i64: 96, 64>}, {pipeline_mode = #tpu.pipeline_mode<synchronous>, transform_indices = @transform_2, window_bounds = array<i64: 1, 64>}, {pipeline_mode = #tpu.pipeline_mode<synchronous>, transform_indices = @transform_3, window_bounds = array<i64: 192, 32>}, {pipeline_mode = #tpu.pipeline_mode<synchronous>, transform_indices = @transform_4, window_bounds = array<i64: 1, 32>}, {pipeline_mode = #tpu.pipeline_mode<synchronous>, transform_indices = @transform_5, window_bounds = array<i64: 1, 32>}, {pipeline_mode = #tpu.pipeline_mode<synchronous>, transform_indices = @transform_6, window_bounds = array<i64: 1, 32>}, {transform_indices = @transform_7, window_bounds = array<i64: 1, 8, 32>}]} {
    %0 = arith.index_cast %arg0 : i32 to index
    %1 = memref.load %arg1[%0] : memref<2xi32, #tpu.memory_space<smem>>
    %2 = tpu.iota {dimensions = array<i32: 0>} : vector<8x1xi32>
    %3 = vector.broadcast %1 : i32 to vector<8x1xi32>
    %4 = arith.cmpi slt, %2, %3 : vector<8x1xi32>
    %c0 = arith.constant 0 : index
    %c0_0 = arith.constant 0 : index
    %c0_1 = arith.constant 0 : index
    %5 = vector.load %arg2[%c0, %c0_0, %c0_1] : memref<1x8x32xf32, #tpu.memory_space<vmem>>, vector<1x8x32xf32>
    %6 = vector.shape_cast %5 : vector<1x8x32xf32> to vector<8x32xf32>
    %cst = arith.constant 0.000000e+00 : f32
    %7 = vector.shape_cast %4 : vector<8x1xi1> to vector<8x1xi1>
    %8 = vector.broadcast %7 : vector<8x1xi1> to vector<8x32xi1>
    %9 = vector.broadcast %cst : f32 to vector<8x32xf32>
    %10 = arith.select %8, %6, %9 : vector<8x32xi1>, vector<8x32xf32>
    %c0_2 = arith.constant 0 : index
    %c0_3 = arith.constant 0 : index
    %11 = vector.load %arg3[%c0_2, %c0_3] : memref<96x64xbf16, #tpu.memory_space<vmem>>, vector<96x64xbf16>
    %c0_4 = arith.constant 0 : index
    %c0_5 = arith.constant 0 : index
    %12 = vector.load %arg4[%c0_4, %c0_5] : memref<1x64xf32, #tpu.memory_space<vmem>>, vector<1x64xf32>
    %13 = tpu.iota {dimensions = array<i32: 0>} : vector<8x1xi32>
    %c1_i32 = arith.constant 1 : i32
    %14 = tpu.dynamic_rotate %10 by %c1_i32 dim 0 : vector<8x32xf32>, i32 -> vector<8x32xf32>
    %c-1_i32 = arith.constant -1 : i32
    %15 = vector.broadcast %c-1_i32 : i32 to vector<8x1xi32>
    %16 = arith.addi %13, %15 : vector<8x1xi32>
    %c0_i32 = arith.constant 0 : i32
    %17 = vector.broadcast %c0_i32 : i32 to vector<8x1xi32>
    %18 = arith.cmpi sge, %16, %17 : vector<8x1xi32>
    %c-1_i32_6 = arith.constant -1 : i32
    %19 = vector.broadcast %c-1_i32_6 : i32 to vector<8x1xi32>
    %20 = arith.addi %13, %19 : vector<8x1xi32>
    %c8_i32 = arith.constant 8 : i32
    %21 = vector.broadcast %c8_i32 : i32 to vector<8x1xi32>
    %22 = arith.cmpi slt, %20, %21 : vector<8x1xi32>
    %23 = arith.andi %18, %22 : vector<8x1xi1>
    %cst_7 = arith.constant 0.000000e+00 : f32
    %24 = vector.shape_cast %23 : vector<8x1xi1> to vector<8x1xi1>
    %25 = vector.broadcast %24 : vector<8x1xi1> to vector<8x32xi1>
    %26 = vector.broadcast %cst_7 : f32 to vector<8x32xf32>
    %27 = arith.select %25, %14, %26 : vector<8x32xi1>, vector<8x32xf32>
    %c7_i32 = arith.constant 7 : i32
    %28 = tpu.dynamic_rotate %10 by %c7_i32 dim 0 : vector<8x32xf32>, i32 -> vector<8x32xf32>
    %c1_i32_8 = arith.constant 1 : i32
    %29 = vector.broadcast %c1_i32_8 : i32 to vector<8x1xi32>
    %30 = arith.addi %13, %29 : vector<8x1xi32>
    %c0_i32_9 = arith.constant 0 : i32
    %31 = vector.broadcast %c0_i32_9 : i32 to vector<8x1xi32>
    %32 = arith.cmpi sge, %30, %31 : vector<8x1xi32>
    %c1_i32_10 = arith.constant 1 : i32
    %33 = vector.broadcast %c1_i32_10 : i32 to vector<8x1xi32>
    %34 = arith.addi %13, %33 : vector<8x1xi32>
    %c8_i32_11 = arith.constant 8 : i32
    %35 = vector.broadcast %c8_i32_11 : i32 to vector<8x1xi32>
    %36 = arith.cmpi slt, %34, %35 : vector<8x1xi32>
    %37 = arith.andi %32, %36 : vector<8x1xi1>
    %cst_12 = arith.constant 0.000000e+00 : f32
    %38 = vector.shape_cast %37 : vector<8x1xi1> to vector<8x1xi1>
    %39 = vector.broadcast %38 : vector<8x1xi1> to vector<8x32xi1>
    %40 = vector.broadcast %cst_12 : f32 to vector<8x32xf32>
    %41 = arith.select %39, %28, %40 : vector<8x32xi1>, vector<8x32xf32>
    %42 = tpu.concatenate %27, %10, %41 in 1 : vector<8x32xf32>, vector<8x32xf32>, vector<8x32xf32> -> vector<8x96xf32>
    %43 = arith.truncf %42 : vector<8x96xf32> to vector<8x96xbf16>
    %cst_13 = arith.constant dense<0.000000e+00> : vector<8x64xf32>
    %44 = tpu.matmul %43, %11, %cst_13 {dimension_numbers = #tpu.dot_dimension_numbers<[1], [0], [0], [1], [0, 0, 1, 1], [], []>} : vector<8x96xbf16>, vector<96x64xbf16>, vector<8x64xf32> -> vector<8x64xf32>
    %45 = vector.broadcast %12 : vector<1x64xf32> to vector<8x64xf32>
    %46 = arith.addf %44, %45 : vector<8x64xf32>
    %cst_14 = arith.constant 0.000000e+00 : f32
    %47 = vector.broadcast %cst_14 : f32 to vector<8x64xf32>
    %48 = arith.maximumf %46, %47 : vector<8x64xf32>
    %cst_15 = arith.constant 0.000000e+00 : f32
    %49 = vector.shape_cast %4 : vector<8x1xi1> to vector<8x1xi1>
    %50 = vector.broadcast %49 : vector<8x1xi1> to vector<8x64xi1>
    %51 = vector.broadcast %cst_15 : f32 to vector<8x64xf32>
    %52 = arith.select %50, %48, %51 : vector<8x64xi1>, vector<8x64xf32>
    %c0_16 = arith.constant 0 : index
    %c0_17 = arith.constant 0 : index
    %53 = vector.load %arg5[%c0_16, %c0_17] : memref<192x32xbf16, #tpu.memory_space<vmem>>, vector<192x32xbf16>
    %c0_18 = arith.constant 0 : index
    %c0_19 = arith.constant 0 : index
    %54 = vector.load %arg6[%c0_18, %c0_19] : memref<1x32xf32, #tpu.memory_space<vmem>>, vector<1x32xf32>
    %55 = tpu.iota {dimensions = array<i32: 0>} : vector<8x1xi32>
    %c1_i32_20 = arith.constant 1 : i32
    %56 = tpu.dynamic_rotate %52 by %c1_i32_20 dim 0 : vector<8x64xf32>, i32 -> vector<8x64xf32>
    %c-1_i32_21 = arith.constant -1 : i32
    %57 = vector.broadcast %c-1_i32_21 : i32 to vector<8x1xi32>
    %58 = arith.addi %55, %57 : vector<8x1xi32>
    %c0_i32_22 = arith.constant 0 : i32
    %59 = vector.broadcast %c0_i32_22 : i32 to vector<8x1xi32>
    %60 = arith.cmpi sge, %58, %59 : vector<8x1xi32>
    %c-1_i32_23 = arith.constant -1 : i32
    %61 = vector.broadcast %c-1_i32_23 : i32 to vector<8x1xi32>
    %62 = arith.addi %55, %61 : vector<8x1xi32>
    %c8_i32_24 = arith.constant 8 : i32
    %63 = vector.broadcast %c8_i32_24 : i32 to vector<8x1xi32>
    %64 = arith.cmpi slt, %62, %63 : vector<8x1xi32>
    %65 = arith.andi %60, %64 : vector<8x1xi1>
    %cst_25 = arith.constant 0.000000e+00 : f32
    %66 = vector.shape_cast %65 : vector<8x1xi1> to vector<8x1xi1>
    %67 = vector.broadcast %66 : vector<8x1xi1> to vector<8x64xi1>
    %68 = vector.broadcast %cst_25 : f32 to vector<8x64xf32>
    %69 = arith.select %67, %56, %68 : vector<8x64xi1>, vector<8x64xf32>
    %c7_i32_26 = arith.constant 7 : i32
    %70 = tpu.dynamic_rotate %52 by %c7_i32_26 dim 0 : vector<8x64xf32>, i32 -> vector<8x64xf32>
    %c1_i32_27 = arith.constant 1 : i32
    %71 = vector.broadcast %c1_i32_27 : i32 to vector<8x1xi32>
    %72 = arith.addi %55, %71 : vector<8x1xi32>
    %c0_i32_28 = arith.constant 0 : i32
    %73 = vector.broadcast %c0_i32_28 : i32 to vector<8x1xi32>
    %74 = arith.cmpi sge, %72, %73 : vector<8x1xi32>
    %c1_i32_29 = arith.constant 1 : i32
    %75 = vector.broadcast %c1_i32_29 : i32 to vector<8x1xi32>
    %76 = arith.addi %55, %75 : vector<8x1xi32>
    %c8_i32_30 = arith.constant 8 : i32
    %77 = vector.broadcast %c8_i32_30 : i32 to vector<8x1xi32>
    %78 = arith.cmpi slt, %76, %77 : vector<8x1xi32>
    %79 = arith.andi %74, %78 : vector<8x1xi1>
    %cst_31 = arith.constant 0.000000e+00 : f32
    %80 = vector.shape_cast %79 : vector<8x1xi1> to vector<8x1xi1>
    %81 = vector.broadcast %80 : vector<8x1xi1> to vector<8x64xi1>
    %82 = vector.broadcast %cst_31 : f32 to vector<8x64xf32>
    %83 = arith.select %81, %70, %82 : vector<8x64xi1>, vector<8x64xf32>
    %84 = tpu.concatenate %69, %52, %83 in 1 : vector<8x64xf32>, vector<8x64xf32>, vector<8x64xf32> -> vector<8x192xf32>
    %85 = arith.truncf %84 : vector<8x192xf32> to vector<8x192xbf16>
    %cst_32 = arith.constant dense<0.000000e+00> : vector<8x32xf32>
    %86 = tpu.matmul %85, %53, %cst_32 {dimension_numbers = #tpu.dot_dimension_numbers<[1], [0], [0], [1], [0, 0, 1, 1], [], []>} : vector<8x192xbf16>, vector<192x32xbf16>, vector<8x32xf32> -> vector<8x32xf32>
    %87 = vector.broadcast %54 : vector<1x32xf32> to vector<8x32xf32>
    %88 = arith.addf %86, %87 : vector<8x32xf32>
    %cst_33 = arith.constant 0.000000e+00 : f32
    %89 = vector.shape_cast %4 : vector<8x1xi1> to vector<8x1xi1>
    %90 = vector.broadcast %89 : vector<8x1xi1> to vector<8x32xi1>
    %91 = vector.broadcast %cst_33 : f32 to vector<8x32xf32>
    %92 = arith.select %90, %88, %91 : vector<8x32xi1>, vector<8x32xf32>
    %93 = arith.addf %6, %92 : vector<8x32xf32>
    %c0_34 = arith.constant 0 : index
    %c0_35 = arith.constant 0 : index
    %94 = vector.load %arg7[%c0_34, %c0_35] : memref<1x32xf32, #tpu.memory_space<vmem>>, vector<1x32xf32>
    %c0_36 = arith.constant 0 : index
    %c0_37 = arith.constant 0 : index
    %95 = vector.load %arg8[%c0_36, %c0_37] : memref<1x32xf32, #tpu.memory_space<vmem>>, vector<1x32xf32>
    %cst_38 = arith.constant dense<0.000000e+00> : vector<8xf32>
    %96 = vector.multi_reduction <add>, %93, %cst_38 [1] : vector<8x32xf32> to vector<8xf32>
    %97 = vector.shape_cast %96 : vector<8xf32> to vector<8x1xf32>
    %cst_39 = arith.constant 3.200000e+01 : f32
    %98 = vector.broadcast %cst_39 : f32 to vector<8x1xf32>
    %99 = arith.divf %97, %98 : vector<8x1xf32>
    %100 = vector.broadcast %99 : vector<8x1xf32> to vector<8x32xf32>
    %101 = arith.subf %93, %100 : vector<8x32xf32>
    %102 = arith.mulf %101, %101 : vector<8x32xf32>
    %cst_40 = arith.constant dense<0.000000e+00> : vector<8xf32>
    %103 = vector.multi_reduction <add>, %102, %cst_40 [1] : vector<8x32xf32> to vector<8xf32>
    %104 = vector.shape_cast %103 : vector<8xf32> to vector<8x1xf32>
    %cst_41 = arith.constant 3.200000e+01 : f32
    %105 = vector.broadcast %cst_41 : f32 to vector<8x1xf32>
    %106 = arith.divf %104, %105 : vector<8x1xf32>
    %107 = vector.broadcast %99 : vector<8x1xf32> to vector<8x32xf32>
    %108 = arith.subf %93, %107 : vector<8x32xf32>
    %cst_42 = arith.constant 9.99999974E-5 : f32
    %109 = vector.broadcast %cst_42 : f32 to vector<8x1xf32>
    %110 = arith.addf %106, %109 : vector<8x1xf32>
    %111 = math.rsqrt %110 : vector<8x1xf32>
    %112 = vector.broadcast %111 : vector<8x1xf32> to vector<8x32xf32>
    %113 = arith.mulf %108, %112 : vector<8x32xf32>
    %114 = vector.broadcast %94 : vector<1x32xf32> to vector<8x32xf32>
    %115 = arith.mulf %113, %114 : vector<8x32xf32>
    %116 = vector.broadcast %95 : vector<1x32xf32> to vector<8x32xf32>
    %117 = arith.addf %115, %116 : vector<8x32xf32>
    %118 = vector.shape_cast %117 : vector<8x32xf32> to vector<1x8x32xf32>
    %c0_43 = arith.constant 0 : index
    %c0_44 = arith.constant 0 : index
    %c0_45 = arith.constant 0 : index
    %119 = vector.load %arg9[%c0_43, %c0_44, %c0_45] : memref<1x8x32xf32, #tpu.memory_space<vmem>>, vector<1x8x32xf32>
    tpu.vector_store %arg9[%c0_43, %c0_44, %c0_45], %118 {strides = array<i32>} : memref<1x8x32xf32, #tpu.memory_space<vmem>>, vector<1x8x32xf32>,
    return
  }
  func.func @transform_0(%arg0: i32, %arg1: memref<2xi32, #tpu.memory_space<smem>>) -> (i32, i32, i32) {
    %c0_i32 = arith.constant 0 : i32
    %c0_i32_0 = arith.constant 0 : i32
    %c0_i32_1 = arith.constant 0 : i32
    return %arg0, %c0_i32, %c0_i32_0 : i32, i32, i32
  }
  func.func @transform_1(%arg0: i32, %arg1: memref<2xi32, #tpu.memory_space<smem>>) -> (i32, i32) {
    %c0_i32 = arith.constant 0 : i32
    %c0_i32_0 = arith.constant 0 : i32
    %c0_i32_1 = arith.constant 0 : i32
    return %c0_i32, %c0_i32_0 : i32, i32
  }
  func.func @transform_2(%arg0: i32, %arg1: memref<2xi32, #tpu.memory_space<smem>>) -> (i32, i32) {
    %c0_i32 = arith.constant 0 : i32
    %c0_i32_0 = arith.constant 0 : i32
    %c0_i32_1 = arith.constant 0 : i32
    return %c0_i32, %c0_i32_0 : i32, i32
  }
  func.func @transform_3(%arg0: i32, %arg1: memref<2xi32, #tpu.memory_space<smem>>) -> (i32, i32) {
    %c0_i32 = arith.constant 0 : i32
    %c0_i32_0 = arith.constant 0 : i32
    %c0_i32_1 = arith.constant 0 : i32
    return %c0_i32, %c0_i32_0 : i32, i32
  }
  func.func @transform_4(%arg0: i32, %arg1: memref<2xi32, #tpu.memory_space<smem>>) -> (i32, i32) {
    %c0_i32 = arith.constant 0 : i32
    %c0_i32_0 = arith.constant 0 : i32
    %c0_i32_1 = arith.constant 0 : i32
    return %c0_i32, %c0_i32_0 : i32, i32
  }
  func.func @transform_5(%arg0: i32, %arg1: memref<2xi32, #tpu.memory_space<smem>>) -> (i32, i32) {
    %c0_i32 = arith.constant 0 : i32
    %c0_i32_0 = arith.constant 0 : i32
    %c0_i32_1 = arith.constant 0 : i32
    return %c0_i32, %c0_i32_0 : i32, i32
  }
  func.func @transform_6(%arg0: i32, %arg1: memref<2xi32, #tpu.memory_space<smem>>) -> (i32, i32) {
    %c0_i32 = arith.constant 0 : i32
    %c0_i32_0 = arith.constant 0 : i32
    %c0_i32_1 = arith.constant 0 : i32
    return %c0_i32, %c0_i32_0 : i32, i32
  }
  func.func @transform_7(%arg0: i32, %arg1: memref<2xi32, #tpu.memory_space<smem>>) -> (i32, i32, i32) {
    %c0_i32 = arith.constant 0 : i32
    %c0_i32_0 = arith.constant 0 : i32
    %c0_i32_1 = arith.constant 0 : i32
    return %arg0, %c0_i32, %c0_i32_0 : i32, i32, i32
  }
}

module attributes {stable_mosaic.version = 11 : i64} {
  func.func @_predictor_kernel(%arg0: i32, %arg1: i32, %arg2: memref<2xi32, #tpu.memory_space<smem>>, %arg3: memref<1x8x32xf32, #tpu.memory_space<vmem>>, %arg4: memref<1x96x32xbf16, #tpu.memory_space<vmem>>, %arg5: memref<1x1x32xf32, #tpu.memory_space<vmem>>, %arg6: memref<1x1x32xf32, #tpu.memory_space<vmem>>, %arg7: memref<1x1x32xf32, #tpu.memory_space<vmem>>, %arg8: memref<1x96x32xbf16, #tpu.memory_space<vmem>>, %arg9: memref<1x1x32xf32, #tpu.memory_space<vmem>>, %arg10: memref<1x1x32xf32, #tpu.memory_space<vmem>>, %arg11: memref<1x1x32xf32, #tpu.memory_space<vmem>>, %arg12: memref<1x1x32xbf16, #tpu.memory_space<vmem>>, %arg13: memref<1x1x1xf32, #tpu.memory_space<vmem>>, %arg14: memref<1x1x1x8xf32, #tpu.memory_space<vmem>>) attributes {dimension_semantics = [#tpu.dimension_semantics<parallel>, #tpu.dimension_semantics<arbitrary>], iteration_bounds = array<i64: 2, 3>, scalar_prefetch = 1 : i64, scratch_operands = 0 : i64, tpu.core_type = #tpu.core_type<tc>, window_params = [{transform_indices = @transform_0, window_bounds = array<i64: 1, 8, 32>}, {transform_indices = @transform_1, window_bounds = array<i64: 1, 96, 32>}, {transform_indices = @transform_2, window_bounds = array<i64: 1, 1, 32>}, {transform_indices = @transform_3, window_bounds = array<i64: 1, 1, 32>}, {transform_indices = @transform_4, window_bounds = array<i64: 1, 1, 32>}, {transform_indices = @transform_5, window_bounds = array<i64: 1, 96, 32>}, {transform_indices = @transform_6, window_bounds = array<i64: 1, 1, 32>}, {transform_indices = @transform_7, window_bounds = array<i64: 1, 1, 32>}, {transform_indices = @transform_8, window_bounds = array<i64: 1, 1, 32>}, {transform_indices = @transform_9, window_bounds = array<i64: 1, 1, 32>}, {transform_indices = @transform_10, window_bounds = array<i64: 1, 1, 1>}, {transform_indices = @transform_11, window_bounds = array<i64: 1, 1, 1, 8>}]} {
    %0 = arith.index_cast %arg0 : i32 to index
    %1 = memref.load %arg2[%0] : memref<2xi32, #tpu.memory_space<smem>>
    %2 = tpu.iota {dimensions = array<i32: 0>} : vector<8x1xi32>
    %3 = vector.broadcast %1 : i32 to vector<8x1xi32>
    %4 = arith.cmpi slt, %2, %3 : vector<8x1xi32>
    %c0 = arith.constant 0 : index
    %c0_0 = arith.constant 0 : index
    %c0_1 = arith.constant 0 : index
    %5 = vector.load %arg3[%c0, %c0_0, %c0_1] : memref<1x8x32xf32, #tpu.memory_space<vmem>>, vector<1x8x32xf32>
    %6 = vector.shape_cast %5 : vector<1x8x32xf32> to vector<8x32xf32>
    %cst = arith.constant 0.000000e+00 : f32
    %7 = vector.shape_cast %4 : vector<8x1xi1> to vector<8x1xi1>
    %8 = vector.broadcast %7 : vector<8x1xi1> to vector<8x32xi1>
    %9 = vector.broadcast %cst : f32 to vector<8x32xf32>
    %10 = arith.select %8, %6, %9 : vector<8x32xi1>, vector<8x32xf32>
    %c0_2 = arith.constant 0 : index
    %c0_3 = arith.constant 0 : index
    %c0_4 = arith.constant 0 : index
    %11 = vector.load %arg4[%c0_2, %c0_3, %c0_4] : memref<1x96x32xbf16, #tpu.memory_space<vmem>>, vector<1x96x32xbf16>
    %12 = vector.shape_cast %11 : vector<1x96x32xbf16> to vector<96x32xbf16>
    %c0_5 = arith.constant 0 : index
    %c0_6 = arith.constant 0 : index
    %c0_7 = arith.constant 0 : index
    %13 = vector.load %arg5[%c0_5, %c0_6, %c0_7] : memref<1x1x32xf32, #tpu.memory_space<vmem>>, vector<1x1x32xf32>
    %14 = vector.shape_cast %13 : vector<1x1x32xf32> to vector<1x32xf32>
    %15 = tpu.iota {dimensions = array<i32: 0>} : vector<8x1xi32>
    %c1_i32 = arith.constant 1 : i32
    %16 = tpu.dynamic_rotate %10 by %c1_i32 dim 0 : vector<8x32xf32>, i32 -> vector<8x32xf32>
    %c-1_i32 = arith.constant -1 : i32
    %17 = vector.broadcast %c-1_i32 : i32 to vector<8x1xi32>
    %18 = arith.addi %15, %17 : vector<8x1xi32>
    %c0_i32 = arith.constant 0 : i32
    %19 = vector.broadcast %c0_i32 : i32 to vector<8x1xi32>
    %20 = arith.cmpi sge, %18, %19 : vector<8x1xi32>
    %c-1_i32_8 = arith.constant -1 : i32
    %21 = vector.broadcast %c-1_i32_8 : i32 to vector<8x1xi32>
    %22 = arith.addi %15, %21 : vector<8x1xi32>
    %c8_i32 = arith.constant 8 : i32
    %23 = vector.broadcast %c8_i32 : i32 to vector<8x1xi32>
    %24 = arith.cmpi slt, %22, %23 : vector<8x1xi32>
    %25 = arith.andi %20, %24 : vector<8x1xi1>
    %cst_9 = arith.constant 0.000000e+00 : f32
    %26 = vector.shape_cast %25 : vector<8x1xi1> to vector<8x1xi1>
    %27 = vector.broadcast %26 : vector<8x1xi1> to vector<8x32xi1>
    %28 = vector.broadcast %cst_9 : f32 to vector<8x32xf32>
    %29 = arith.select %27, %16, %28 : vector<8x32xi1>, vector<8x32xf32>
    %c7_i32 = arith.constant 7 : i32
    %30 = tpu.dynamic_rotate %10 by %c7_i32 dim 0 : vector<8x32xf32>, i32 -> vector<8x32xf32>
    %c1_i32_10 = arith.constant 1 : i32
    %31 = vector.broadcast %c1_i32_10 : i32 to vector<8x1xi32>
    %32 = arith.addi %15, %31 : vector<8x1xi32>
    %c0_i32_11 = arith.constant 0 : i32
    %33 = vector.broadcast %c0_i32_11 : i32 to vector<8x1xi32>
    %34 = arith.cmpi sge, %32, %33 : vector<8x1xi32>
    %c1_i32_12 = arith.constant 1 : i32
    %35 = vector.broadcast %c1_i32_12 : i32 to vector<8x1xi32>
    %36 = arith.addi %15, %35 : vector<8x1xi32>
    %c8_i32_13 = arith.constant 8 : i32
    %37 = vector.broadcast %c8_i32_13 : i32 to vector<8x1xi32>
    %38 = arith.cmpi slt, %36, %37 : vector<8x1xi32>
    %39 = arith.andi %34, %38 : vector<8x1xi1>
    %cst_14 = arith.constant 0.000000e+00 : f32
    %40 = vector.shape_cast %39 : vector<8x1xi1> to vector<8x1xi1>
    %41 = vector.broadcast %40 : vector<8x1xi1> to vector<8x32xi1>
    %42 = vector.broadcast %cst_14 : f32 to vector<8x32xf32>
    %43 = arith.select %41, %30, %42 : vector<8x32xi1>, vector<8x32xf32>
    %44 = tpu.concatenate %29, %10, %43 in 1 : vector<8x32xf32>, vector<8x32xf32>, vector<8x32xf32> -> vector<8x96xf32>
    %45 = arith.truncf %44 : vector<8x96xf32> to vector<8x96xbf16>
    %cst_15 = arith.constant dense<0.000000e+00> : vector<8x32xf32>
    %46 = tpu.matmul %45, %12, %cst_15 {dimension_numbers = #tpu.dot_dimension_numbers<[1], [0], [0], [1], [0, 0, 1, 1], [], []>} : vector<8x96xbf16>, vector<96x32xbf16>, vector<8x32xf32> -> vector<8x32xf32>
    %47 = vector.broadcast %14 : vector<1x32xf32> to vector<8x32xf32>
    %48 = arith.addf %46, %47 : vector<8x32xf32>
    %cst_16 = arith.constant 0.000000e+00 : f32
    %49 = vector.broadcast %cst_16 : f32 to vector<8x32xf32>
    %50 = arith.maximumf %48, %49 : vector<8x32xf32>
    %c0_17 = arith.constant 0 : index
    %c0_18 = arith.constant 0 : index
    %c0_19 = arith.constant 0 : index
    %51 = vector.load %arg6[%c0_17, %c0_18, %c0_19] : memref<1x1x32xf32, #tpu.memory_space<vmem>>, vector<1x1x32xf32>
    %52 = vector.shape_cast %51 : vector<1x1x32xf32> to vector<1x32xf32>
    %c0_20 = arith.constant 0 : index
    %c0_21 = arith.constant 0 : index
    %c0_22 = arith.constant 0 : index
    %53 = vector.load %arg7[%c0_20, %c0_21, %c0_22] : memref<1x1x32xf32, #tpu.memory_space<vmem>>, vector<1x1x32xf32>
    %54 = vector.shape_cast %53 : vector<1x1x32xf32> to vector<1x32xf32>
    %cst_23 = arith.constant dense<0.000000e+00> : vector<8xf32>
    %55 = vector.multi_reduction <add>, %50, %cst_23 [1] : vector<8x32xf32> to vector<8xf32>
    %56 = vector.shape_cast %55 : vector<8xf32> to vector<8x1xf32>
    %cst_24 = arith.constant 3.200000e+01 : f32
    %57 = vector.broadcast %cst_24 : f32 to vector<8x1xf32>
    %58 = arith.divf %56, %57 : vector<8x1xf32>
    %59 = vector.broadcast %58 : vector<8x1xf32> to vector<8x32xf32>
    %60 = arith.subf %50, %59 : vector<8x32xf32>
    %61 = arith.mulf %60, %60 : vector<8x32xf32>
    %cst_25 = arith.constant dense<0.000000e+00> : vector<8xf32>
    %62 = vector.multi_reduction <add>, %61, %cst_25 [1] : vector<8x32xf32> to vector<8xf32>
    %63 = vector.shape_cast %62 : vector<8xf32> to vector<8x1xf32>
    %cst_26 = arith.constant 3.200000e+01 : f32
    %64 = vector.broadcast %cst_26 : f32 to vector<8x1xf32>
    %65 = arith.divf %63, %64 : vector<8x1xf32>
    %66 = vector.broadcast %58 : vector<8x1xf32> to vector<8x32xf32>
    %67 = arith.subf %50, %66 : vector<8x32xf32>
    %cst_27 = arith.constant 9.99999974E-5 : f32
    %68 = vector.broadcast %cst_27 : f32 to vector<8x1xf32>
    %69 = arith.addf %65, %68 : vector<8x1xf32>
    %70 = math.rsqrt %69 : vector<8x1xf32>
    %71 = vector.broadcast %70 : vector<8x1xf32> to vector<8x32xf32>
    %72 = arith.mulf %67, %71 : vector<8x32xf32>
    %73 = vector.broadcast %52 : vector<1x32xf32> to vector<8x32xf32>
    %74 = arith.mulf %72, %73 : vector<8x32xf32>
    %75 = vector.broadcast %54 : vector<1x32xf32> to vector<8x32xf32>
    %76 = arith.addf %74, %75 : vector<8x32xf32>
    %cst_28 = arith.constant 0.000000e+00 : f32
    %77 = vector.shape_cast %4 : vector<8x1xi1> to vector<8x1xi1>
    %78 = vector.broadcast %77 : vector<8x1xi1> to vector<8x32xi1>
    %79 = vector.broadcast %cst_28 : f32 to vector<8x32xf32>
    %80 = arith.select %78, %76, %79 : vector<8x32xi1>, vector<8x32xf32>
    %c0_29 = arith.constant 0 : index
    %c0_30 = arith.constant 0 : index
    %c0_31 = arith.constant 0 : index
    %81 = vector.load %arg8[%c0_29, %c0_30, %c0_31] : memref<1x96x32xbf16, #tpu.memory_space<vmem>>, vector<1x96x32xbf16>
    %82 = vector.shape_cast %81 : vector<1x96x32xbf16> to vector<96x32xbf16>
    %c0_32 = arith.constant 0 : index
    %c0_33 = arith.constant 0 : index
    %c0_34 = arith.constant 0 : index
    %83 = vector.load %arg9[%c0_32, %c0_33, %c0_34] : memref<1x1x32xf32, #tpu.memory_space<vmem>>, vector<1x1x32xf32>
    %84 = vector.shape_cast %83 : vector<1x1x32xf32> to vector<1x32xf32>
    %85 = tpu.iota {dimensions = array<i32: 0>} : vector<8x1xi32>
    %c1_i32_35 = arith.constant 1 : i32
    %86 = tpu.dynamic_rotate %80 by %c1_i32_35 dim 0 : vector<8x32xf32>, i32 -> vector<8x32xf32>
    %c-1_i32_36 = arith.constant -1 : i32
    %87 = vector.broadcast %c-1_i32_36 : i32 to vector<8x1xi32>
    %88 = arith.addi %85, %87 : vector<8x1xi32>
    %c0_i32_37 = arith.constant 0 : i32
    %89 = vector.broadcast %c0_i32_37 : i32 to vector<8x1xi32>
    %90 = arith.cmpi sge, %88, %89 : vector<8x1xi32>
    %c-1_i32_38 = arith.constant -1 : i32
    %91 = vector.broadcast %c-1_i32_38 : i32 to vector<8x1xi32>
    %92 = arith.addi %85, %91 : vector<8x1xi32>
    %c8_i32_39 = arith.constant 8 : i32
    %93 = vector.broadcast %c8_i32_39 : i32 to vector<8x1xi32>
    %94 = arith.cmpi slt, %92, %93 : vector<8x1xi32>
    %95 = arith.andi %90, %94 : vector<8x1xi1>
    %cst_40 = arith.constant 0.000000e+00 : f32
    %96 = vector.shape_cast %95 : vector<8x1xi1> to vector<8x1xi1>
    %97 = vector.broadcast %96 : vector<8x1xi1> to vector<8x32xi1>
    %98 = vector.broadcast %cst_40 : f32 to vector<8x32xf32>
    %99 = arith.select %97, %86, %98 : vector<8x32xi1>, vector<8x32xf32>
    %c7_i32_41 = arith.constant 7 : i32
    %100 = tpu.dynamic_rotate %80 by %c7_i32_41 dim 0 : vector<8x32xf32>, i32 -> vector<8x32xf32>
    %c1_i32_42 = arith.constant 1 : i32
    %101 = vector.broadcast %c1_i32_42 : i32 to vector<8x1xi32>
    %102 = arith.addi %85, %101 : vector<8x1xi32>
    %c0_i32_43 = arith.constant 0 : i32
    %103 = vector.broadcast %c0_i32_43 : i32 to vector<8x1xi32>
    %104 = arith.cmpi sge, %102, %103 : vector<8x1xi32>
    %c1_i32_44 = arith.constant 1 : i32
    %105 = vector.broadcast %c1_i32_44 : i32 to vector<8x1xi32>
    %106 = arith.addi %85, %105 : vector<8x1xi32>
    %c8_i32_45 = arith.constant 8 : i32
    %107 = vector.broadcast %c8_i32_45 : i32 to vector<8x1xi32>
    %108 = arith.cmpi slt, %106, %107 : vector<8x1xi32>
    %109 = arith.andi %104, %108 : vector<8x1xi1>
    %cst_46 = arith.constant 0.000000e+00 : f32
    %110 = vector.shape_cast %109 : vector<8x1xi1> to vector<8x1xi1>
    %111 = vector.broadcast %110 : vector<8x1xi1> to vector<8x32xi1>
    %112 = vector.broadcast %cst_46 : f32 to vector<8x32xf32>
    %113 = arith.select %111, %100, %112 : vector<8x32xi1>, vector<8x32xf32>
    %114 = tpu.concatenate %99, %80, %113 in 1 : vector<8x32xf32>, vector<8x32xf32>, vector<8x32xf32> -> vector<8x96xf32>
    %115 = arith.truncf %114 : vector<8x96xf32> to vector<8x96xbf16>
    %cst_47 = arith.constant dense<0.000000e+00> : vector<8x32xf32>
    %116 = tpu.matmul %115, %82, %cst_47 {dimension_numbers = #tpu.dot_dimension_numbers<[1], [0], [0], [1], [0, 0, 1, 1], [], []>} : vector<8x96xbf16>, vector<96x32xbf16>, vector<8x32xf32> -> vector<8x32xf32>
    %117 = vector.broadcast %84 : vector<1x32xf32> to vector<8x32xf32>
    %118 = arith.addf %116, %117 : vector<8x32xf32>
    %cst_48 = arith.constant 0.000000e+00 : f32
    %119 = vector.broadcast %cst_48 : f32 to vector<8x32xf32>
    %120 = arith.maximumf %118, %119 : vector<8x32xf32>
    %c0_49 = arith.constant 0 : index
    %c0_50 = arith.constant 0 : index
    %c0_51 = arith.constant 0 : index
    %121 = vector.load %arg10[%c0_49, %c0_50, %c0_51] : memref<1x1x32xf32, #tpu.memory_space<vmem>>, vector<1x1x32xf32>
    %122 = vector.shape_cast %121 : vector<1x1x32xf32> to vector<1x32xf32>
    %c0_52 = arith.constant 0 : index
    %c0_53 = arith.constant 0 : index
    %c0_54 = arith.constant 0 : index
    %123 = vector.load %arg11[%c0_52, %c0_53, %c0_54] : memref<1x1x32xf32, #tpu.memory_space<vmem>>, vector<1x1x32xf32>
    %124 = vector.shape_cast %123 : vector<1x1x32xf32> to vector<1x32xf32>
    %cst_55 = arith.constant dense<0.000000e+00> : vector<8xf32>
    %125 = vector.multi_reduction <add>, %120, %cst_55 [1] : vector<8x32xf32> to vector<8xf32>
    %126 = vector.shape_cast %125 : vector<8xf32> to vector<8x1xf32>
    %cst_56 = arith.constant 3.200000e+01 : f32
    %127 = vector.broadcast %cst_56 : f32 to vector<8x1xf32>
    %128 = arith.divf %126, %127 : vector<8x1xf32>
    %129 = vector.broadcast %128 : vector<8x1xf32> to vector<8x32xf32>
    %130 = arith.subf %120, %129 : vector<8x32xf32>
    %131 = arith.mulf %130, %130 : vector<8x32xf32>
    %cst_57 = arith.constant dense<0.000000e+00> : vector<8xf32>
    %132 = vector.multi_reduction <add>, %131, %cst_57 [1] : vector<8x32xf32> to vector<8xf32>
    %133 = vector.shape_cast %132 : vector<8xf32> to vector<8x1xf32>
    %cst_58 = arith.constant 3.200000e+01 : f32
    %134 = vector.broadcast %cst_58 : f32 to vector<8x1xf32>
    %135 = arith.divf %133, %134 : vector<8x1xf32>
    %136 = vector.broadcast %128 : vector<8x1xf32> to vector<8x32xf32>
    %137 = arith.subf %120, %136 : vector<8x32xf32>
    %cst_59 = arith.constant 9.99999974E-5 : f32
    %138 = vector.broadcast %cst_59 : f32 to vector<8x1xf32>
    %139 = arith.addf %135, %138 : vector<8x1xf32>
    %140 = math.rsqrt %139 : vector<8x1xf32>
    %141 = vector.broadcast %140 : vector<8x1xf32> to vector<8x32xf32>
    %142 = arith.mulf %137, %141 : vector<8x32xf32>
    %143 = vector.broadcast %122 : vector<1x32xf32> to vector<8x32xf32>
    %144 = arith.mulf %142, %143 : vector<8x32xf32>
    %145 = vector.broadcast %124 : vector<1x32xf32> to vector<8x32xf32>
    %146 = arith.addf %144, %145 : vector<8x32xf32>
    %cst_60 = arith.constant 0.000000e+00 : f32
    %147 = vector.shape_cast %4 : vector<8x1xi1> to vector<8x1xi1>
    %148 = vector.broadcast %147 : vector<8x1xi1> to vector<8x32xi1>
    %149 = vector.broadcast %cst_60 : f32 to vector<8x32xf32>
    %150 = arith.select %148, %146, %149 : vector<8x32xi1>, vector<8x32xf32>
    %151 = arith.truncf %150 : vector<8x32xf32> to vector<8x32xbf16>
    %c0_61 = arith.constant 0 : index
    %c0_62 = arith.constant 0 : index
    %c0_63 = arith.constant 0 : index
    %152 = vector.load %arg12[%c0_61, %c0_62, %c0_63] : memref<1x1x32xbf16, #tpu.memory_space<vmem>>, vector<1x1x32xbf16>
    %153 = vector.shape_cast %152 : vector<1x1x32xbf16> to vector<1x32xbf16>
    %cst_64 = arith.constant dense<0.000000e+00> : vector<1x8xf32>
    %154 = tpu.matmul %153, %151, %cst_64 {dimension_numbers = #tpu.dot_dimension_numbers<[1], [1], [0], [0], [0, 0, 1, 0], [], []>} : vector<1x32xbf16>, vector<8x32xbf16>, vector<1x8xf32> -> vector<1x8xf32>
    %c0_65 = arith.constant 0 : index
    %c0_66 = arith.constant 0 : index
    %c0_67 = arith.constant 0 : index
    %155 = vector.load %arg13[%c0_65, %c0_66, %c0_67] : memref<1x1x1xf32, #tpu.memory_space<vmem>>, vector<1x1x1xf32>
    %156 = vector.shape_cast %155 : vector<1x1x1xf32> to vector<1x1xf32>
    %157 = vector.broadcast %156 : vector<1x1xf32> to vector<1x8xf32>
    %158 = arith.addf %154, %157 : vector<1x8xf32>
    %159 = tpu.iota {dimensions = array<i32: 1>} : vector<1x8xi32>
    %160 = vector.broadcast %1 : i32 to vector<1x8xi32>
    %161 = arith.cmpi slt, %159, %160 : vector<1x8xi32>
    %cst_68 = arith.constant 0.000000e+00 : f32
    %162 = vector.broadcast %cst_68 : f32 to vector<1x8xf32>
    %163 = arith.select %161, %158, %162 : vector<1x8xi1>, vector<1x8xf32>
    %164 = vector.shape_cast %163 : vector<1x8xf32> to vector<1x1x1x8xf32>
    %c0_69 = arith.constant 0 : index
    %c0_70 = arith.constant 0 : index
    %c0_71 = arith.constant 0 : index
    %c0_72 = arith.constant 0 : index
    %165 = vector.load %arg14[%c0_69, %c0_70, %c0_71, %c0_72] : memref<1x1x1x8xf32, #tpu.memory_space<vmem>>, vector<1x1x1x8xf32>
    tpu.vector_store %arg14[%c0_69, %c0_70, %c0_71, %c0_72], %164 {strides = array<i32>} : memref<1x1x1x8xf32, #tpu.memory_space<vmem>>, vector<1x1x1x8xf32>,
    return
  }
  func.func @transform_0(%arg0: i32, %arg1: i32, %arg2: memref<2xi32, #tpu.memory_space<smem>>) -> (i32, i32, i32) {
    %c0_i32 = arith.constant 0 : i32
    %c0_i32_0 = arith.constant 0 : i32
    %c0_i32_1 = arith.constant 0 : i32
    return %arg0, %c0_i32, %c0_i32_0 : i32, i32, i32
  }
  func.func @transform_1(%arg0: i32, %arg1: i32, %arg2: memref<2xi32, #tpu.memory_space<smem>>) -> (i32, i32, i32) {
    %c0_i32 = arith.constant 0 : i32
    %c0_i32_0 = arith.constant 0 : i32
    %c0_i32_1 = arith.constant 0 : i32
    return %arg1, %c0_i32, %c0_i32_0 : i32, i32, i32
  }
  func.func @transform_2(%arg0: i32, %arg1: i32, %arg2: memref<2xi32, #tpu.memory_space<smem>>) -> (i32, i32, i32) {
    %c0_i32 = arith.constant 0 : i32
    %c0_i32_0 = arith.constant 0 : i32
    %c0_i32_1 = arith.constant 0 : i32
    return %arg1, %c0_i32, %c0_i32_0 : i32, i32, i32
  }
  func.func @transform_3(%arg0: i32, %arg1: i32, %arg2: memref<2xi32, #tpu.memory_space<smem>>) -> (i32, i32, i32) {
    %c0_i32 = arith.constant 0 : i32
    %c0_i32_0 = arith.constant 0 : i32
    %c0_i32_1 = arith.constant 0 : i32
    return %arg1, %c0_i32, %c0_i32_0 : i32, i32, i32
  }
  func.func @transform_4(%arg0: i32, %arg1: i32, %arg2: memref<2xi32, #tpu.memory_space<smem>>) -> (i32, i32, i32) {
    %c0_i32 = arith.constant 0 : i32
    %c0_i32_0 = arith.constant 0 : i32
    %c0_i32_1 = arith.constant 0 : i32
    return %arg1, %c0_i32, %c0_i32_0 : i32, i32, i32
  }
  func.func @transform_5(%arg0: i32, %arg1: i32, %arg2: memref<2xi32, #tpu.memory_space<smem>>) -> (i32, i32, i32) {
    %c0_i32 = arith.constant 0 : i32
    %c0_i32_0 = arith.constant 0 : i32
    %c0_i32_1 = arith.constant 0 : i32
    return %arg1, %c0_i32, %c0_i32_0 : i32, i32, i32
  }
  func.func @transform_6(%arg0: i32, %arg1: i32, %arg2: memref<2xi32, #tpu.memory_space<smem>>) -> (i32, i32, i32) {
    %c0_i32 = arith.constant 0 : i32
    %c0_i32_0 = arith.constant 0 : i32
    %c0_i32_1 = arith.constant 0 : i32
    return %arg1, %c0_i32, %c0_i32_0 : i32, i32, i32
  }
  func.func @transform_7(%arg0: i32, %arg1: i32, %arg2: memref<2xi32, #tpu.memory_space<smem>>) -> (i32, i32, i32) {
    %c0_i32 = arith.constant 0 : i32
    %c0_i32_0 = arith.constant 0 : i32
    %c0_i32_1 = arith.constant 0 : i32
    return %arg1, %c0_i32, %c0_i32_0 : i32, i32, i32
  }
  func.func @transform_8(%arg0: i32, %arg1: i32, %arg2: memref<2xi32, #tpu.memory_space<smem>>) -> (i32, i32, i32) {
    %c0_i32 = arith.constant 0 : i32
    %c0_i32_0 = arith.constant 0 : i32
    %c0_i32_1 = arith.constant 0 : i32
    return %arg1, %c0_i32, %c0_i32_0 : i32, i32, i32
  }
  func.func @transform_9(%arg0: i32, %arg1: i32, %arg2: memref<2xi32, #tpu.memory_space<smem>>) -> (i32, i32, i32) {
    %c0_i32 = arith.constant 0 : i32
    %c0_i32_0 = arith.constant 0 : i32
    %c0_i32_1 = arith.constant 0 : i32
    return %arg1, %c0_i32, %c0_i32_0 : i32, i32, i32
  }
  func.func @transform_10(%arg0: i32, %arg1: i32, %arg2: memref<2xi32, #tpu.memory_space<smem>>) -> (i32, i32, i32) {
    %c0_i32 = arith.constant 0 : i32
    %c0_i32_0 = arith.constant 0 : i32
    %c0_i32_1 = arith.constant 0 : i32
    return %arg1, %c0_i32, %c0_i32_0 : i32, i32, i32
  }
  func.func @transform_11(%arg0: i32, %arg1: i32, %arg2: memref<2xi32, #tpu.memory_space<smem>>) -> (i32, i32, i32, i32) {
    %c0_i32 = arith.constant 0 : i32
    %c0_i32_0 = arith.constant 0 : i32
    %c0_i32_1 = arith.constant 0 : i32
    return %arg1, %arg0, %c0_i32, %c0_i32_0 : i32, i32, i32, i32
  }
}

module attributes {stable_mosaic.version = 11 : i64} {
  func.func @_proj_mask_kernel(%arg0: i32, %arg1: memref<2xi32, #tpu.memory_space<smem>>, %arg2: memref<1x8x32xf32, #tpu.memory_space<vmem>>, %arg3: memref<32x32xbf16, #tpu.memory_space<vmem>>, %arg4: memref<1x32xf32, #tpu.memory_space<vmem>>, %arg5: memref<1x8x32xf32, #tpu.memory_space<vmem>>) attributes {dimension_semantics = [#tpu.dimension_semantics<parallel>], iteration_bounds = array<i64: 2>, scalar_prefetch = 1 : i64, scratch_operands = 0 : i64, tpu.core_type = #tpu.core_type<tc>, window_params = [{transform_indices = @transform_0, window_bounds = array<i64: 1, 8, 32>}, {pipeline_mode = #tpu.pipeline_mode<synchronous>, transform_indices = @transform_1, window_bounds = array<i64: 32, 32>}, {pipeline_mode = #tpu.pipeline_mode<synchronous>, transform_indices = @transform_2, window_bounds = array<i64: 1, 32>}, {transform_indices = @transform_3, window_bounds = array<i64: 1, 8, 32>}]} {
    %0 = arith.index_cast %arg0 : i32 to index
    %1 = memref.load %arg1[%0] : memref<2xi32, #tpu.memory_space<smem>>
    %2 = tpu.iota {dimensions = array<i32: 0>} : vector<8x1xi32>
    %3 = vector.broadcast %1 : i32 to vector<8x1xi32>
    %4 = arith.cmpi slt, %2, %3 : vector<8x1xi32>
    %c0 = arith.constant 0 : index
    %c0_0 = arith.constant 0 : index
    %c0_1 = arith.constant 0 : index
    %5 = vector.load %arg2[%c0, %c0_0, %c0_1] : memref<1x8x32xf32, #tpu.memory_space<vmem>>, vector<1x8x32xf32>
    %6 = vector.shape_cast %5 : vector<1x8x32xf32> to vector<8x32xf32>
    %cst = arith.constant 0.000000e+00 : f32
    %7 = vector.shape_cast %4 : vector<8x1xi1> to vector<8x1xi1>
    %8 = vector.broadcast %7 : vector<8x1xi1> to vector<8x32xi1>
    %9 = vector.broadcast %cst : f32 to vector<8x32xf32>
    %10 = arith.select %8, %6, %9 : vector<8x32xi1>, vector<8x32xf32>
    %11 = arith.truncf %10 : vector<8x32xf32> to vector<8x32xbf16>
    %c0_2 = arith.constant 0 : index
    %c0_3 = arith.constant 0 : index
    %12 = vector.load %arg3[%c0_2, %c0_3] : memref<32x32xbf16, #tpu.memory_space<vmem>>, vector<32x32xbf16>
    %cst_4 = arith.constant dense<0.000000e+00> : vector<8x32xf32>
    %13 = tpu.matmul %11, %12, %cst_4 {dimension_numbers = #tpu.dot_dimension_numbers<[1], [0], [0], [1], [0, 0, 1, 1], [], []>} : vector<8x32xbf16>, vector<32x32xbf16>, vector<8x32xf32> -> vector<8x32xf32>
    %c0_5 = arith.constant 0 : index
    %c0_6 = arith.constant 0 : index
    %14 = vector.load %arg4[%c0_5, %c0_6] : memref<1x32xf32, #tpu.memory_space<vmem>>, vector<1x32xf32>
    %15 = vector.broadcast %14 : vector<1x32xf32> to vector<8x32xf32>
    %16 = arith.addf %13, %15 : vector<8x32xf32>
    %cst_7 = arith.constant 0.000000e+00 : f32
    %17 = vector.shape_cast %4 : vector<8x1xi1> to vector<8x1xi1>
    %18 = vector.broadcast %17 : vector<8x1xi1> to vector<8x32xi1>
    %19 = vector.broadcast %cst_7 : f32 to vector<8x32xf32>
    %20 = arith.select %18, %16, %19 : vector<8x32xi1>, vector<8x32xf32>
    %21 = vector.shape_cast %20 : vector<8x32xf32> to vector<1x8x32xf32>
    %c0_8 = arith.constant 0 : index
    %c0_9 = arith.constant 0 : index
    %c0_10 = arith.constant 0 : index
    %22 = vector.load %arg5[%c0_8, %c0_9, %c0_10] : memref<1x8x32xf32, #tpu.memory_space<vmem>>, vector<1x8x32xf32>
    tpu.vector_store %arg5[%c0_8, %c0_9, %c0_10], %21 {strides = array<i32>} : memref<1x8x32xf32, #tpu.memory_space<vmem>>, vector<1x8x32xf32>,
    return
  }
  func.func @transform_0(%arg0: i32, %arg1: memref<2xi32, #tpu.memory_space<smem>>) -> (i32, i32, i32) {
    %c0_i32 = arith.constant 0 : i32
    %c0_i32_0 = arith.constant 0 : i32
    %c0_i32_1 = arith.constant 0 : i32
    return %arg0, %c0_i32, %c0_i32_0 : i32, i32, i32
  }
  func.func @transform_1(%arg0: i32, %arg1: memref<2xi32, #tpu.memory_space<smem>>) -> (i32, i32) {
    %c0_i32 = arith.constant 0 : i32
    %c0_i32_0 = arith.constant 0 : i32
    %c0_i32_1 = arith.constant 0 : i32
    return %c0_i32, %c0_i32_0 : i32, i32
  }
  func.func @transform_2(%arg0: i32, %arg1: memref<2xi32, #tpu.memory_space<smem>>) -> (i32, i32) {
    %c0_i32 = arith.constant 0 : i32
    %c0_i32_0 = arith.constant 0 : i32
    %c0_i32_1 = arith.constant 0 : i32
    return %c0_i32, %c0_i32_0 : i32, i32
  }
  func.func @transform_3(%arg0: i32, %arg1: memref<2xi32, #tpu.memory_space<smem>>) -> (i32, i32, i32) {
    %c0_i32 = arith.constant 0 : i32
    %c0_i32_0 = arith.constant 0 : i32
    %c0_i32_1 = arith.constant 0 : i32
    return %arg0, %c0_i32, %c0_i32_0 : i32, i32, i32
  }
}

</mosaic_0001>

<llo_original>
// kernel: _lambda_.10
$region0: #{_lambda_.10}
  #allocation0 [shape = 'u32[]', space=smem, size = 0x4, offset = 0x4, fixed_abs, tag = 'smem constant byte address 0x4 - core index']
  #allocation1 [shape = 'u32[144,128]{1,0:T(1,128)}', space=vmem, size = 0x12000, scoped, tag = 'internal scratch']
  #allocation2 [shape = 's32[1]{0}', space=sflag, size = 0x4, scoped, tag = 'scoped memory for _lambda_.10']
  #allocation3 [shape = 'u8[512]{0}', space=smem, size = 0x200, scoped, tag = 'prefetched SMEM operand 0']
  %s0 = inlined_call_operand.vmem [shape: s32[2], index: 0, kind: input, shape index: {}]
  %s1 = inlined_call_operand.vmem [shape: f32[2,8,32], index: 1, kind: input, shape index: {}]
  %s2 = inlined_call_operand.vmem [shape: bf16[32,32], index: 2, kind: input, shape index: {}]
  %s3 = inlined_call_operand.vmem [shape: f32[1,32], index: 3, kind: input, shape index: {}]
  %s4 = inlined_call_operand.vmem [shape: f32[2,8,32], index: 4, kind: output, shape index: {}]
  %s5 = sld [smem:[#allocation0]]
  $region45: #{_lambda_.10} parent=0
    _
  %s7 = ssub.s32 1, %s5
  %s8 = scalar_select 0, %s7, %s5
  %s9 = sshll.u32 %s0, 4
  %s10 = int_to_ptr.vmem [resolvable:$true] %s9
  %12 = dma.vmem_to_smem %s10, 16, [#allocation3], [#allocation2]
  %13 = dma.done [#allocation2], 16
  %14 = sfence
  loop: start=0, step=1, limit=4
  $region2: #{_lambda_.10} parent=0 // loop_pre_header
    _
  $region3: #{_lambda_.10} parent=0 // loop_header
    %s16 = sphi 0, %s20
    %p17 = scmp.ge.s32.totalorder %s16, 4
    %s26 = sphi 0, %s28
    %s29 = sphi 0, %s26
    %s30 = sphi 0, %s29
    %s46 = sphi 0, %s30
    %s50 = sphi 0, %s50
    %s52 = sphi 0, %s50
    %s53 = sphi 0, %s52
    %s67 = sphi 0, %s53
    %s71 = sphi 0, %s71
    %s73 = sphi 0, %s71
    %s74 = sphi 0, %s73
    %s88 = sphi 0, %s74
    %s94 = sphi 0, %s96
    %s97 = sphi 0, %s94
    %s98 = sphi 0, %s97
    %s114 = sphi 0, %s98
  $region4: #{_lambda_.10} parent=0 // loop_header_branch
    %19 = sbr.rel (%p17) target = $region8
  $region5: #{_lambda_.10} parent=0 // loop_body
    %s21 = ssub.s32 %s16, 1
    %s22 = ssub.s32 %s16, 2
    %s23 = sadd.s32 %s16, 1
    %s24 = ssub.s32 %s16, %s23
    %p25 = scmp.eq.s32.totalorder %s24, 0
    %s27 = sadd.s32 %s26, 1
    %s28 = scalar_select %p25, %s26, %s27
    %p31 = pneg %p25
    %p32 = scmp.eq.s32.totalorder %s16, 1
    %p33 = por %p31, %p32
    %p34 = scmp.ne.s32.totalorder %s26, %s29
    %p35 = scmp.eq.s32.totalorder %s16, 0
    %p36 = por %p34, %p35
    %p37 = scmp.ne.s32.totalorder %s26, %s29
    %p38 = scmp.eq.s32.totalorder %s21, 1
    %p39 = por %p37, %p38
    %p40 = scmp.ne.s32.totalorder %s29, %s30
    %p41 = scmp.eq.s32.totalorder %s21, 0
    %p42 = por %p40, %p41
    %p43 = scmp.ne.s32.totalorder %s29, %s30
    %p44 = scmp.eq.s32.totalorder %s22, 1
    %p45 = por %p43, %p44
    %p47 = scmp.ne.s32.totalorder %s30, %s46
    %p48 = scmp.eq.s32.totalorder %s22, 0
    %p49 = por %p47, %p48
    %s51 = sadd.s32 %s50, 1
    %p54 = scmp.eq.s32.totalorder %s16, 1
    %p55 = scmp.ne.s32.totalorder %s50, %s52
    %p56 = scmp.eq.s32.totalorder %s16, 0
    %p57 = por %p55, %p56
    %p58 = scmp.ne.s32.totalorder %s50, %s52
    %p59 = scmp.eq.s32.totalorder %s21, 1
    %p60 = por %p58, %p59
    %p61 = scmp.ne.s32.totalorder %s52, %s53
    %p62 = scmp.eq.s32.totalorder %s21, 0
    %p63 = por %p61, %p62
    %p64 = scmp.ne.s32.totalorder %s52, %s53
    %p65 = scmp.eq.s32.totalorder %s22, 1
    %p66 = por %p64, %p65
    %p68 = scmp.ne.s32.totalorder %s53, %s67
    %p69 = scmp.eq.s32.totalorder %s22, 0
    %p70 = por %p68, %p69
    %s72 = sadd.s32 %s71, 1
    %p75 = scmp.eq.s32.totalorder %s16, 1
    %p76 = scmp.ne.s32.totalorder %s71, %s73
    %p77 = scmp.eq.s32.totalorder %s16, 0
    %p78 = por %p76, %p77
    %p79 = scmp.ne.s32.totalorder %s71, %s73
    %p80 = scmp.eq.s32.totalorder %s21, 1
    %p81 = por %p79, %p80
    %p82 = scmp.ne.s32.totalorder %s73, %s74
    %p83 = scmp.eq.s32.totalorder %s21, 0
    %p84 = por %p82, %p83
    %p85 = scmp.ne.s32.totalorder %s73, %s74
    %p86 = scmp.eq.s32.totalorder %s22, 1
    %p87 = por %p85, %p86
    %p89 = scmp.ne.s32.totalorder %s74, %s88
    %p90 = scmp.eq.s32.totalorder %s22, 0
    %p91 = por %p89, %p90
    %s92 = ssub.s32 %s16, %s23
    %p93 = scmp.eq.s32.totalorder %s92, 0
    %s95 = sadd.s32 %s94, 1
    %s96 = scalar_select %p93, %s94, %s95
    %p99 = pneg %p93
    %p100 = scmp.eq.s32.totalorder %s16, 1
    %p101 = por %p99, %p100
    %p102 = scmp.ne.s32.totalorder %s94, %s97
    %p103 = scmp.eq.s32.totalorder %s16, 0
    %p104 = por %p102, %p103
    %p105 = scmp.ne.s32.totalorder %s94, %s97
    %p106 = scmp.eq.s32.totalorder %s21, 1
    %p107 = por %p105, %p106
    %p108 = scmp.ne.s32.totalorder %s97, %s98
    %p109 = scmp.eq.s32.totalorder %s21, 0
    %p110 = por %p108, %p109
    %p111 = scmp.ne.s32.totalorder %s97, %s98
    %p112 = scmp.eq.s32.totalorder %s22, 1
    %p113 = por %p111, %p112
    %p115 = scmp.ne.s32.totalorder %s98, %s114
    %p116 = scmp.eq.s32.totalorder %s22, 0
    %p117 = por %p115, %p116
    %p118 = scmp.le.s32.totalorder 1, %s16
    %p119 = scmp.lt.s32.totalorder %s16, 3
    %p120 = pnand %p118, %p119
    %p121 = pneg %p120
    // Predicated region
    $region9: #{_lambda_.10} parent=5 // pred_check
      _
    $region10: #{_lambda_.10} parent=5 // pred_check_branch
      %123 = sbr.rel (%p120) target = $region12
    $region11: #{_lambda_.10} parent=5 // pred_region
      %s124 = ssub.s32 %s16, 1
      // Predicated region
      $region13: #{_lambda_.10} parent=11 // pred_check
        %p125 = pneg %p63
      $region14: #{_lambda_.10} parent=11 // pred_check_branch
        %127 = sbr.rel (%p125) target = $region16
      $region15: #{_lambda_.10} parent=11 // pred_region
        _
      $region16: #{_lambda_.10} parent=11 // pred_fallthru
        _
      // Predicated region
      $region17: #{_lambda_.10} parent=11 // pred_check
        %p128 = pneg %p84
      $region18: #{_lambda_.10} parent=11 // pred_check_branch
        %130 = sbr.rel (%p128) target = $region20
      $region19: #{_lambda_.10} parent=11 // pred_region
        _
      $region20: #{_lambda_.10} parent=11 // pred_fallthru
        _
    $region12: #{_lambda_.10} parent=5 // pred_fallthru
      _
    %p131 = scmp.lt.s32.totalorder %s16, 2
    // Predicated region
    $region21: #{_lambda_.10} parent=5 // pred_check
      %p132 = pneg %p131
    $region22: #{_lambda_.10} parent=5 // pred_check_branch
      %134 = sbr.rel (%p132) target = $region24
    $region23: #{_lambda_.10} parent=5 // pred_region
      // Predicated region
      $region25: #{_lambda_.10} parent=23 // pred_check
        %p135 = pneg %p36
      $region26: #{_lambda_.10} parent=23 // pred_check_branch
        %137 = sbr.rel (%p135) target = $region28
      $region27: #{_lambda_.10} parent=23 // pred_region
        %p138 = scmp.lt.s32.totalorder %s16, 1
        %s139 = scalar_select %p138, %s16, 1
        %s140 = smul.addr %s139, 8
        %s141 = scalar_lea.vmem %s1, %s140
      $region28: #{_lambda_.10} parent=23 // pred_fallthru
        _
    $region24: #{_lambda_.10} parent=5 // pred_fallthru
      _
    %p142 = scmp.le.s32.totalorder 1, %s16
    %p143 = scmp.lt.s32.totalorder %s16, 3
    %p144 = pnand %p142, %p143
    %p145 = pneg %p144
    // Predicated region
    $region29: #{_lambda_.10} parent=5 // pred_check
      _
    $region30: #{_lambda_.10} parent=5 // pred_check_branch
      %147 = sbr.rel (%p144) target = $region32
    $region31: #{_lambda_.10} parent=5 // pred_region
      %s148 = ssub.s32 %s16, 1
      %p149 = scmp.lt.s32.totalorder %s21, 1
      %s150 = scalar_select %p149, %s21, 1
      %s151 = smul.addr %s150, 8
      %s152 = scalar_lea.vmem %s1, %s151
      %p153 = pneg %p42
      %p154 = pneg %p39
      %p155 = pneg %p63
      %p156 = pneg %p60
      %p157 = pneg %p84
      %p158 = pneg %p81
      %p159 = pneg %p110
      %p160 = pneg %p107
      %p161 = scmp.lt.s32.totalorder %s21, 1
      %s162 = scalar_select %p161, %s21, 1
      %s163 = smul.addr %s162, 8
      %s164 = scalar_lea.vmem %s4, %s163
      %p165 = scmp.lt.s32.totalorder %s21, 1
      %s166 = scalar_select %p165, %s21, 1
      %s167 = smul.addr %s166, 8
      %s168 = scalar_lea.vmem %s1, %s167
      %p169 = scmp.lt.s32.totalorder %s21, 1
      %s170 = scalar_select %p169, %s21, 1
      %s171 = smul.addr %s170, 8
      %s172 = scalar_lea.vmem %s4, %s171
      %s174 = sld [smem:[#allocation3 + %s21]]
      %v175 = vlaneseq
      %v176 = vshrl.u32 %v175, 7
      %v177 = vstv %s174
      %vm178 = vcmp.lt.s32.totalorder %v176, %v177
      %v179 = vld [vmem:[%s168] sm:$0xff]
      %v180 = vsel %vm178, 1, 0
      %vm181 = vcmp.eq.s32.totalorder %v180, 1
      %v182 = vsel %vm181, %v179, 0.0
      %v183 = vpack.c.bf16 %v182, %v182
      %v184 = vld [vmem:[%s2] sm:$0xf]
      %v185 = vld [vmem:[%s2 + $0x4] sm:$0xf]
      %v186 = vld [vmem:[%s2 + $0x8] sm:$0xf]
      %v187 = vld [vmem:[%s2 + $0xc] sm:$0xf]
      %v188 = vld [vmem:[%s3] sm:$0x1]
      %v190 = vlaneseq
      %v191 = vshrl.u32 %v190, 7
      %v192 = vsub.s32 0, %v191
      %v193 = vrot.slane %v188, %v192
      %v199 = vunpack.c.l.b16 %v184
      %v200 = vunpack.c.l.b16 %v185
      %v201 = vunpack.c.l.b16 %v186
      %v202 = vunpack.c.l.b16 %v187
      %v203 = vpack.c.b16 %v200, %v199
      %v204 = vpack.c.b16 %v202, %v201
      %vm207 = vcmask 261120
      %v209 = vsel %vm207, %v183, 0
      %211 = vmatprep.subr.bf16.mxu0 0
      %212 = vmatpush1.bf16.msra.mxu0 %v203
      %213 = vmatprep.subr.bf16.mxu0 0
      %214 = vmatpush1.bf16.msra.mxu0 %v204
      %215 = vmatprep.subr.bf16.mxu0 0
      %216 = vmatpush1.bf16.msra.mxu0 0
      %217 = vmatprep.subr.bf16.mxu0 0
      %218 = vmatpush1.bf16.msra.mxu0 0
      %219 = vmatprep.subr.bf16.mxu0 0
      %220 = vmatpush1.bf16.msra.mxu0 0
      %221 = vmatprep.subr.bf16.mxu0 0
      %222 = vmatpush1.bf16.msra.mxu0 0
      %223 = vmatprep.subr.bf16.mxu0 0
      %224 = vmatpush1.bf16.msra.mxu0 0
      %225 = vmatprep.subr.bf16.mxu0 0
      %226 = vmatpush1.bf16.msra.mxu0 0
      %227 = vmatprep.subr.bf16.mxu0 0
      %228 = vmatpush1.bf16.msra.mxu0 0
      %229 = vmatprep.subr.bf16.mxu0 0
      %230 = vmatpush1.bf16.msra.mxu0 0
      %231 = vmatprep.subr.bf16.mxu0 0
      %232 = vmatpush1.bf16.msra.mxu0 0
      %233 = vmatprep.subr.bf16.mxu0 0
      %234 = vmatpush1.bf16.msra.mxu0 0
      %235 = vmatprep.subr.bf16.mxu0 0
      %236 = vmatpush1.bf16.msra.mxu0 0
      %237 = vmatprep.subr.bf16.mxu0 0
      %238 = vmatpush1.bf16.msra.mxu0 0
      %239 = vmatprep.subr.bf16.mxu0 0
      %240 = vmatpush1.bf16.msra.mxu0 0
      %241 = vmatprep.subr.bf16.mxu0 0
      %242 = vmatpush1.bf16.msra.mxu0 0
      %243 = vmatprep.mubr.bf16.mxu0 0
      %244 = vmatmul.mubr.bf16.gmra.mrb[0].mxu0 %v209
      %v245 = vpop.f32.mrb[0].mxu0
      %v246 = vadd.f32 %v193, %v245
      %v247 = vpop.f32.mrb[0].mxu0
      %v248 = vpop.f32.mrb[0].mxu0
      %v249 = vpop.f32.mrb[0].mxu0
      %250 = vdwg.mxu0
      %v251 = vsel %vm181, %v246, 0.0
      %252 = vst.msk [vmem:[%s172] sm:$0xff] %vm207, %v251
      %p253 = scmp.lt.s32.totalorder %s21, 1
      %s254 = scalar_select %p253, %s21, 1
      %s255 = smul.addr %s254, 8
      %s256 = scalar_lea.vmem %s4, %s255
      // Predicated region
      $region33: #{_lambda_.10} parent=31 // pred_check
        %p257 = pneg %p107
      $region34: #{_lambda_.10} parent=31 // pred_check_branch
        %259 = sbr.rel (%p257) target = $region36
      $region35: #{_lambda_.10} parent=31 // pred_region
        _
      $region36: #{_lambda_.10} parent=31 // pred_fallthru
        _
    $region32: #{_lambda_.10} parent=5 // pred_fallthru
      _
    %p260 = scmp.le.s32.totalorder 2, %s16
    // Predicated region
    $region37: #{_lambda_.10} parent=5 // pred_check
      %p261 = pneg %p260
    $region38: #{_lambda_.10} parent=5 // pred_check_branch
      %263 = sbr.rel (%p261) target = $region40
    $region39: #{_lambda_.10} parent=5 // pred_region
      %s264 = ssub.s32 %s16, 2
      // Predicated region
      $region41: #{_lambda_.10} parent=39 // pred_check
        %p265 = pneg %p113
      $region42: #{_lambda_.10} parent=39 // pred_check_branch
        %267 = sbr.rel (%p265) target = $region44
      $region43: #{_lambda_.10} parent=39 // pred_region
        %p268 = scmp.lt.s32.totalorder %s22, 1
        %s269 = scalar_select %p268, %s22, 1
        %s270 = smul.addr %s269, 8
        %s271 = scalar_lea.vmem %s4, %s270
      $region44: #{_lambda_.10} parent=39 // pred_fallthru
        _
    $region40: #{_lambda_.10} parent=5 // pred_fallthru
      _
  $region6: #{_lambda_.10} parent=0 // loop_footer
    %s20 = sadd.s32 1, %s16
  $region7: #{_lambda_.10} parent=0 // loop_footer_branch
    %15 = sbr.rel target = $region3
  $region8: #{_lambda_.10} parent=0 // loop_exit
    _

// kernel: _lambda_.7
$region0: #{_lambda_.7}
  #allocation0 [shape = 'u32[]', space=smem, size = 0x4, offset = 0x4, fixed_abs, tag = 'smem constant byte address 0x4 - core index']
  #allocation1 [shape = 'u32[144,128]{1,0:T(1,128)}', space=vmem, size = 0x12000, scoped, tag = 'internal scratch']
  #allocation2 [shape = 's32[1]{0}', space=sflag, size = 0x4, scoped, tag = 'scoped memory for _lambda_.7']
  #allocation3 [shape = 'u8[512]{0}', space=smem, size = 0x200, scoped, tag = 'prefetched SMEM operand 0']
  %s0 = inlined_call_operand.vmem [shape: s32[2], index: 0, kind: input, shape index: {}]
  %s1 = inlined_call_operand.vmem [shape: f32[2,8,32], index: 1, kind: input, shape index: {}]
  %s2 = inlined_call_operand.vmem [shape: bf16[96,64], index: 2, kind: input, shape index: {}]
  %s3 = inlined_call_operand.vmem [shape: f32[1,64], index: 3, kind: input, shape index: {}]
  %s4 = inlined_call_operand.vmem [shape: bf16[192,32], index: 4, kind: input, shape index: {}]
  %s5 = inlined_call_operand.vmem [shape: f32[1,32], index: 5, kind: input, shape index: {}]
  %s6 = inlined_call_operand.vmem [shape: f32[1,32], index: 6, kind: input, shape index: {}]
  %s7 = inlined_call_operand.vmem [shape: f32[1,32], index: 7, kind: input, shape index: {}]
  %s8 = inlined_call_operand.vmem [shape: f32[2,8,32], index: 8, kind: output, shape index: {}]
  %s9 = sld [smem:[#allocation0]]
  $region61: #{_lambda_.7} parent=0
    _
  %s11 = ssub.s32 1, %s9
  %s12 = scalar_select 0, %s11, %s9
  %s13 = sshll.u32 %s0, 4
  %s14 = int_to_ptr.vmem [resolvable:$true] %s13
  %16 = dma.vmem_to_smem %s14, 16, [#allocation3], [#allocation2]
  %17 = dma.done [#allocation2], 16
  %18 = sfence
  loop: start=0, step=1, limit=4
  $region2: #{_lambda_.7} parent=0 // loop_pre_header
    _
  $region3: #{_lambda_.7} parent=0 // loop_header
    %s20 = sphi 0, %s24
    %p21 = scmp.ge.s32.totalorder %s20, 4
    %s30 = sphi 0, %s32
    %s33 = sphi 0, %s30
    %s34 = sphi 0, %s33
    %s50 = sphi 0, %s34
    %s54 = sphi 0, %s54
    %s56 = sphi 0, %s54
    %s57 = sphi 0, %s56
    %s71 = sphi 0, %s57
    %s75 = sphi 0, %s75
    %s77 = sphi 0, %s75
    %s78 = sphi 0, %s77
    %s92 = sphi 0, %s78
    %s96 = sphi 0, %s96
    %s98 = sphi 0, %s96
    %s99 = sphi 0, %s98
    %s113 = sphi 0, %s99
    %s117 = sphi 0, %s117
    %s119 = sphi 0, %s117
    %s120 = sphi 0, %s119
    %s134 = sphi 0, %s120
    %s138 = sphi 0, %s138
    %s140 = sphi 0, %s138
    %s141 = sphi 0, %s140
    %s155 = sphi 0, %s141
    %s159 = sphi 0, %s159
    %s161 = sphi 0, %s159
    %s162 = sphi 0, %s161
    %s176 = sphi 0, %s162
    %s182 = sphi 0, %s184
    %s185 = sphi 0, %s182
    %s186 = sphi 0, %s185
    %s202 = sphi 0, %s186
  $region4: #{_lambda_.7} parent=0 // loop_header_branch
    %23 = sbr.rel (%p21) target = $region8
  $region5: #{_lambda_.7} parent=0 // loop_body
    %s25 = ssub.s32 %s20, 1
    %s26 = ssub.s32 %s20, 2
    %s27 = sadd.s32 %s20, 1
    %s28 = ssub.s32 %s20, %s27
    %p29 = scmp.eq.s32.totalorder %s28, 0
    %s31 = sadd.s32 %s30, 1
    %s32 = scalar_select %p29, %s30, %s31
    %p35 = pneg %p29
    %p36 = scmp.eq.s32.totalorder %s20, 1
    %p37 = por %p35, %p36
    %p38 = scmp.ne.s32.totalorder %s30, %s33
    %p39 = scmp.eq.s32.totalorder %s20, 0
    %p40 = por %p38, %p39
    %p41 = scmp.ne.s32.totalorder %s30, %s33
    %p42 = scmp.eq.s32.totalorder %s25, 1
    %p43 = por %p41, %p42
    %p44 = scmp.ne.s32.totalorder %s33, %s34
    %p45 = scmp.eq.s32.totalorder %s25, 0
    %p46 = por %p44, %p45
    %p47 = scmp.ne.s32.totalorder %s33, %s34
    %p48 = scmp.eq.s32.totalorder %s26, 1
    %p49 = por %p47, %p48
    %p51 = scmp.ne.s32.totalorder %s34, %s50
    %p52 = scmp.eq.s32.totalorder %s26, 0
    %p53 = por %p51, %p52
    %s55 = sadd.s32 %s54, 1
    %p58 = scmp.eq.s32.totalorder %s20, 1
    %p59 = scmp.ne.s32.totalorder %s54, %s56
    %p60 = scmp.eq.s32.totalorder %s20, 0
    %p61 = por %p59, %p60
    %p62 = scmp.ne.s32.totalorder %s54, %s56
    %p63 = scmp.eq.s32.totalorder %s25, 1
    %p64 = por %p62, %p63
    %p65 = scmp.ne.s32.totalorder %s56, %s57
    %p66 = scmp.eq.s32.totalorder %s25, 0
    %p67 = por %p65, %p66
    %p68 = scmp.ne.s32.totalorder %s56, %s57
    %p69 = scmp.eq.s32.totalorder %s26, 1
    %p70 = por %p68, %p69
    %p72 = scmp.ne.s32.totalorder %s57, %s71
    %p73 = scmp.eq.s32.totalorder %s26, 0
    %p74 = por %p72, %p73
    %s76 = sadd.s32 %s75, 1
    %p79 = scmp.eq.s32.totalorder %s20, 1
    %p80 = scmp.ne.s32.totalorder %s75, %s77
    %p81 = scmp.eq.s32.totalorder %s20, 0
    %p82 = por %p80, %p81
    %p83 = scmp.ne.s32.totalorder %s75, %s77
    %p84 = scmp.eq.s32.totalorder %s25, 1
    %p85 = por %p83, %p84
    %p86 = scmp.ne.s32.totalorder %s77, %s78
    %p87 = scmp.eq.s32.totalorder %s25, 0
    %p88 = por %p86, %p87
    %p89 = scmp.ne.s32.totalorder %s77, %s78
    %p90 = scmp.eq.s32.totalorder %s26, 1
    %p91 = por %p89, %p90
    %p93 = scmp.ne.s32.totalorder %s78, %s92
    %p94 = scmp.eq.s32.totalorder %s26, 0
    %p95 = por %p93, %p94
    %s97 = sadd.s32 %s96, 1
    %p100 = scmp.eq.s32.totalorder %s20, 1
    %p101 = scmp.ne.s32.totalorder %s96, %s98
    %p102 = scmp.eq.s32.totalorder %s20, 0
    %p103 = por %p101, %p102
    %p104 = scmp.ne.s32.totalorder %s96, %s98
    %p105 = scmp.eq.s32.totalorder %s25, 1
    %p106 = por %p104, %p105
    %p107 = scmp.ne.s32.totalorder %s98, %s99
    %p108 = scmp.eq.s32.totalorder %s25, 0
    %p109 = por %p107, %p108
    %p110 = scmp.ne.s32.totalorder %s98, %s99
    %p111 = scmp.eq.s32.totalorder %s26, 1
    %p112 = por %p110, %p111
    %p114 = scmp.ne.s32.totalorder %s99, %s113
    %p115 = scmp.eq.s32.totalorder %s26, 0
    %p116 = por %p114, %p115
    %s118 = sadd.s32 %s117, 1
    %p121 = scmp.eq.s32.totalorder %s20, 1
    %p122 = scmp.ne.s32.totalorder %s117, %s119
    %p123 = scmp.eq.s32.totalorder %s20, 0
    %p124 = por %p122, %p123
    %p125 = scmp.ne.s32.totalorder %s117, %s119
    %p126 = scmp.eq.s32.totalorder %s25, 1
    %p127 = por %p125, %p126
    %p128 = scmp.ne.s32.totalorder %s119, %s120
    %p129 = scmp.eq.s32.totalorder %s25, 0
    %p130 = por %p128, %p129
    %p131 = scmp.ne.s32.totalorder %s119, %s120
    %p132 = scmp.eq.s32.totalorder %s26, 1
    %p133 = por %p131, %p132
    %p135 = scmp.ne.s32.totalorder %s120, %s134
    %p136 = scmp.eq.s32.totalorder %s26, 0
    %p137 = por %p135, %p136
    %s139 = sadd.s32 %s138, 1
    %p142 = scmp.eq.s32.totalorder %s20, 1
    %p143 = scmp.ne.s32.totalorder %s138, %s140
    %p144 = scmp.eq.s32.totalorder %s20, 0
    %p145 = por %p143, %p144
    %p146 = scmp.ne.s32.totalorder %s138, %s140
    %p147 = scmp.eq.s32.totalorder %s25, 1
    %p148 = por %p146, %p147
    %p149 = scmp.ne.s32.totalorder %s140, %s141
    %p150 = scmp.eq.s32.totalorder %s25, 0
    %p151 = por %p149, %p150
    %p152 = scmp.ne.s32.totalorder %s140, %s141
    %p153 = scmp.eq.s32.totalorder %s26, 1
    %p154 = por %p152, %p153
    %p156 = scmp.ne.s32.totalorder %s141, %s155
    %p157 = scmp.eq.s32.totalorder %s26, 0
    %p158 = por %p156, %p157
    %s160 = sadd.s32 %s159, 1
    %p163 = scmp.eq.s32.totalorder %s20, 1
    %p164 = scmp.ne.s32.totalorder %s159, %s161
    %p165 = scmp.eq.s32.totalorder %s20, 0
    %p166 = por %p164, %p165
    %p167 = scmp.ne.s32.totalorder %s159, %s161
    %p168 = scmp.eq.s32.totalorder %s25, 1
    %p169 = por %p167, %p168
    %p170 = scmp.ne.s32.totalorder %s161, %s162
    %p171 = scmp.eq.s32.totalorder %s25, 0
    %p172 = por %p170, %p171
    %p173 = scmp.ne.s32.totalorder %s161, %s162
    %p174 = scmp.eq.s32.totalorder %s26, 1
    %p175 = por %p173, %p174
    %p177 = scmp.ne.s32.totalorder %s162, %s176
    %p178 = scmp.eq.s32.totalorder %s26, 0
    %p179 = por %p177, %p178
    %s180 = ssub.s32 %s20, %s27
    %p181 = scmp.eq.s32.totalorder %s180, 0
    %s183 = sadd.s32 %s182, 1
    %s184 = scalar_select %p181, %s182, %s183
    %p187 = pneg %p181
    %p188 = scmp.eq.s32.totalorder %s20, 1
    %p189 = por %p187, %p188
    %p190 = scmp.ne.s32.totalorder %s182, %s185
    %p191 = scmp.eq.s32.totalorder %s20, 0
    %p192 = por %p190, %p191
    %p193 = scmp.ne.s32.totalorder %s182, %s185
    %p194 = scmp.eq.s32.totalorder %s25, 1
    %p195 = por %p193, %p194
    %p196 = scmp.ne.s32.totalorder %s185, %s186
    %p197 = scmp.eq.s32.totalorder %s25, 0
    %p198 = por %p196, %p197
    %p199 = scmp.ne.s32.totalorder %s185, %s186
    %p200 = scmp.eq.s32.totalorder %s26, 1
    %p201 = por %p199, %p200
    %p203 = scmp.ne.s32.totalorder %s186, %s202
    %p204 = scmp.eq.s32.totalorder %s26, 0
    %p205 = por %p203, %p204
    %p206 = scmp.le.s32.totalorder 1, %s20
    %p207 = scmp.lt.s32.totalorder %s20, 3
    %p208 = pnand %p206, %p207
    %p209 = pneg %p208
    // Predicated region
    $region9: #{_lambda_.7} parent=5 // pred_check
      _
    $region10: #{_lambda_.7} parent=5 // pred_check_branch
      %211 = sbr.rel (%p208) target = $region12
    $region11: #{_lambda_.7} parent=5 // pred_region
      %s212 = ssub.s32 %s20, 1
      // Predicated region
      $region13: #{_lambda_.7} parent=11 // pred_check
        %p213 = pneg %p67
      $region14: #{_lambda_.7} parent=11 // pred_check_branch
        %215 = sbr.rel (%p213) target = $region16
      $region15: #{_lambda_.7} parent=11 // pred_region
        _
      $region16: #{_lambda_.7} parent=11 // pred_fallthru
        _
      // Predicated region
      $region17: #{_lambda_.7} parent=11 // pred_check
        %p216 = pneg %p88
      $region18: #{_lambda_.7} parent=11 // pred_check_branch
        %218 = sbr.rel (%p216) target = $region20
      $region19: #{_lambda_.7} parent=11 // pred_region
        _
      $region20: #{_lambda_.7} parent=11 // pred_fallthru
        _
      // Predicated region
      $region21: #{_lambda_.7} parent=11 // pred_check
        %p219 = pneg %p109
      $region22: #{_lambda_.7} parent=11 // pred_check_branch
        %221 = sbr.rel (%p219) target = $region24
      $region23: #{_lambda_.7} parent=11 // pred_region
        _
      $region24: #{_lambda_.7} parent=11 // pred_fallthru
        _
      // Predicated region
      $region25: #{_lambda_.7} parent=11 // pred_check
        %p222 = pneg %p130
      $region26: #{_lambda_.7} parent=11 // pred_check_branch
        %224 = sbr.rel (%p222) target = $region28
      $region27: #{_lambda_.7} parent=11 // pred_region
        _
      $region28: #{_lambda_.7} parent=11 // pred_fallthru
        _
      // Predicated region
      $region29: #{_lambda_.7} parent=11 // pred_check
        %p225 = pneg %p151
      $region30: #{_lambda_.7} parent=11 // pred_check_branch
        %227 = sbr.rel (%p225) target = $region32
      $region31: #{_lambda_.7} parent=11 // pred_region
        _
      $region32: #{_lambda_.7} parent=11 // pred_fallthru
        _
      // Predicated region
      $region33: #{_lambda_.7} parent=11 // pred_check
        %p228 = pneg %p172
      $region34: #{_lambda_.7} parent=11 // pred_check_branch
        %230 = sbr.rel (%p228) target = $region36
      $region35: #{_lambda_.7} parent=11 // pred_region
        _
      $region36: #{_lambda_.7} parent=11 // pred_fallthru
        _
    $region12: #{_lambda_.7} parent=5 // pred_fallthru
      _
    %p231 = scmp.lt.s32.totalorder %s20, 2
    // Predicated region
    $region37: #{_lambda_.7} parent=5 // pred_check
      %p232 = pneg %p231
    $region38: #{_lambda_.7} parent=5 // pred_check_branch
      %234 = sbr.rel (%p232) target = $region40
    $region39: #{_lambda_.7} parent=5 // pred_region
      // Predicated region
      $region41: #{_lambda_.7} parent=39 // pred_check
        %p235 = pneg %p40
      $region42: #{_lambda_.7} parent=39 // pred_check_branch
        %237 = sbr.rel (%p235) target = $region44
      $region43: #{_lambda_.7} parent=39 // pred_region
        %p238 = scmp.lt.s32.totalorder %s20, 1
        %s239 = scalar_select %p238, %s20, 1
        %s240 = smul.addr %s239, 8
        %s241 = scalar_lea.vmem %s1, %s240
      $region44: #{_lambda_.7} parent=39 // pred_fallthru
        _
    $region40: #{_lambda_.7} parent=5 // pred_fallthru
      _
    %p242 = scmp.le.s32.totalorder 1, %s20
    %p243 = scmp.lt.s32.totalorder %s20, 3
    %p244 = pnand %p242, %p243
    %p245 = pneg %p244
    // Predicated region
    $region45: #{_lambda_.7} parent=5 // pred_check
      _
    $region46: #{_lambda_.7} parent=5 // pred_check_branch
      %247 = sbr.rel (%p244) target = $region48
    $region47: #{_lambda_.7} parent=5 // pred_region
      %s248 = ssub.s32 %s20, 1
      %p249 = scmp.lt.s32.totalorder %s25, 1
      %s250 = scalar_select %p249, %s25, 1
      %s251 = smul.addr %s250, 8
      %s252 = scalar_lea.vmem %s1, %s251
      %p253 = pneg %p46
      %p254 = pneg %p43
      %p255 = pneg %p67
      %p256 = pneg %p64
      %p257 = pneg %p88
      %p258 = pneg %p85
      %p259 = pneg %p109
      %p260 = pneg %p106
      %p261 = pneg %p130
      %p262 = pneg %p127
      %p263 = pneg %p151
      %p264 = pneg %p148
      %p265 = pneg %p172
      %p266 = pneg %p169
      %p267 = pneg %p198
      %p268 = pneg %p195
      %p269 = scmp.lt.s32.totalorder %s25, 1
      %s270 = scalar_select %p269, %s25, 1
      %s271 = smul.addr %s270, 8
      %s272 = scalar_lea.vmem %s8, %s271
      %p273 = scmp.lt.s32.totalorder %s25, 1
      %s274 = scalar_select %p273, %s25, 1
      %s275 = smul.addr %s274, 8
      %s276 = scalar_lea.vmem %s1, %s275
      %p277 = scmp.lt.s32.totalorder %s25, 1
      %s278 = scalar_select %p277, %s25, 1
      %s279 = smul.addr %s278, 8
      %s280 = scalar_lea.vmem %s8, %s279
      %s282 = sld [smem:[#allocation3 + %s25]]
      %v283 = vlaneseq
      %v284 = vshrl.u32 %v283, 7
      %v285 = vstv %s282
      %vm286 = vcmp.lt.s32.totalorder %v284, %v285
      %v287 = vld [vmem:[%s276] sm:$0xff]
      %v288 = vsel %vm286, 1, 0
      %vm289 = vcmp.eq.s32.totalorder %v288, 1
      %v290 = vsel %vm289, %v287, 0.0
      %v291 = vld [vmem:[%s2] sm:$0xf]
      %v292 = vld [vmem:[%s2 + $0x4] sm:$0xf]
      %v293 = vld [vmem:[%s2 + $0x8] sm:$0xf]
      %v294 = vld [vmem:[%s2 + $0xc] sm:$0xf]
      %v295 = vld [vmem:[%s2 + $0x10] sm:$0xf]
      %v296 = vld [vmem:[%s2 + $0x14] sm:$0xf]
      %v297 = vld [vmem:[%s2 + $0x18] sm:$0xf]
      %v298 = vld [vmem:[%s2 + $0x1c] sm:$0xf]
      %v299 = vld [vmem:[%s2 + $0x20] sm:$0xf]
      %v300 = vld [vmem:[%s2 + $0x24] sm:$0xf]
      %v301 = vld [vmem:[%s2 + $0x28] sm:$0xf]
      %v302 = vld [vmem:[%s2 + $0x2c] sm:$0xf]
      %v303 = vld [vmem:[%s3] sm:$0x1]
      %v304 = vrot.slane %v290, 7
      %v305 = vadd.s32 %v284, 4294967295
      %vm306 = vcmp.ge.s32.totalorder %v305, 0
      %vm307 = vcmp.lt.s32.totalorder %v305, 8
      %vm308 = vmand %vm306, %vm307
      %v309 = vsel %vm308, 1, 0
      %vm310 = vcmp.eq.s32.totalorder %v309, 1
      %v311 = vsel %vm310, %v304, 0.0
      %v312 = vrot.slane %v290, 1
      %v313 = vadd.s32 %v284, 1
      %vm314 = vcmp.ge.s32.totalorder %v313, 0
      %vm315 = vcmp.lt.s32.totalorder %v313, 8
      %vm316 = vmand %vm314, %vm315
      %v317 = vsel %vm316, 1, 0
      %vm318 = vcmp.eq.s32.totalorder %v317, 1
      %v319 = vsel %vm318, %v312, 0.0
      %321 = vrot.lane.b32.xlu0 %v290, 32
      %v322 = vpop.permute.xlu0 %321
      %325 = vrot.lane.b32.xlu0 %v319, 64
      %v326 = vpop.permute.xlu0 %325
      %vm328 = vcmask 261120
      %v329 = vsel %vm328, %v311, %v322
      %vm330 = vcmask 523264
      %v331 = vsel %vm330, %v329, %v326
      %v332 = vpack.c.bf16 %v331, %v331
      %v334 = vlaneseq
      %v335 = vshrl.u32 %v334, 7
      %v336 = vsub.s32 0, %v335
      %v337 = vrot.slane %v303, %v336
      %v351 = vunpack.c.l.b16 %v291
      %v352 = vunpack.c.l.b16 %v292
      %v353 = vunpack.c.l.b16 %v293
      %v354 = vunpack.c.l.b16 %v294
      %v355 = vunpack.c.l.b16 %v295
      %v356 = vunpack.c.l.b16 %v296
      %v357 = vunpack.c.l.b16 %v297
      %v358 = vunpack.c.l.b16 %v298
      %v359 = vunpack.c.l.b16 %v299
      %v360 = vunpack.c.l.b16 %v300
      %v361 = vunpack.c.l.b16 %v301
      %v362 = vunpack.c.l.b16 %v302
      %v363 = vpack.c.b16 %v352, %v351
      %v364 = vpack.c.b16 %v354, %v353
      %v365 = vpack.c.b16 %v356, %v355
      %v366 = vpack.c.b16 %v358, %v357
      %v367 = vpack.c.b16 %v360, %v359
      %v368 = vpack.c.b16 %v362, %v361
      %vm375 = vcmask 785408
      %v377 = vsel %vm375, %v332, 0
      %379 = vmatprep.subr.bf16.mxu0 0
      %380 = vmatpush1.bf16.msra.mxu0 %v363
      %381 = vmatprep.subr.bf16.mxu0 0
      %382 = vmatpush1.bf16.msra.mxu0 %v364
      %383 = vmatprep.subr.bf16.mxu0 0
      %384 = vmatpush1.bf16.msra.mxu0 %v365
      %385 = vmatprep.subr.bf16.mxu0 0
      %386 = vmatpush1.bf16.msra.mxu0 %v366
      %387 = vmatprep.subr.bf16.mxu0 0
      %388 = vmatpush1.bf16.msra.mxu0 %v367
      %389 = vmatprep.subr.bf16.mxu0 0
      %390 = vmatpush1.bf16.msra.mxu0 %v368
      %391 = vmatprep.subr.bf16.mxu0 0
      %392 = vmatpush1.bf16.msra.mxu0 0
      %393 = vmatprep.subr.bf16.mxu0 0
      %394 = vmatpush1.bf16.msra.mxu0 0
      %395 = vmatprep.subr.bf16.mxu0 0
      %396 = vmatpush1.bf16.msra.mxu0 0
      %397 = vmatprep.subr.bf16.mxu0 0
      %398 = vmatpush1.bf16.msra.mxu0 0
      %399 = vmatprep.subr.bf16.mxu0 0
      %400 = vmatpush1.bf16.msra.mxu0 0
      %401 = vmatprep.subr.bf16.mxu0 0
      %402 = vmatpush1.bf16.msra.mxu0 0
      %403 = vmatprep.subr.bf16.mxu0 0
      %404 = vmatpush1.bf16.msra.mxu0 0
      %405 = vmatprep.subr.bf16.mxu0 0
      %406 = vmatpush1.bf16.msra.mxu0 0
      %407 = vmatprep.subr.bf16.mxu0 0
      %408 = vmatpush1.bf16.msra.mxu0 0
      %409 = vmatprep.subr.bf16.mxu0 0
      %410 = vmatpush1.bf16.msra.mxu0 0
      %411 = vmatprep.mubr.bf16.mxu0 0
      %412 = vmatmul.mubr.bf16.gmra.mrb[0].mxu0 %v377
      %v413 = vpop.f32.mrb[0].mxu0
      %v414 = vadd.f32 %v337, %v413
      %v415 = vpop.f32.mrb[0].mxu0
      %v416 = vpop.f32.mrb[0].mxu0
      %v417 = vpop.f32.mrb[0].mxu0
      %418 = vdwg.mxu0
      %v419 = vmax.f32 %v414, 0.0
      %v420 = vsel %vm289, %v419, 0.0
      %v421 = vld [vmem:[%s4] sm:$0xf]
      %v422 = vld [vmem:[%s4 + $0x4] sm:$0xf]
      %v423 = vld [vmem:[%s4 + $0x8] sm:$0xf]
      %v424 = vld [vmem:[%s4 + $0xc] sm:$0xf]
      %v425 = vld [vmem:[%s4 + $0x10] sm:$0xf]
      %v426 = vld [vmem:[%s4 + $0x14] sm:$0xf]
      %v427 = vld [vmem:[%s4 + $0x18] sm:$0xf]
      %v428 = vld [vmem:[%s4 + $0x1c] sm:$0xf]
      %v429 = vld [vmem:[%s4 + $0x20] sm:$0xf]
      %v430 = vld [vmem:[%s4 + $0x24] sm:$0xf]
      %v431 = vld [vmem:[%s4 + $0x28] sm:$0xf]
      %v432 = vld [vmem:[%s4 + $0x2c] sm:$0xf]
      %v433 = vld [vmem:[%s4 + $0x30] sm:$0xf]
      %v434 = vld [vmem:[%s4 + $0x34] sm:$0xf]
      %v435 = vld [vmem:[%s4 + $0x38] sm:$0xf]
      %v436 = vld [vmem:[%s4 + $0x3c] sm:$0xf]
      %v437 = vld [vmem:[%s4 + $0x40] sm:$0xf]
      %v438 = vld [vmem:[%s4 + $0x44] sm:$0xf]
      %v439 = vld [vmem:[%s4 + $0x48] sm:$0xf]
      %v440 = vld [vmem:[%s4 + $0x4c] sm:$0xf]
      %v441 = vld [vmem:[%s4 + $0x50] sm:$0xf]
      %v442 = vld [vmem:[%s4 + $0x54] sm:$0xf]
      %v443 = vld [vmem:[%s4 + $0x58] sm:$0xf]
      %v444 = vld [vmem:[%s4 + $0x5c] sm:$0xf]
      %v445 = vld [vmem:[%s5] sm:$0x1]
      %v446 = vrot.slane %v420, 7
      %v447 = vsel %vm310, %v446, 0.0
      %v448 = vrot.slane %v420, 1
      %v449 = vsel %vm318, %v448, 0.0
      %451 = vrot.lane.b32.xlu0 %v420, 64
      %v452 = vpop.permute.xlu0 %451
      %v454 = vsel %vm330, %v447, %v452
      %v455 = vpack.c.bf16 %v454, %v454
      %v456 = vpack.c.bf16 %v449, %v449
      %v458 = vlaneseq
      %v459 = vshrl.u32 %v458, 7
      %v460 = vsub.s32 0, %v459
      %v461 = vrot.slane %v445, %v460
      %v487 = vunpack.c.l.b16 %v421
      %v488 = vunpack.c.l.b16 %v422
      %v489 = vunpack.c.l.b16 %v423
      %v490 = vunpack.c.l.b16 %v424
      %v491 = vunpack.c.l.b16 %v425
      %v492 = vunpack.c.l.b16 %v426
      %v493 = vunpack.c.l.b16 %v427
      %v494 = vunpack.c.l.b16 %v428
      %v495 = vunpack.c.l.b16 %v429
      %v496 = vunpack.c.l.b16 %v430
      %v497 = vunpack.c.l.b16 %v431
      %v498 = vunpack.c.l.b16 %v432
      %v499 = vunpack.c.l.b16 %v433
      %v500 = vunpack.c.l.b16 %v434
      %v501 = vunpack.c.l.b16 %v435
      %v502 = vunpack.c.l.b16 %v436
      %v503 = vunpack.c.l.b16 %v437
      %v504 = vunpack.c.l.b16 %v438
      %v505 = vunpack.c.l.b16 %v439
      %v506 = vunpack.c.l.b16 %v440
      %v507 = vunpack.c.l.b16 %v441
      %v508 = vunpack.c.l.b16 %v442
      %v509 = vunpack.c.l.b16 %v443
      %v510 = vunpack.c.l.b16 %v444
      %v511 = vpack.c.b16 %v488, %v487
      %v512 = vpack.c.b16 %v490, %v489
      %v513 = vpack.c.b16 %v492, %v491
      %v514 = vpack.c.b16 %v494, %v493
      %v515 = vpack.c.b16 %v496, %v495
      %v516 = vpack.c.b16 %v498, %v497
      %v517 = vpack.c.b16 %v500, %v499
      %v518 = vpack.c.b16 %v502, %v501
      %v519 = vpack.c.b16 %v504, %v503
      %v520 = vpack.c.b16 %v506, %v505
      %v521 = vpack.c.b16 %v508, %v507
      %v522 = vpack.c.b16 %v510, %v509
      %v536 = vsel %vm330, %v456, 0
      %538 = vmatprep.subr.bf16.mxu0 0
      %539 = vmatpush1.bf16.msra.mxu0 %v511
      %540 = vmatprep.subr.bf16.mxu0 0
      %541 = vmatpush1.bf16.msra.mxu0 %v512
      %542 = vmatprep.subr.bf16.mxu0 0
      %543 = vmatpush1.bf16.msra.mxu0 %v513
      %544 = vmatprep.subr.bf16.mxu0 0
      %545 = vmatpush1.bf16.msra.mxu0 %v514
      %546 = vmatprep.subr.bf16.mxu0 0
      %547 = vmatpush1.bf16.msra.mxu0 %v515
      %548 = vmatprep.subr.bf16.mxu0 0
      %549 = vmatpush1.bf16.msra.mxu0 %v516
      %550 = vmatprep.subr.bf16.mxu0 0
      %551 = vmatpush1.bf16.msra.mxu0 %v517
      %552 = vmatprep.subr.bf16.mxu0 0
      %553 = vmatpush1.bf16.msra.mxu0 %v518
      %554 = vmatprep.subr.bf16.mxu0 0
      %555 = vmatpush1.bf16.msra.mxu0 %v519
      %556 = vmatprep.subr.bf16.mxu0 0
      %557 = vmatpush1.bf16.msra.mxu0 %v520
      %558 = vmatprep.subr.bf16.mxu0 0
      %559 = vmatpush1.bf16.msra.mxu0 %v521
      %560 = vmatprep.subr.bf16.mxu0 0
      %561 = vmatpush1.bf16.msra.mxu0 %v522
      %562 = vmatprep.subr.bf16.mxu0 0
      %563 = vmatpush1.bf16.msra.mxu0 0
      %564 = vmatprep.subr.bf16.mxu0 0
      %565 = vmatpush1.bf16.msra.mxu0 0
      %566 = vmatprep.subr.bf16.mxu0 0
      %567 = vmatpush1.bf16.msra.mxu0 0
      %568 = vmatprep.subr.bf16.mxu0 0
      %569 = vmatpush1.bf16.msra.mxu0 0
      %570 = vmatprep.mubr.bf16.mxu0 %v536
      %571 = vmatmul.mubr.bf16.gmra.mrb[0].mxu0 %v455
      %v572 = vpop.f32.mrb[0].mxu0
      %v573 = vadd.f32 %v461, %v572
      %v574 = vpop.f32.mrb[0].mxu0
      %v575 = vpop.f32.mrb[0].mxu0
      %v576 = vpop.f32.mrb[0].mxu0
      %577 = vdwg.mxu0
      %v578 = vsel %vm289, %v573, 0.0
      %v579 = vadd.f32 %v287, %v578
      %v580 = vld [vmem:[%s6] sm:$0x1]
      %v581 = vld [vmem:[%s7] sm:$0x1]
      %v582 = vsel %vm328, %v579, 0.0
      %583 = vadd.xlane.f32.xlu0 %v582
      %v584 = vpop.xlane.xlu0 %583
      %v585 = vrcp.pop 32.0
      %v586 = vmul.f32 %v584, %v585
      %v587 = vsub.f32 %v579, %v586
      %v588 = vmul.f32 %v587, %v587
      %v589 = vsel %vm328, %v588, 0.0
      %590 = vadd.xlane.f32.xlu0 %v589
      %v591 = vpop.xlane.xlu0 %590
      %v592 = vmul.f32 %v591, %v585
      %v593 = vadd.f32 %v592, 0.0001
      %v594 = vrsqrt.pop %v593
      %v595 = vmul.f32 %v587, %v594
      %v597 = vlaneseq
      %v598 = vshrl.u32 %v597, 7
      %v599 = vsub.s32 0, %v598
      %v600 = vrot.slane %v580, %v599
      %v602 = vmul.f32 %v595, %v600
      %v604 = vlaneseq
      %v605 = vshrl.u32 %v604, 7
      %v606 = vsub.s32 0, %v605
      %v607 = vrot.slane %v581, %v606
      %v609 = vadd.f32 %v602, %v607
      %610 = vst.msk [vmem:[%s280] sm:$0xff] %vm328, %v609
      %p611 = scmp.lt.s32.totalorder %s25, 1
      %s612 = scalar_select %p611, %s25, 1
      %s613 = smul.addr %s612, 8
      %s614 = scalar_lea.vmem %s8, %s613
      // Predicated region
      $region49: #{_lambda_.7} parent=47 // pred_check
        %p615 = pneg %p195
      $region50: #{_lambda_.7} parent=47 // pred_check_branch
        %617 = sbr.rel (%p615) target = $region52
      $region51: #{_lambda_.7} parent=47 // pred_region
        _
      $region52: #{_lambda_.7} parent=47 // pred_fallthru
        _
    $region48: #{_lambda_.7} parent=5 // pred_fallthru
      _
    %p618 = scmp.le.s32.totalorder 2, %s20
    // Predicated region
    $region53: #{_lambda_.7} parent=5 // pred_check
      %p619 = pneg %p618
    $region54: #{_lambda_.7} parent=5 // pred_check_branch
      %621 = sbr.rel (%p619) target = $region56
    $region55: #{_lambda_.7} parent=5 // pred_region
      %s622 = ssub.s32 %s20, 2
      // Predicated region
      $region57: #{_lambda_.7} parent=55 // pred_check
        %p623 = pneg %p201
      $region58: #{_lambda_.7} parent=55 // pred_check_branch
        %625 = sbr.rel (%p623) target = $region60
      $region59: #{_lambda_.7} parent=55 // pred_region
        %p626 = scmp.lt.s32.totalorder %s26, 1
        %s627 = scalar_select %p626, %s26, 1
        %s628 = smul.addr %s627, 8
        %s629 = scalar_lea.vmem %s8, %s628
      $region60: #{_lambda_.7} parent=55 // pred_fallthru
        _
    $region56: #{_lambda_.7} parent=5 // pred_fallthru
      _
  $region6: #{_lambda_.7} parent=0 // loop_footer
    %s24 = sadd.s32 1, %s20
  $region7: #{_lambda_.7} parent=0 // loop_footer_branch
    %19 = sbr.rel target = $region3
  $region8: #{_lambda_.7} parent=0 // loop_exit
    _

// kernel: _lambda_.6
$region0: #{_lambda_.6}
  #allocation0 [shape = 'u32[]', space=smem, size = 0x4, offset = 0x4, fixed_abs, tag = 'smem constant byte address 0x4 - core index']
  #allocation1 [shape = 'u32[144,128]{1,0:T(1,128)}', space=vmem, size = 0x12000, scoped, tag = 'internal scratch']
  #allocation2 [shape = 's32[1]{0}', space=sflag, size = 0x4, scoped, tag = 'scoped memory for _lambda_.6']
  #allocation3 [shape = 'u8[512]{0}', space=smem, size = 0x200, scoped, tag = 'prefetched SMEM operand 0']
  %s0 = inlined_call_operand.vmem [shape: s32[2], index: 0, kind: input, shape index: {}]
  %s1 = inlined_call_operand.vmem [shape: f32[2,8,32], index: 1, kind: input, shape index: {}]
  %s2 = inlined_call_operand.vmem [shape: bf16[32,96], index: 2, kind: input, shape index: {}]
  %s3 = inlined_call_operand.vmem [shape: f32[1,96], index: 3, kind: input, shape index: {}]
  %s4 = inlined_call_operand.vmem [shape: bf16[32,32], index: 4, kind: input, shape index: {}]
  %s5 = inlined_call_operand.vmem [shape: f32[1,32], index: 5, kind: input, shape index: {}]
  %s6 = inlined_call_operand.vmem [shape: f32[1,32], index: 6, kind: input, shape index: {}]
  %s7 = inlined_call_operand.vmem [shape: f32[1,32], index: 7, kind: input, shape index: {}]
  %s8 = inlined_call_operand.vmem [shape: f32[2,8,32], index: 8, kind: output, shape index: {}]
  %s9 = sld [smem:[#allocation0]]
  $region61: #{_lambda_.6} parent=0
    _
  %s11 = ssub.s32 1, %s9
  %s12 = scalar_select 0, %s11, %s9
  %s13 = sshll.u32 %s0, 4
  %s14 = int_to_ptr.vmem [resolvable:$true] %s13
  %16 = dma.vmem_to_smem %s14, 16, [#allocation3], [#allocation2]
  %17 = dma.done [#allocation2], 16
  %18 = sfence
  loop: start=0, step=1, limit=4
  $region2: #{_lambda_.6} parent=0 // loop_pre_header
    _
  $region3: #{_lambda_.6} parent=0 // loop_header
    %s20 = sphi 0, %s24
    %p21 = scmp.ge.s32.totalorder %s20, 4
    %s30 = sphi 0, %s32
    %s33 = sphi 0, %s30
    %s34 = sphi 0, %s33
    %s50 = sphi 0, %s34
    %s54 = sphi 0, %s54
    %s56 = sphi 0, %s54
    %s57 = sphi 0, %s56
    %s71 = sphi 0, %s57
    %s75 = sphi 0, %s75
    %s77 = sphi 0, %s75
    %s78 = sphi 0, %s77
    %s92 = sphi 0, %s78
    %s96 = sphi 0, %s96
    %s98 = sphi 0, %s96
    %s99 = sphi 0, %s98
    %s113 = sphi 0, %s99
    %s117 = sphi 0, %s117
    %s119 = sphi 0, %s117
    %s120 = sphi 0, %s119
    %s134 = sphi 0, %s120
    %s138 = sphi 0, %s138
    %s140 = sphi 0, %s138
    %s141 = sphi 0, %s140
    %s155 = sphi 0, %s141
    %s159 = sphi 0, %s159
    %s161 = sphi 0, %s159
    %s162 = sphi 0, %s161
    %s176 = sphi 0, %s162
    %s182 = sphi 0, %s184
    %s185 = sphi 0, %s182
    %s186 = sphi 0, %s185
    %s202 = sphi 0, %s186
  $region4: #{_lambda_.6} parent=0 // loop_header_branch
    %23 = sbr.rel (%p21) target = $region8
  $region5: #{_lambda_.6} parent=0 // loop_body
    %s25 = ssub.s32 %s20, 1
    %s26 = ssub.s32 %s20, 2
    %s27 = sadd.s32 %s20, 1
    %s28 = ssub.s32 %s20, %s27
    %p29 = scmp.eq.s32.totalorder %s28, 0
    %s31 = sadd.s32 %s30, 1
    %s32 = scalar_select %p29, %s30, %s31
    %p35 = pneg %p29
    %p36 = scmp.eq.s32.totalorder %s20, 1
    %p37 = por %p35, %p36
    %p38 = scmp.ne.s32.totalorder %s30, %s33
    %p39 = scmp.eq.s32.totalorder %s20, 0
    %p40 = por %p38, %p39
    %p41 = scmp.ne.s32.totalorder %s30, %s33
    %p42 = scmp.eq.s32.totalorder %s25, 1
    %p43 = por %p41, %p42
    %p44 = scmp.ne.s32.totalorder %s33, %s34
    %p45 = scmp.eq.s32.totalorder %s25, 0
    %p46 = por %p44, %p45
    %p47 = scmp.ne.s32.totalorder %s33, %s34
    %p48 = scmp.eq.s32.totalorder %s26, 1
    %p49 = por %p47, %p48
    %p51 = scmp.ne.s32.totalorder %s34, %s50
    %p52 = scmp.eq.s32.totalorder %s26, 0
    %p53 = por %p51, %p52
    %s55 = sadd.s32 %s54, 1
    %p58 = scmp.eq.s32.totalorder %s20, 1
    %p59 = scmp.ne.s32.totalorder %s54, %s56
    %p60 = scmp.eq.s32.totalorder %s20, 0
    %p61 = por %p59, %p60
    %p62 = scmp.ne.s32.totalorder %s54, %s56
    %p63 = scmp.eq.s32.totalorder %s25, 1
    %p64 = por %p62, %p63
    %p65 = scmp.ne.s32.totalorder %s56, %s57
    %p66 = scmp.eq.s32.totalorder %s25, 0
    %p67 = por %p65, %p66
    %p68 = scmp.ne.s32.totalorder %s56, %s57
    %p69 = scmp.eq.s32.totalorder %s26, 1
    %p70 = por %p68, %p69
    %p72 = scmp.ne.s32.totalorder %s57, %s71
    %p73 = scmp.eq.s32.totalorder %s26, 0
    %p74 = por %p72, %p73
    %s76 = sadd.s32 %s75, 1
    %p79 = scmp.eq.s32.totalorder %s20, 1
    %p80 = scmp.ne.s32.totalorder %s75, %s77
    %p81 = scmp.eq.s32.totalorder %s20, 0
    %p82 = por %p80, %p81
    %p83 = scmp.ne.s32.totalorder %s75, %s77
    %p84 = scmp.eq.s32.totalorder %s25, 1
    %p85 = por %p83, %p84
    %p86 = scmp.ne.s32.totalorder %s77, %s78
    %p87 = scmp.eq.s32.totalorder %s25, 0
    %p88 = por %p86, %p87
    %p89 = scmp.ne.s32.totalorder %s77, %s78
    %p90 = scmp.eq.s32.totalorder %s26, 1
    %p91 = por %p89, %p90
    %p93 = scmp.ne.s32.totalorder %s78, %s92
    %p94 = scmp.eq.s32.totalorder %s26, 0
    %p95 = por %p93, %p94
    %s97 = sadd.s32 %s96, 1
    %p100 = scmp.eq.s32.totalorder %s20, 1
    %p101 = scmp.ne.s32.totalorder %s96, %s98
    %p102 = scmp.eq.s32.totalorder %s20, 0
    %p103 = por %p101, %p102
    %p104 = scmp.ne.s32.totalorder %s96, %s98
    %p105 = scmp.eq.s32.totalorder %s25, 1
    %p106 = por %p104, %p105
    %p107 = scmp.ne.s32.totalorder %s98, %s99
    %p108 = scmp.eq.s32.totalorder %s25, 0
    %p109 = por %p107, %p108
    %p110 = scmp.ne.s32.totalorder %s98, %s99
    %p111 = scmp.eq.s32.totalorder %s26, 1
    %p112 = por %p110, %p111
    %p114 = scmp.ne.s32.totalorder %s99, %s113
    %p115 = scmp.eq.s32.totalorder %s26, 0
    %p116 = por %p114, %p115
    %s118 = sadd.s32 %s117, 1
    %p121 = scmp.eq.s32.totalorder %s20, 1
    %p122 = scmp.ne.s32.totalorder %s117, %s119
    %p123 = scmp.eq.s32.totalorder %s20, 0
    %p124 = por %p122, %p123
    %p125 = scmp.ne.s32.totalorder %s117, %s119
    %p126 = scmp.eq.s32.totalorder %s25, 1
    %p127 = por %p125, %p126
    %p128 = scmp.ne.s32.totalorder %s119, %s120
    %p129 = scmp.eq.s32.totalorder %s25, 0
    %p130 = por %p128, %p129
    %p131 = scmp.ne.s32.totalorder %s119, %s120
    %p132 = scmp.eq.s32.totalorder %s26, 1
    %p133 = por %p131, %p132
    %p135 = scmp.ne.s32.totalorder %s120, %s134
    %p136 = scmp.eq.s32.totalorder %s26, 0
    %p137 = por %p135, %p136
    %s139 = sadd.s32 %s138, 1
    %p142 = scmp.eq.s32.totalorder %s20, 1
    %p143 = scmp.ne.s32.totalorder %s138, %s140
    %p144 = scmp.eq.s32.totalorder %s20, 0
    %p145 = por %p143, %p144
    %p146 = scmp.ne.s32.totalorder %s138, %s140
    %p147 = scmp.eq.s32.totalorder %s25, 1
    %p148 = por %p146, %p147
    %p149 = scmp.ne.s32.totalorder %s140, %s141
    %p150 = scmp.eq.s32.totalorder %s25, 0
    %p151 = por %p149, %p150
    %p152 = scmp.ne.s32.totalorder %s140, %s141
    %p153 = scmp.eq.s32.totalorder %s26, 1
    %p154 = por %p152, %p153
    %p156 = scmp.ne.s32.totalorder %s141, %s155
    %p157 = scmp.eq.s32.totalorder %s26, 0
    %p158 = por %p156, %p157
    %s160 = sadd.s32 %s159, 1
    %p163 = scmp.eq.s32.totalorder %s20, 1
    %p164 = scmp.ne.s32.totalorder %s159, %s161
    %p165 = scmp.eq.s32.totalorder %s20, 0
    %p166 = por %p164, %p165
    %p167 = scmp.ne.s32.totalorder %s159, %s161
    %p168 = scmp.eq.s32.totalorder %s25, 1
    %p169 = por %p167, %p168
    %p170 = scmp.ne.s32.totalorder %s161, %s162
    %p171 = scmp.eq.s32.totalorder %s25, 0
    %p172 = por %p170, %p171
    %p173 = scmp.ne.s32.totalorder %s161, %s162
    %p174 = scmp.eq.s32.totalorder %s26, 1
    %p175 = por %p173, %p174
    %p177 = scmp.ne.s32.totalorder %s162, %s176
    %p178 = scmp.eq.s32.totalorder %s26, 0
    %p179 = por %p177, %p178
    %s180 = ssub.s32 %s20, %s27
    %p181 = scmp.eq.s32.totalorder %s180, 0
    %s183 = sadd.s32 %s182, 1
    %s184 = scalar_select %p181, %s182, %s183
    %p187 = pneg %p181
    %p188 = scmp.eq.s32.totalorder %s20, 1
    %p189 = por %p187, %p188
    %p190 = scmp.ne.s32.totalorder %s182, %s185
    %p191 = scmp.eq.s32.totalorder %s20, 0
    %p192 = por %p190, %p191
    %p193 = scmp.ne.s32.totalorder %s182, %s185
    %p194 = scmp.eq.s32.totalorder %s25, 1
    %p195 = por %p193, %p194
    %p196 = scmp.ne.s32.totalorder %s185, %s186
    %p197 = scmp.eq.s32.totalorder %s25, 0
    %p198 = por %p196, %p197
    %p199 = scmp.ne.s32.totalorder %s185, %s186
    %p200 = scmp.eq.s32.totalorder %s26, 1
    %p201 = por %p199, %p200
    %p203 = scmp.ne.s32.totalorder %s186, %s202
    %p204 = scmp.eq.s32.totalorder %s26, 0
    %p205 = por %p203, %p204
    %p206 = scmp.le.s32.totalorder 1, %s20
    %p207 = scmp.lt.s32.totalorder %s20, 3
    %p208 = pnand %p206, %p207
    %p209 = pneg %p208
    // Predicated region
    $region9: #{_lambda_.6} parent=5 // pred_check
      _
    $region10: #{_lambda_.6} parent=5 // pred_check_branch
      %211 = sbr.rel (%p208) target = $region12
    $region11: #{_lambda_.6} parent=5 // pred_region
      %s212 = ssub.s32 %s20, 1
      // Predicated region
      $region13: #{_lambda_.6} parent=11 // pred_check
        %p213 = pneg %p67
      $region14: #{_lambda_.6} parent=11 // pred_check_branch
        %215 = sbr.rel (%p213) target = $region16
      $region15: #{_lambda_.6} parent=11 // pred_region
        _
      $region16: #{_lambda_.6} parent=11 // pred_fallthru
        _
      // Predicated region
      $region17: #{_lambda_.6} parent=11 // pred_check
        %p216 = pneg %p88
      $region18: #{_lambda_.6} parent=11 // pred_check_branch
        %218 = sbr.rel (%p216) target = $region20
      $region19: #{_lambda_.6} parent=11 // pred_region
        _
      $region20: #{_lambda_.6} parent=11 // pred_fallthru
        _
      // Predicated region
      $region21: #{_lambda_.6} parent=11 // pred_check
        %p219 = pneg %p109
      $region22: #{_lambda_.6} parent=11 // pred_check_branch
        %221 = sbr.rel (%p219) target = $region24
      $region23: #{_lambda_.6} parent=11 // pred_region
        _
      $region24: #{_lambda_.6} parent=11 // pred_fallthru
        _
      // Predicated region
      $region25: #{_lambda_.6} parent=11 // pred_check
        %p222 = pneg %p130
      $region26: #{_lambda_.6} parent=11 // pred_check_branch
        %224 = sbr.rel (%p222) target = $region28
      $region27: #{_lambda_.6} parent=11 // pred_region
        _
      $region28: #{_lambda_.6} parent=11 // pred_fallthru
        _
      // Predicated region
      $region29: #{_lambda_.6} parent=11 // pred_check
        %p225 = pneg %p151
      $region30: #{_lambda_.6} parent=11 // pred_check_branch
        %227 = sbr.rel (%p225) target = $region32
      $region31: #{_lambda_.6} parent=11 // pred_region
        _
      $region32: #{_lambda_.6} parent=11 // pred_fallthru
        _
      // Predicated region
      $region33: #{_lambda_.6} parent=11 // pred_check
        %p228 = pneg %p172
      $region34: #{_lambda_.6} parent=11 // pred_check_branch
        %230 = sbr.rel (%p228) target = $region36
      $region35: #{_lambda_.6} parent=11 // pred_region
        _
      $region36: #{_lambda_.6} parent=11 // pred_fallthru
        _
    $region12: #{_lambda_.6} parent=5 // pred_fallthru
      _
    %p231 = scmp.lt.s32.totalorder %s20, 2
    // Predicated region
    $region37: #{_lambda_.6} parent=5 // pred_check
      %p232 = pneg %p231
    $region38: #{_lambda_.6} parent=5 // pred_check_branch
      %234 = sbr.rel (%p232) target = $region40
    $region39: #{_lambda_.6} parent=5 // pred_region
      // Predicated region
      $region41: #{_lambda_.6} parent=39 // pred_check
        %p235 = pneg %p40
      $region42: #{_lambda_.6} parent=39 // pred_check_branch
        %237 = sbr.rel (%p235) target = $region44
      $region43: #{_lambda_.6} parent=39 // pred_region
        %p238 = scmp.lt.s32.totalorder %s20, 1
        %s239 = scalar_select %p238, %s20, 1
        %s240 = smul.addr %s239, 8
        %s241 = scalar_lea.vmem %s1, %s240
      $region44: #{_lambda_.6} parent=39 // pred_fallthru
        _
    $region40: #{_lambda_.6} parent=5 // pred_fallthru
      _
    %p242 = scmp.le.s32.totalorder 1, %s20
    %p243 = scmp.lt.s32.totalorder %s20, 3
    %p244 = pnand %p242, %p243
    %p245 = pneg %p244
    // Predicated region
    $region45: #{_lambda_.6} parent=5 // pred_check
      _
    $region46: #{_lambda_.6} parent=5 // pred_check_branch
      %247 = sbr.rel (%p244) target = $region48
    $region47: #{_lambda_.6} parent=5 // pred_region
      %s248 = ssub.s32 %s20, 1
      %p249 = scmp.lt.s32.totalorder %s25, 1
      %s250 = scalar_select %p249, %s25, 1
      %s251 = smul.addr %s250, 8
      %s252 = scalar_lea.vmem %s1, %s251
      %p253 = pneg %p46
      %p254 = pneg %p43
      %p255 = pneg %p67
      %p256 = pneg %p64
      %p257 = pneg %p88
      %p258 = pneg %p85
      %p259 = pneg %p109
      %p260 = pneg %p106
      %p261 = pneg %p130
      %p262 = pneg %p127
      %p263 = pneg %p151
      %p264 = pneg %p148
      %p265 = pneg %p172
      %p266 = pneg %p169
      %p267 = pneg %p198
      %p268 = pneg %p195
      %p269 = scmp.lt.s32.totalorder %s25, 1
      %s270 = scalar_select %p269, %s25, 1
      %s271 = smul.addr %s270, 8
      %s272 = scalar_lea.vmem %s8, %s271
      %p273 = scmp.lt.s32.totalorder %s25, 1
      %s274 = scalar_select %p273, %s25, 1
      %s275 = smul.addr %s274, 8
      %s276 = scalar_lea.vmem %s1, %s275
      %p277 = scmp.lt.s32.totalorder %s25, 1
      %s278 = scalar_select %p277, %s25, 1
      %s279 = smul.addr %s278, 8
      %s280 = scalar_lea.vmem %s8, %s279
      %s282 = sld [smem:[#allocation3 + %s25]]
      %v283 = vlaneseq
      %v284 = vshrl.u32 %v283, 7
      %v285 = vstv %s282
      %vm286 = vcmp.lt.s32.totalorder %v284, %v285
      %v287 = vld [vmem:[%s276] sm:$0xff]
      %v288 = vsel %vm286, 1, 0
      %vm289 = vcmp.eq.s32.totalorder %v288, 1
      %v290 = vsel %vm289, %v287, 0.0
      %v291 = vpack.c.bf16 %v290, %v290
      %v292 = vld [vmem:[%s2] sm:$0xf]
      %v293 = vld [vmem:[%s2 + $0x4] sm:$0xf]
      %v294 = vld [vmem:[%s2 + $0x8] sm:$0xf]
      %v295 = vld [vmem:[%s2 + $0xc] sm:$0xf]
      %v296 = vld [vmem:[%s3] sm:$0x1]
      %v298 = vlaneseq
      %v299 = vshrl.u32 %v298, 7
      %v300 = vsub.s32 0, %v299
      %v301 = vrot.slane %v296, %v300
      %v307 = vunpack.c.l.b16 %v292
      %v308 = vunpack.c.l.b16 %v293
      %v309 = vunpack.c.l.b16 %v294
      %v310 = vunpack.c.l.b16 %v295
      %v311 = vpack.c.b16 %v308, %v307
      %v312 = vpack.c.b16 %v310, %v309
      %vm315 = vcmask 261120
      %v317 = vsel %vm315, %v291, 0
      %319 = vmatprep.subr.bf16.mxu0 0
      %320 = vmatpush1.bf16.msra.mxu0 %v311
      %321 = vmatprep.subr.bf16.mxu0 0
      %322 = vmatpush1.bf16.msra.mxu0 %v312
      %323 = vmatprep.subr.bf16.mxu0 0
      %324 = vmatpush1.bf16.msra.mxu0 0
      %325 = vmatprep.subr.bf16.mxu0 0
      %326 = vmatpush1.bf16.msra.mxu0 0
      %327 = vmatprep.subr.bf16.mxu0 0
      %328 = vmatpush1.bf16.msra.mxu0 0
      %329 = vmatprep.subr.bf16.mxu0 0
      %330 = vmatpush1.bf16.msra.mxu0 0
      %331 = vmatprep.subr.bf16.mxu0 0
      %332 = vmatpush1.bf16.msra.mxu0 0
      %333 = vmatprep.subr.bf16.mxu0 0
      %334 = vmatpush1.bf16.msra.mxu0 0
      %335 = vmatprep.subr.bf16.mxu0 0
      %336 = vmatpush1.bf16.msra.mxu0 0
      %337 = vmatprep.subr.bf16.mxu0 0
      %338 = vmatpush1.bf16.msra.mxu0 0
      %339 = vmatprep.subr.bf16.mxu0 0
      %340 = vmatpush1.bf16.msra.mxu0 0
      %341 = vmatprep.subr.bf16.mxu0 0
      %342 = vmatpush1.bf16.msra.mxu0 0
      %343 = vmatprep.subr.bf16.mxu0 0
      %344 = vmatpush1.bf16.msra.mxu0 0
      %345 = vmatprep.subr.bf16.mxu0 0
      %346 = vmatpush1.bf16.msra.mxu0 0
      %347 = vmatprep.subr.bf16.mxu0 0
      %348 = vmatpush1.bf16.msra.mxu0 0
      %349 = vmatprep.subr.bf16.mxu0 0
      %350 = vmatpush1.bf16.msra.mxu0 0
      %351 = vmatprep.mubr.bf16.mxu0 0
      %352 = vmatmul.mubr.bf16.gmra.mrb[0].mxu0 %v317
      %v353 = vpop.f32.mrb[0].mxu0
      %v354 = vadd.f32 %v301, %v353
      %v355 = vpop.f32.mrb[0].mxu0
      %v356 = vpop.f32.mrb[0].mxu0
      %v357 = vpop.f32.mrb[0].mxu0
      %358 = vdwg.mxu0
      %vm359 = vcmp.ge.s32.totalorder %v284, %v285
      %v360 = vlaneseq
      %v361 = vand.u32 %v360, 127
      %vm362 = vcmp.ge.s32.totalorder %v361, %v285
      %vm363 = vmor %vm359, %vm362
      %v364 = vmul.f32 %v354, 0.25
      %v365 = vpack.c.bf16 %v364, %v364
      %v366 = vpack.c.bf16 %v354, %v354
      %368 = vrot.lane.b32.xlu0 %v366, 96
      %v369 = vpop.permute.xlu0 %368
      %vm370 = vcmask 130048
      %v372 = vsel %vm370, %v365, 0
      %v375 = vsel %vm370, %v369, 0
      %377 = vmatprep.subr.bf16.mxu0 0
      %378 = vmatpush1.bf16.xpose.msra.mxu0 %v375
      %379 = vmatprep.subr.bf16.mxu0 0
      %380 = vmatpush1.bf16.xpose.msra.mxu0 0
      %381 = vmatprep.subr.bf16.mxu0 0
      %382 = vmatpush1.bf16.xpose.msra.mxu0 0
      %383 = vmatprep.subr.bf16.mxu0 0
      %384 = vmatpush1.bf16.xpose.msra.mxu0 0
      %385 = vmatprep.subr.bf16.mxu0 0
      %386 = vmatpush1.bf16.xpose.msra.mxu0 0
      %387 = vmatprep.subr.bf16.mxu0 0
      %388 = vmatpush1.bf16.xpose.msra.mxu0 0
      %389 = vmatprep.subr.bf16.mxu0 0
      %390 = vmatpush1.bf16.xpose.msra.mxu0 0
      %391 = vmatprep.subr.bf16.mxu0 0
      %392 = vmatpush1.bf16.xpose.msra.mxu0 0
      %393 = vmatprep.subr.bf16.mxu0 0
      %394 = vmatpush1.bf16.xpose.msra.mxu0 0
      %395 = vmatprep.subr.bf16.mxu0 0
      %396 = vmatpush1.bf16.xpose.msra.mxu0 0
      %397 = vmatprep.subr.bf16.mxu0 0
      %398 = vmatpush1.bf16.xpose.msra.mxu0 0
      %399 = vmatprep.subr.bf16.mxu0 0
      %400 = vmatpush1.bf16.xpose.msra.mxu0 0
      %401 = vmatprep.subr.bf16.mxu0 0
      %402 = vmatpush1.bf16.xpose.msra.mxu0 0
      %403 = vmatprep.subr.bf16.mxu0 0
      %404 = vmatpush1.bf16.xpose.msra.mxu0 0
      %405 = vmatprep.subr.bf16.mxu0 0
      %406 = vmatpush1.bf16.xpose.msra.mxu0 0
      %407 = vmatprep.subr.bf16.mxu0 0
      %408 = vmatpush1.bf16.xpose.msra.mxu0 0
      %409 = vmatprep.mubr.bf16.mxu0 0
      %410 = vmatmul.mubr.bf16.gmra.mrb[0].mxu0 %v372
      %v411 = vpop.f32.mrb[0].mxu0
      %v412 = vadd.f32 0.0, %v411
      %v413 = vpop.f32.mrb[0].mxu0
      %v414 = vpop.f32.mrb[0].mxu0
      %v415 = vpop.f32.mrb[0].mxu0
      %416 = vdwg.mxu0
      %v417 = vsel %vm363, -10000.0, %v412
      %vm418 = vcmask 64512
      %v419 = vsel %vm418, %v417, -inf
      %420 = vmax.xlane.f32.xlu0 %v419
      %v421 = vpop.xlane.xlu0 %420
      %v422 = vsub.f32 %v417, %v421
      %v423 = vmul.f32 %v422, 1.442695
      %v424 = vpow.pop %v423
      %v425 = vsel %vm418, %v424, 0.0
      %426 = vadd.xlane.f32.xlu0 %v425
      %v427 = vpop.xlane.xlu0 %426
      %v428 = vrcp.pop %v427
      %v429 = vmul.f32 %v424, %v428
      %v430 = vpack.c.bf16 %v429, %v429
      %431 = vrot.lane.b32.xlu0 %v366, 64
      %v432 = vpop.permute.xlu0 %431
      %v434 = vsel %vm418, %v430, 0
      %vm436 = vcmask 1043456
      %v438 = vsel %vm436, %v432, 0
      %440 = vmatprep.subr.bf16.mxu0 0
      %441 = vmatpush1.bf16.msra.mxu0 %v438
      %442 = vmatprep.subr.bf16.mxu0 0
      %443 = vmatpush1.bf16.msra.mxu0 0
      %444 = vmatprep.subr.bf16.mxu0 0
      %445 = vmatpush1.bf16.msra.mxu0 0
      %446 = vmatprep.subr.bf16.mxu0 0
      %447 = vmatpush1.bf16.msra.mxu0 0
      %448 = vmatprep.subr.bf16.mxu0 0
      %449 = vmatpush1.bf16.msra.mxu0 0
      %450 = vmatprep.subr.bf16.mxu0 0
      %451 = vmatpush1.bf16.msra.mxu0 0
      %452 = vmatprep.subr.bf16.mxu0 0
      %453 = vmatpush1.bf16.msra.mxu0 0
      %454 = vmatprep.subr.bf16.mxu0 0
      %455 = vmatpush1.bf16.msra.mxu0 0
      %456 = vmatprep.subr.bf16.mxu0 0
      %457 = vmatpush1.bf16.msra.mxu0 0
      %458 = vmatprep.subr.bf16.mxu0 0
      %459 = vmatpush1.bf16.msra.mxu0 0
      %460 = vmatprep.subr.bf16.mxu0 0
      %461 = vmatpush1.bf16.msra.mxu0 0
      %462 = vmatprep.subr.bf16.mxu0 0
      %463 = vmatpush1.bf16.msra.mxu0 0
      %464 = vmatprep.subr.bf16.mxu0 0
      %465 = vmatpush1.bf16.msra.mxu0 0
      %466 = vmatprep.subr.bf16.mxu0 0
      %467 = vmatpush1.bf16.msra.mxu0 0
      %468 = vmatprep.subr.bf16.mxu0 0
      %469 = vmatpush1.bf16.msra.mxu0 0
      %470 = vmatprep.subr.bf16.mxu0 0
      %471 = vmatpush1.bf16.msra.mxu0 0
      %472 = vmatprep.mubr.bf16.mxu0 0
      %473 = vmatmul.mubr.bf16.gmra.mrb[0].mxu0 %v434
      %v474 = vpop.f32.mrb[0].mxu0
      %v475 = vadd.f32 0.0, %v474
      %v476 = vpop.f32.mrb[0].mxu0
      %v477 = vpop.f32.mrb[0].mxu0
      %v478 = vpop.f32.mrb[0].mxu0
      %479 = vdwg.mxu0
      %481 = vrot.lane.b32.xlu0 %v365, 112
      %v482 = vpop.permute.xlu0 %481
      %483 = vrot.lane.b32.xlu0 %v366, 80
      %v484 = vpop.permute.xlu0 %483
      %v486 = vsel %vm370, %v482, 0
      %v489 = vsel %vm370, %v484, 0
      %491 = vmatprep.subr.bf16.mxu0 0
      %492 = vmatpush1.bf16.xpose.msra.mxu0 %v489
      %493 = vmatprep.subr.bf16.mxu0 0
      %494 = vmatpush1.bf16.xpose.msra.mxu0 0
      %495 = vmatprep.subr.bf16.mxu0 0
      %496 = vmatpush1.bf16.xpose.msra.mxu0 0
      %497 = vmatprep.subr.bf16.mxu0 0
      %498 = vmatpush1.bf16.xpose.msra.mxu0 0
      %499 = vmatprep.subr.bf16.mxu0 0
      %500 = vmatpush1.bf16.xpose.msra.mxu0 0
      %501 = vmatprep.subr.bf16.mxu0 0
      %502 = vmatpush1.bf16.xpose.msra.mxu0 0
      %503 = vmatprep.subr.bf16.mxu0 0
      %504 = vmatpush1.bf16.xpose.msra.mxu0 0
      %505 = vmatprep.subr.bf16.mxu0 0
      %506 = vmatpush1.bf16.xpose.msra.mxu0 0
      %507 = vmatprep.subr.bf16.mxu0 0
      %508 = vmatpush1.bf16.xpose.msra.mxu0 0
      %509 = vmatprep.subr.bf16.mxu0 0
      %510 = vmatpush1.bf16.xpose.msra.mxu0 0
      %511 = vmatprep.subr.bf16.mxu0 0
      %512 = vmatpush1.bf16.xpose.msra.mxu0 0
      %513 = vmatprep.subr.bf16.mxu0 0
      %514 = vmatpush1.bf16.xpose.msra.mxu0 0
      %515 = vmatprep.subr.bf16.mxu0 0
      %516 = vmatpush1.bf16.xpose.msra.mxu0 0
      %517 = vmatprep.subr.bf16.mxu0 0
      %518 = vmatpush1.bf16.xpose.msra.mxu0 0
      %519 = vmatprep.subr.bf16.mxu0 0
      %520 = vmatpush1.bf16.xpose.msra.mxu0 0
      %521 = vmatprep.subr.bf16.mxu0 0
      %522 = vmatpush1.bf16.xpose.msra.mxu0 0
      %523 = vmatprep.mubr.bf16.mxu0 0
      %524 = vmatmul.mubr.bf16.gmra.mrb[0].mxu0 %v486
      %v525 = vpop.f32.mrb[0].mxu0
      %v526 = vadd.f32 0.0, %v525
      %v527 = vpop.f32.mrb[0].mxu0
      %v528 = vpop.f32.mrb[0].mxu0
      %v529 = vpop.f32.mrb[0].mxu0
      %530 = vdwg.mxu0
      %v531 = vsel %vm363, -10000.0, %v526
      %v532 = vsel %vm418, %v531, -inf
      %533 = vmax.xlane.f32.xlu0 %v532
      %v534 = vpop.xlane.xlu0 %533
      %v535 = vsub.f32 %v531, %v534
      %v536 = vmul.f32 %v535, 1.442695
      %v537 = vpow.pop %v536
      %v538 = vsel %vm418, %v537, 0.0
      %539 = vadd.xlane.f32.xlu0 %v538
      %v540 = vpop.xlane.xlu0 %539
      %v541 = vrcp.pop %v540
      %v542 = vmul.f32 %v537, %v541
      %v543 = vpack.c.bf16 %v542, %v542
      %544 = vrot.lane.b32.xlu0 %v366, 48
      %v545 = vpop.permute.xlu0 %544
      %v547 = vsel %vm418, %v543, 0
      %v550 = vsel %vm436, %v545, 0
      %552 = vmatprep.subr.bf16.mxu0 0
      %553 = vmatpush1.bf16.msra.mxu0 %v550
      %554 = vmatprep.subr.bf16.mxu0 0
      %555 = vmatpush1.bf16.msra.mxu0 0
      %556 = vmatprep.subr.bf16.mxu0 0
      %557 = vmatpush1.bf16.msra.mxu0 0
      %558 = vmatprep.subr.bf16.mxu0 0
      %559 = vmatpush1.bf16.msra.mxu0 0
      %560 = vmatprep.subr.bf16.mxu0 0
      %561 = vmatpush1.bf16.msra.mxu0 0
      %562 = vmatprep.subr.bf16.mxu0 0
      %563 = vmatpush1.bf16.msra.mxu0 0
      %564 = vmatprep.subr.bf16.mxu0 0
      %565 = vmatpush1.bf16.msra.mxu0 0
      %566 = vmatprep.subr.bf16.mxu0 0
      %567 = vmatpush1.bf16.msra.mxu0 0
      %568 = vmatprep.subr.bf16.mxu0 0
      %569 = vmatpush1.bf16.msra.mxu0 0
      %570 = vmatprep.subr.bf16.mxu0 0
      %571 = vmatpush1.bf16.msra.mxu0 0
      %572 = vmatprep.subr.bf16.mxu0 0
      %573 = vmatpush1.bf16.msra.mxu0 0
      %574 = vmatprep.subr.bf16.mxu0 0
      %575 = vmatpush1.bf16.msra.mxu0 0
      %576 = vmatprep.subr.bf16.mxu0 0
      %577 = vmatpush1.bf16.msra.mxu0 0
      %578 = vmatprep.subr.bf16.mxu0 0
      %579 = vmatpush1.bf16.msra.mxu0 0
      %580 = vmatprep.subr.bf16.mxu0 0
      %581 = vmatpush1.bf16.msra.mxu0 0
      %582 = vmatprep.subr.bf16.mxu0 0
      %583 = vmatpush1.bf16.msra.mxu0 0
      %584 = vmatprep.mubr.bf16.mxu0 0
      %585 = vmatmul.mubr.bf16.gmra.mrb[0].mxu0 %v547
      %v586 = vpop.f32.mrb[0].mxu0
      %v587 = vadd.f32 0.0, %v586
      %v588 = vpop.f32.mrb[0].mxu0
      %v589 = vpop.f32.mrb[0].mxu0
      %v590 = vpop.f32.mrb[0].mxu0
      %591 = vdwg.mxu0
      %593 = vrot.lane.b32.xlu0 %v587, 16
      %v594 = vpop.permute.xlu0 %593
      %v596 = vsel %vm370, %v475, %v594
      %v597 = vpack.c.bf16 %v596, %v596
      %v598 = vld [vmem:[%s4] sm:$0xf]
      %v599 = vld [vmem:[%s4 + $0x4] sm:$0xf]
      %v600 = vld [vmem:[%s4 + $0x8] sm:$0xf]
      %v601 = vld [vmem:[%s4 + $0xc] sm:$0xf]
      %v602 = vld [vmem:[%s5] sm:$0x1]
      %v604 = vlaneseq
      %v605 = vshrl.u32 %v604, 7
      %v606 = vsub.s32 0, %v605
      %v607 = vrot.slane %v602, %v606
      %v613 = vunpack.c.l.b16 %v598
      %v614 = vunpack.c.l.b16 %v599
      %v615 = vunpack.c.l.b16 %v600
      %v616 = vunpack.c.l.b16 %v601
      %v617 = vpack.c.b16 %v614, %v613
      %v618 = vpack.c.b16 %v616, %v615
      %v622 = vsel %vm315, %v597, 0
      %624 = vmatprep.subr.bf16.mxu0 0
      %625 = vmatpush1.bf16.msra.mxu0 %v617
      %626 = vmatprep.subr.bf16.mxu0 0
      %627 = vmatpush1.bf16.msra.mxu0 %v618
      %628 = vmatprep.subr.bf16.mxu0 0
      %629 = vmatpush1.bf16.msra.mxu0 0
      %630 = vmatprep.subr.bf16.mxu0 0
      %631 = vmatpush1.bf16.msra.mxu0 0
      %632 = vmatprep.subr.bf16.mxu0 0
      %633 = vmatpush1.bf16.msra.mxu0 0
      %634 = vmatprep.subr.bf16.mxu0 0
      %635 = vmatpush1.bf16.msra.mxu0 0
      %636 = vmatprep.subr.bf16.mxu0 0
      %637 = vmatpush1.bf16.msra.mxu0 0
      %638 = vmatprep.subr.bf16.mxu0 0
      %639 = vmatpush1.bf16.msra.mxu0 0
      %640 = vmatprep.subr.bf16.mxu0 0
      %641 = vmatpush1.bf16.msra.mxu0 0
      %642 = vmatprep.subr.bf16.mxu0 0
      %643 = vmatpush1.bf16.msra.mxu0 0
      %644 = vmatprep.subr.bf16.mxu0 0
      %645 = vmatpush1.bf16.msra.mxu0 0
      %646 = vmatprep.subr.bf16.mxu0 0
      %647 = vmatpush1.bf16.msra.mxu0 0
      %648 = vmatprep.subr.bf16.mxu0 0
      %649 = vmatpush1.bf16.msra.mxu0 0
      %650 = vmatprep.subr.bf16.mxu0 0
      %651 = vmatpush1.bf16.msra.mxu0 0
      %652 = vmatprep.subr.bf16.mxu0 0
      %653 = vmatpush1.bf16.msra.mxu0 0
      %654 = vmatprep.subr.bf16.mxu0 0
      %655 = vmatpush1.bf16.msra.mxu0 0
      %656 = vmatprep.mubr.bf16.mxu0 0
      %657 = vmatmul.mubr.bf16.gmra.mrb[0].mxu0 %v622
      %v658 = vpop.f32.mrb[0].mxu0
      %v659 = vadd.f32 %v607, %v658
      %v660 = vpop.f32.mrb[0].mxu0
      %v661 = vpop.f32.mrb[0].mxu0
      %v662 = vpop.f32.mrb[0].mxu0
      %663 = vdwg.mxu0
      %v664 = vadd.f32 %v290, %v659
      %v665 = vld [vmem:[%s6] sm:$0x1]
      %v666 = vld [vmem:[%s7] sm:$0x1]
      %v667 = vsel %vm315, %v664, 0.0
      %668 = vadd.xlane.f32.xlu0 %v667
      %v669 = vpop.xlane.xlu0 %668
      %v670 = vrcp.pop 32.0
      %v671 = vmul.f32 %v669, %v670
      %v672 = vsub.f32 %v664, %v671
      %v673 = vmul.f32 %v672, %v672
      %v674 = vsel %vm315, %v673, 0.0
      %675 = vadd.xlane.f32.xlu0 %v674
      %v676 = vpop.xlane.xlu0 %675
      %v677 = vmul.f32 %v676, %v670
      %v678 = vadd.f32 %v677, 0.0001
      %v679 = vrsqrt.pop %v678
      %v680 = vmul.f32 %v672, %v679
      %v682 = vlaneseq
      %v683 = vshrl.u32 %v682, 7
      %v684 = vsub.s32 0, %v683
      %v685 = vrot.slane %v665, %v684
      %v687 = vmul.f32 %v680, %v685
      %v689 = vlaneseq
      %v690 = vshrl.u32 %v689, 7
      %v691 = vsub.s32 0, %v690
      %v692 = vrot.slane %v666, %v691
      %v694 = vadd.f32 %v687, %v692
      %695 = vst.msk [vmem:[%s280] sm:$0xff] %vm315, %v694
      %p696 = scmp.lt.s32.totalorder %s25, 1
      %s697 = scalar_select %p696, %s25, 1
      %s698 = smul.addr %s697, 8
      %s699 = scalar_lea.vmem %s8, %s698
      // Predicated region
      $region49: #{_lambda_.6} parent=47 // pred_check
        %p700 = pneg %p195
      $region50: #{_lambda_.6} parent=47 // pred_check_branch
        %702 = sbr.rel (%p700) target = $region52
      $region51: #{_lambda_.6} parent=47 // pred_region
        _
      $region52: #{_lambda_.6} parent=47 // pred_fallthru
        _
    $region48: #{_lambda_.6} parent=5 // pred_fallthru
      _
    %p703 = scmp.le.s32.totalorder 2, %s20
    // Predicated region
    $region53: #{_lambda_.6} parent=5 // pred_check
      %p704 = pneg %p703
    $region54: #{_lambda_.6} parent=5 // pred_check_branch
      %706 = sbr.rel (%p704) target = $region56
    $region55: #{_lambda_.6} parent=5 // pred_region
      %s707 = ssub.s32 %s20, 2
      // Predicated region
      $region57: #{_lambda_.6} parent=55 // pred_check
        %p708 = pneg %p201
      $region58: #{_lambda_.6} parent=55 // pred_check_branch
        %710 = sbr.rel (%p708) target = $region60
      $region59: #{_lambda_.6} parent=55 // pred_region
        %p711 = scmp.lt.s32.totalorder %s26, 1
        %s712 = scalar_select %p711, %s26, 1
        %s713 = smul.addr %s712, 8
        %s714 = scalar_lea.vmem %s8, %s713
      $region60: #{_lambda_.6} parent=55 // pred_fallthru
        _
    $region56: #{_lambda_.6} parent=5 // pred_fallthru
      _
  $region6: #{_lambda_.6} parent=0 // loop_footer
    %s24 = sadd.s32 1, %s20
  $region7: #{_lambda_.6} parent=0 // loop_footer_branch
    %19 = sbr.rel target = $region3
  $region8: #{_lambda_.6} parent=0 // loop_exit
    _

// kernel: _lambda_.11
$region0: #{_lambda_.11}
  #allocation0 [shape = 'u32[]', space=smem, size = 0x4, offset = 0x4, fixed_abs, tag = 'smem constant byte address 0x4 - core index']
  #allocation1 [shape = 'u32[144,128]{1,0:T(1,128)}', space=vmem, size = 0x12000, scoped, tag = 'internal scratch']
  #allocation2 [shape = 's32[1]{0}', space=sflag, size = 0x4, scoped, tag = 'scoped memory for _lambda_.11']
  #allocation3 [shape = 'u8[512]{0}', space=smem, size = 0x200, scoped, tag = 'prefetched SMEM operand 0']
  %s0 = inlined_call_operand.vmem [shape: s32[2], index: 0, kind: input, shape index: {}]
  %s1 = inlined_call_operand.vmem [shape: f32[2,8,32], index: 1, kind: input, shape index: {}]
  %s2 = inlined_call_operand.vmem [shape: bf16[3,96,32], index: 2, kind: input, shape index: {}]
  %s3 = inlined_call_operand.vmem [shape: f32[3,1,32], index: 3, kind: input, shape index: {}]
  %s4 = inlined_call_operand.vmem [shape: f32[3,1,32], index: 4, kind: input, shape index: {}]
  %s5 = inlined_call_operand.vmem [shape: f32[3,1,32], index: 5, kind: input, shape index: {}]
  %s6 = inlined_call_operand.vmem [shape: bf16[3,96,32], index: 6, kind: input, shape index: {}]
  %s7 = inlined_call_operand.vmem [shape: f32[3,1,32], index: 7, kind: input, shape index: {}]
  %s8 = inlined_call_operand.vmem [shape: f32[3,1,32], index: 8, kind: input, shape index: {}]
  %s9 = inlined_call_operand.vmem [shape: f32[3,1,32], index: 9, kind: input, shape index: {}]
  %s10 = inlined_call_operand.vmem [shape: bf16[3,1,32], index: 10, kind: input, shape index: {}]
  %s11 = inlined_call_operand.vmem [shape: f32[3,1,1], index: 11, kind: input, shape index: {}]
  %s12 = inlined_call_operand.vmem [shape: f32[3,2,1,8], index: 12, kind: output, shape index: {}]
  %s13 = sld [smem:[#allocation0]]
  $region77: #{_lambda_.11} parent=0
    _
  %s15 = ssub.s32 1, %s13
  %s16 = scalar_select 0, %s15, %s13
  %s17 = sshll.u32 %s0, 4
  %s18 = int_to_ptr.vmem [resolvable:$true] %s17
  %20 = dma.vmem_to_smem %s18, 16, [#allocation3], [#allocation2]
  %21 = dma.done [#allocation2], 16
  %22 = sfence
  loop: start=0, step=1, limit=8
  $region2: #{_lambda_.11} parent=0 // loop_pre_header
    _
  $region3: #{_lambda_.11} parent=0 // loop_header
    %s24 = sphi 0, %s28
    %p25 = scmp.ge.s32.totalorder %s24, 8
    %s31 = sphi 0, %s43
    %s32 = sphi 0, %s39
    %s33 = sphi 0, %s31
    %s34 = sphi 0, %s32
    %s35 = sphi 0, %s33
    %s36 = sphi 0, %s34
    %s46 = sphi 0, %s48
    %s49 = sphi 0, %s46
    %s50 = sphi 0, %s49
    %s66 = sphi 0, %s50
    %s72 = sphi 0, %s74
    %s75 = sphi 0, %s72
    %s76 = sphi 0, %s75
    %s92 = sphi 0, %s76
    %s98 = sphi 0, %s100
    %s101 = sphi 0, %s98
    %s102 = sphi 0, %s101
    %s118 = sphi 0, %s102
    %s124 = sphi 0, %s126
    %s127 = sphi 0, %s124
    %s128 = sphi 0, %s127
    %s144 = sphi 0, %s128
    %s150 = sphi 0, %s152
    %s153 = sphi 0, %s150
    %s154 = sphi 0, %s153
    %s170 = sphi 0, %s154
    %s176 = sphi 0, %s178
    %s179 = sphi 0, %s176
    %s180 = sphi 0, %s179
    %s196 = sphi 0, %s180
    %s202 = sphi 0, %s204
    %s205 = sphi 0, %s202
    %s206 = sphi 0, %s205
    %s222 = sphi 0, %s206
    %s228 = sphi 0, %s230
    %s231 = sphi 0, %s228
    %s232 = sphi 0, %s231
    %s248 = sphi 0, %s232
    %s254 = sphi 0, %s256
    %s257 = sphi 0, %s254
    %s258 = sphi 0, %s257
    %s274 = sphi 0, %s258
    %s280 = sphi 0, %s282
    %s283 = sphi 0, %s280
    %s284 = sphi 0, %s283
    %s300 = sphi 0, %s284
    %s306 = sphi 0, %s308
    %s309 = sphi 0, %s306
    %s310 = sphi 0, %s309
    %s326 = sphi 0, %s310
    %s334 = sphi 0, %s336
    %s337 = sphi 0, %s334
    %s338 = sphi 0, %s337
    %s354 = sphi 0, %s338
  $region4: #{_lambda_.11} parent=0 // loop_header_branch
    %27 = sbr.rel (%p25) target = $region8
  $region5: #{_lambda_.11} parent=0 // loop_body
    %s29 = ssub.s32 %s24, 1
    %s30 = ssub.s32 %s24, 2
    %s37 = sadd.s32 1, %s32
    %p38 = scmp.ge.s32.totalorder %s37, 3
    %s39 = scalar_select %p38, 0, %s37
    %s40 = sadd.s32 1, %s31
    %s41 = scalar_select %p38, %s40, %s31
    %p42 = scmp.ge.s32.totalorder %s41, 2
    %s43 = scalar_select %p42, 0, %s41
    %s44 = ssub.s32 %s31, %s43
    %p45 = scmp.eq.s32.totalorder %s44, 0
    %s47 = sadd.s32 %s46, 1
    %s48 = scalar_select %p45, %s46, %s47
    %p51 = pneg %p45
    %p52 = scmp.eq.s32.totalorder %s24, 5
    %p53 = por %p51, %p52
    %p54 = scmp.ne.s32.totalorder %s46, %s49
    %p55 = scmp.eq.s32.totalorder %s24, 0
    %p56 = por %p54, %p55
    %p57 = scmp.ne.s32.totalorder %s46, %s49
    %p58 = scmp.eq.s32.totalorder %s29, 5
    %p59 = por %p57, %p58
    %p60 = scmp.ne.s32.totalorder %s49, %s50
    %p61 = scmp.eq.s32.totalorder %s29, 0
    %p62 = por %p60, %p61
    %p63 = scmp.ne.s32.totalorder %s49, %s50
    %p64 = scmp.eq.s32.totalorder %s30, 5
    %p65 = por %p63, %p64
    %p67 = scmp.ne.s32.totalorder %s50, %s66
    %p68 = scmp.eq.s32.totalorder %s30, 0
    %p69 = por %p67, %p68
    %s70 = ssub.s32 %s32, %s39
    %p71 = scmp.eq.s32.totalorder %s70, 0
    %s73 = sadd.s32 %s72, 1
    %s74 = scalar_select %p71, %s72, %s73
    %p77 = pneg %p71
    %p78 = scmp.eq.s32.totalorder %s24, 5
    %p79 = por %p77, %p78
    %p80 = scmp.ne.s32.totalorder %s72, %s75
    %p81 = scmp.eq.s32.totalorder %s24, 0
    %p82 = por %p80, %p81
    %p83 = scmp.ne.s32.totalorder %s72, %s75
    %p84 = scmp.eq.s32.totalorder %s29, 5
    %p85 = por %p83, %p84
    %p86 = scmp.ne.s32.totalorder %s75, %s76
    %p87 = scmp.eq.s32.totalorder %s29, 0
    %p88 = por %p86, %p87
    %p89 = scmp.ne.s32.totalorder %s75, %s76
    %p90 = scmp.eq.s32.totalorder %s30, 5
    %p91 = por %p89, %p90
    %p93 = scmp.ne.s32.totalorder %s76, %s92
    %p94 = scmp.eq.s32.totalorder %s30, 0
    %p95 = por %p93, %p94
    %s96 = ssub.s32 %s32, %s39
    %p97 = scmp.eq.s32.totalorder %s96, 0
    %s99 = sadd.s32 %s98, 1
    %s100 = scalar_select %p97, %s98, %s99
    %p103 = pneg %p97
    %p104 = scmp.eq.s32.totalorder %s24, 5
    %p105 = por %p103, %p104
    %p106 = scmp.ne.s32.totalorder %s98, %s101
    %p107 = scmp.eq.s32.totalorder %s24, 0
    %p108 = por %p106, %p107
    %p109 = scmp.ne.s32.totalorder %s98, %s101
    %p110 = scmp.eq.s32.totalorder %s29, 5
    %p111 = por %p109, %p110
    %p112 = scmp.ne.s32.totalorder %s101, %s102
    %p113 = scmp.eq.s32.totalorder %s29, 0
    %p114 = por %p112, %p113
    %p115 = scmp.ne.s32.totalorder %s101, %s102
    %p116 = scmp.eq.s32.totalorder %s30, 5
    %p117 = por %p115, %p116
    %p119 = scmp.ne.s32.totalorder %s102, %s118
    %p120 = scmp.eq.s32.totalorder %s30, 0
    %p121 = por %p119, %p120
    %s122 = ssub.s32 %s32, %s39
    %p123 = scmp.eq.s32.totalorder %s122, 0
    %s125 = sadd.s32 %s124, 1
    %s126 = scalar_select %p123, %s124, %s125
    %p129 = pneg %p123
    %p130 = scmp.eq.s32.totalorder %s24, 5
    %p131 = por %p129, %p130
    %p132 = scmp.ne.s32.totalorder %s124, %s127
    %p133 = scmp.eq.s32.totalorder %s24, 0
    %p134 = por %p132, %p133
    %p135 = scmp.ne.s32.totalorder %s124, %s127
    %p136 = scmp.eq.s32.totalorder %s29, 5
    %p137 = por %p135, %p136
    %p138 = scmp.ne.s32.totalorder %s127, %s128
    %p139 = scmp.eq.s32.totalorder %s29, 0
    %p140 = por %p138, %p139
    %p141 = scmp.ne.s32.totalorder %s127, %s128
    %p142 = scmp.eq.s32.totalorder %s30, 5
    %p143 = por %p141, %p142
    %p145 = scmp.ne.s32.totalorder %s128, %s144
    %p146 = scmp.eq.s32.totalorder %s30, 0
    %p147 = por %p145, %p146
    %s148 = ssub.s32 %s32, %s39
    %p149 = scmp.eq.s32.totalorder %s148, 0
    %s151 = sadd.s32 %s150, 1
    %s152 = scalar_select %p149, %s150, %s151
    %p155 = pneg %p149
    %p156 = scmp.eq.s32.totalorder %s24, 5
    %p157 = por %p155, %p156
    %p158 = scmp.ne.s32.totalorder %s150, %s153
    %p159 = scmp.eq.s32.totalorder %s24, 0
    %p160 = por %p158, %p159
    %p161 = scmp.ne.s32.totalorder %s150, %s153
    %p162 = scmp.eq.s32.totalorder %s29, 5
    %p163 = por %p161, %p162
    %p164 = scmp.ne.s32.totalorder %s153, %s154
    %p165 = scmp.eq.s32.totalorder %s29, 0
    %p166 = por %p164, %p165
    %p167 = scmp.ne.s32.totalorder %s153, %s154
    %p168 = scmp.eq.s32.totalorder %s30, 5
    %p169 = por %p167, %p168
    %p171 = scmp.ne.s32.totalorder %s154, %s170
    %p172 = scmp.eq.s32.totalorder %s30, 0
    %p173 = por %p171, %p172
    %s174 = ssub.s32 %s32, %s39
    %p175 = scmp.eq.s32.totalorder %s174, 0
    %s177 = sadd.s32 %s176, 1
    %s178 = scalar_select %p175, %s176, %s177
    %p181 = pneg %p175
    %p182 = scmp.eq.s32.totalorder %s24, 5
    %p183 = por %p181, %p182
    %p184 = scmp.ne.s32.totalorder %s176, %s179
    %p185 = scmp.eq.s32.totalorder %s24, 0
    %p186 = por %p184, %p185
    %p187 = scmp.ne.s32.totalorder %s176, %s179
    %p188 = scmp.eq.s32.totalorder %s29, 5
    %p189 = por %p187, %p188
    %p190 = scmp.ne.s32.totalorder %s179, %s180
    %p191 = scmp.eq.s32.totalorder %s29, 0
    %p192 = por %p190, %p191
    %p193 = scmp.ne.s32.totalorder %s179, %s180
    %p194 = scmp.eq.s32.totalorder %s30, 5
    %p195 = por %p193, %p194
    %p197 = scmp.ne.s32.totalorder %s180, %s196
    %p198 = scmp.eq.s32.totalorder %s30, 0
    %p199 = por %p197, %p198
    %s200 = ssub.s32 %s32, %s39
    %p201 = scmp.eq.s32.totalorder %s200, 0
    %s203 = sadd.s32 %s202, 1
    %s204 = scalar_select %p201, %s202, %s203
    %p207 = pneg %p201
    %p208 = scmp.eq.s32.totalorder %s24, 5
    %p209 = por %p207, %p208
    %p210 = scmp.ne.s32.totalorder %s202, %s205
    %p211 = scmp.eq.s32.totalorder %s24, 0
    %p212 = por %p210, %p211
    %p213 = scmp.ne.s32.totalorder %s202, %s205
    %p214 = scmp.eq.s32.totalorder %s29, 5
    %p215 = por %p213, %p214
    %p216 = scmp.ne.s32.totalorder %s205, %s206
    %p217 = scmp.eq.s32.totalorder %s29, 0
    %p218 = por %p216, %p217
    %p219 = scmp.ne.s32.totalorder %s205, %s206
    %p220 = scmp.eq.s32.totalorder %s30, 5
    %p221 = por %p219, %p220
    %p223 = scmp.ne.s32.totalorder %s206, %s222
    %p224 = scmp.eq.s32.totalorder %s30, 0
    %p225 = por %p223, %p224
    %s226 = ssub.s32 %s32, %s39
    %p227 = scmp.eq.s32.totalorder %s226, 0
    %s229 = sadd.s32 %s228, 1
    %s230 = scalar_select %p227, %s228, %s229
    %p233 = pneg %p227
    %p234 = scmp.eq.s32.totalorder %s24, 5
    %p235 = por %p233, %p234
    %p236 = scmp.ne.s32.totalorder %s228, %s231
    %p237 = scmp.eq.s32.totalorder %s24, 0
    %p238 = por %p236, %p237
    %p239 = scmp.ne.s32.totalorder %s228, %s231
    %p240 = scmp.eq.s32.totalorder %s29, 5
    %p241 = por %p239, %p240
    %p242 = scmp.ne.s32.totalorder %s231, %s232
    %p243 = scmp.eq.s32.totalorder %s29, 0
    %p244 = por %p242, %p243
    %p245 = scmp.ne.s32.totalorder %s231, %s232
    %p246 = scmp.eq.s32.totalorder %s30, 5
    %p247 = por %p245, %p246
    %p249 = scmp.ne.s32.totalorder %s232, %s248
    %p250 = scmp.eq.s32.totalorder %s30, 0
    %p251 = por %p249, %p250
    %s252 = ssub.s32 %s32, %s39
    %p253 = scmp.eq.s32.totalorder %s252, 0
    %s255 = sadd.s32 %s254, 1
    %s256 = scalar_select %p253, %s254, %s255
    %p259 = pneg %p253
    %p260 = scmp.eq.s32.totalorder %s24, 5
    %p261 = por %p259, %p260
    %p262 = scmp.ne.s32.totalorder %s254, %s257
    %p263 = scmp.eq.s32.totalorder %s24, 0
    %p264 = por %p262, %p263
    %p265 = scmp.ne.s32.totalorder %s254, %s257
    %p266 = scmp.eq.s32.totalorder %s29, 5
    %p267 = por %p265, %p266
    %p268 = scmp.ne.s32.totalorder %s257, %s258
    %p269 = scmp.eq.s32.totalorder %s29, 0
    %p270 = por %p268, %p269
    %p271 = scmp.ne.s32.totalorder %s257, %s258
    %p272 = scmp.eq.s32.totalorder %s30, 5
    %p273 = por %p271, %p272
    %p275 = scmp.ne.s32.totalorder %s258, %s274
    %p276 = scmp.eq.s32.totalorder %s30, 0
    %p277 = por %p275, %p276
    %s278 = ssub.s32 %s32, %s39
    %p279 = scmp.eq.s32.totalorder %s278, 0
    %s281 = sadd.s32 %s280, 1
    %s282 = scalar_select %p279, %s280, %s281
    %p285 = pneg %p279
    %p286 = scmp.eq.s32.totalorder %s24, 5
    %p287 = por %p285, %p286
    %p288 = scmp.ne.s32.totalorder %s280, %s283
    %p289 = scmp.eq.s32.totalorder %s24, 0
    %p290 = por %p288, %p289
    %p291 = scmp.ne.s32.totalorder %s280, %s283
    %p292 = scmp.eq.s32.totalorder %s29, 5
    %p293 = por %p291, %p292
    %p294 = scmp.ne.s32.totalorder %s283, %s284
    %p295 = scmp.eq.s32.totalorder %s29, 0
    %p296 = por %p294, %p295
    %p297 = scmp.ne.s32.totalorder %s283, %s284
    %p298 = scmp.eq.s32.totalorder %s30, 5
    %p299 = por %p297, %p298
    %p301 = scmp.ne.s32.totalorder %s284, %s300
    %p302 = scmp.eq.s32.totalorder %s30, 0
    %p303 = por %p301, %p302
    %s304 = ssub.s32 %s32, %s39
    %p305 = scmp.eq.s32.totalorder %s304, 0
    %s307 = sadd.s32 %s306, 1
    %s308 = scalar_select %p305, %s306, %s307
    %p311 = pneg %p305
    %p312 = scmp.eq.s32.totalorder %s24, 5
    %p313 = por %p311, %p312
    %p314 = scmp.ne.s32.totalorder %s306, %s309
    %p315 = scmp.eq.s32.totalorder %s24, 0
    %p316 = por %p314, %p315
    %p317 = scmp.ne.s32.totalorder %s306, %s309
    %p318 = scmp.eq.s32.totalorder %s29, 5
    %p319 = por %p317, %p318
    %p320 = scmp.ne.s32.totalorder %s309, %s310
    %p321 = scmp.eq.s32.totalorder %s29, 0
    %p322 = por %p320, %p321
    %p323 = scmp.ne.s32.totalorder %s309, %s310
    %p324 = scmp.eq.s32.totalorder %s30, 5
    %p325 = por %p323, %p324
    %p327 = scmp.ne.s32.totalorder %s310, %s326
    %p328 = scmp.eq.s32.totalorder %s30, 0
    %p329 = por %p327, %p328
    %s330 = ssub.s32 %s32, %s39
    %s331 = ssub.s32 %s31, %s43
    %s332 = sor.u32 %s330, %s331
    %p333 = scmp.eq.s32.totalorder %s332, 0
    %s335 = sadd.s32 %s334, 1
    %s336 = scalar_select %p333, %s334, %s335
    %p339 = pneg %p333
    %p340 = scmp.eq.s32.totalorder %s24, 5
    %p341 = por %p339, %p340
    %p342 = scmp.ne.s32.totalorder %s334, %s337
    %p343 = scmp.eq.s32.totalorder %s24, 0
    %p344 = por %p342, %p343
    %p345 = scmp.ne.s32.totalorder %s334, %s337
    %p346 = scmp.eq.s32.totalorder %s29, 5
    %p347 = por %p345, %p346
    %p348 = scmp.ne.s32.totalorder %s337, %s338
    %p349 = scmp.eq.s32.totalorder %s29, 0
    %p350 = por %p348, %p349
    %p351 = scmp.ne.s32.totalorder %s337, %s338
    %p352 = scmp.eq.s32.totalorder %s30, 5
    %p353 = por %p351, %p352
    %p355 = scmp.ne.s32.totalorder %s338, %s354
    %p356 = scmp.eq.s32.totalorder %s30, 0
    %p357 = por %p355, %p356
    %p358 = scmp.le.s32.totalorder 1, %s24
    %p359 = scmp.lt.s32.totalorder %s24, 7
    %p360 = pnand %p358, %p359
    %p361 = pneg %p360
    // Predicated region
    $region9: #{_lambda_.11} parent=5 // pred_check
      _
    $region10: #{_lambda_.11} parent=5 // pred_check_branch
      %363 = sbr.rel (%p360) target = $region12
    $region11: #{_lambda_.11} parent=5 // pred_region
      %s364 = ssub.s32 %s24, 1
    $region12: #{_lambda_.11} parent=5 // pred_fallthru
      _
    %p365 = scmp.lt.s32.totalorder %s24, 6
    // Predicated region
    $region13: #{_lambda_.11} parent=5 // pred_check
      %p366 = pneg %p365
    $region14: #{_lambda_.11} parent=5 // pred_check_branch
      %368 = sbr.rel (%p366) target = $region16
    $region15: #{_lambda_.11} parent=5 // pred_region
      // Predicated region
      $region17: #{_lambda_.11} parent=15 // pred_check
        %p369 = pneg %p56
      $region18: #{_lambda_.11} parent=15 // pred_check_branch
        %371 = sbr.rel (%p369) target = $region20
      $region19: #{_lambda_.11} parent=15 // pred_region
        %p372 = scmp.lt.s32.totalorder %s31, 1
        %s373 = scalar_select %p372, %s31, 1
        %s374 = smul.addr %s373, 8
        %s375 = scalar_lea.vmem %s1, %s374
      $region20: #{_lambda_.11} parent=15 // pred_fallthru
        _
      // Predicated region
      $region21: #{_lambda_.11} parent=15 // pred_check
        %p376 = pneg %p82
      $region22: #{_lambda_.11} parent=15 // pred_check_branch
        %378 = sbr.rel (%p376) target = $region24
      $region23: #{_lambda_.11} parent=15 // pred_region
        %p379 = scmp.lt.s32.totalorder %s32, 2
        %s380 = scalar_select %p379, %s32, 2
        %s381 = smul.addr %s380, 12
        %s382 = smul.addr %s381, 4
        %s383 = scalar_lea.vmem %s2, %s382
      $region24: #{_lambda_.11} parent=15 // pred_fallthru
        _
      // Predicated region
      $region25: #{_lambda_.11} parent=15 // pred_check
        %p384 = pneg %p108
      $region26: #{_lambda_.11} parent=15 // pred_check_branch
        %386 = sbr.rel (%p384) target = $region28
      $region27: #{_lambda_.11} parent=15 // pred_region
        %p387 = scmp.lt.s32.totalorder %s32, 2
        %s388 = scalar_select %p387, %s32, 2
        %s389 = scalar_lea.vmem %s3, %s388
      $region28: #{_lambda_.11} parent=15 // pred_fallthru
        _
      // Predicated region
      $region29: #{_lambda_.11} parent=15 // pred_check
        %p390 = pneg %p134
      $region30: #{_lambda_.11} parent=15 // pred_check_branch
        %392 = sbr.rel (%p390) target = $region32
      $region31: #{_lambda_.11} parent=15 // pred_region
        %p393 = scmp.lt.s32.totalorder %s32, 2
        %s394 = scalar_select %p393, %s32, 2
        %s395 = scalar_lea.vmem %s4, %s394
      $region32: #{_lambda_.11} parent=15 // pred_fallthru
        _
      // Predicated region
      $region33: #{_lambda_.11} parent=15 // pred_check
        %p396 = pneg %p160
      $region34: #{_lambda_.11} parent=15 // pred_check_branch
        %398 = sbr.rel (%p396) target = $region36
      $region35: #{_lambda_.11} parent=15 // pred_region
        %p399 = scmp.lt.s32.totalorder %s32, 2
        %s400 = scalar_select %p399, %s32, 2
        %s401 = scalar_lea.vmem %s5, %s400
      $region36: #{_lambda_.11} parent=15 // pred_fallthru
        _
      // Predicated region
      $region37: #{_lambda_.11} parent=15 // pred_check
        %p402 = pneg %p186
      $region38: #{_lambda_.11} parent=15 // pred_check_branch
        %404 = sbr.rel (%p402) target = $region40
      $region39: #{_lambda_.11} parent=15 // pred_region
        %p405 = scmp.lt.s32.totalorder %s32, 2
        %s406 = scalar_select %p405, %s32, 2
        %s407 = smul.addr %s406, 12
        %s408 = smul.addr %s407, 4
        %s409 = scalar_lea.vmem %s6, %s408
      $region40: #{_lambda_.11} parent=15 // pred_fallthru
        _
      // Predicated region
      $region41: #{_lambda_.11} parent=15 // pred_check
        %p410 = pneg %p212
      $region42: #{_lambda_.11} parent=15 // pred_check_branch
        %412 = sbr.rel (%p410) target = $region44
      $region43: #{_lambda_.11} parent=15 // pred_region
        %p413 = scmp.lt.s32.totalorder %s32, 2
        %s414 = scalar_select %p413, %s32, 2
        %s415 = scalar_lea.vmem %s7, %s414
      $region44: #{_lambda_.11} parent=15 // pred_fallthru
        _
      // Predicated region
      $region45: #{_lambda_.11} parent=15 // pred_check
        %p416 = pneg %p238
      $region46: #{_lambda_.11} parent=15 // pred_check_branch
        %418 = sbr.rel (%p416) target = $region48
      $region47: #{_lambda_.11} parent=15 // pred_region
        %p419 = scmp.lt.s32.totalorder %s32, 2
        %s420 = scalar_select %p419, %s32, 2
        %s421 = scalar_lea.vmem %s8, %s420
      $region48: #{_lambda_.11} parent=15 // pred_fallthru
        _
      // Predicated region
      $region49: #{_lambda_.11} parent=15 // pred_check
        %p422 = pneg %p264
      $region50: #{_lambda_.11} parent=15 // pred_check_branch
        %424 = sbr.rel (%p422) target = $region52
      $region51: #{_lambda_.11} parent=15 // pred_region
        %p425 = scmp.lt.s32.totalorder %s32, 2
        %s426 = scalar_select %p425, %s32, 2
        %s427 = scalar_lea.vmem %s9, %s426
      $region52: #{_lambda_.11} parent=15 // pred_fallthru
        _
      // Predicated region
      $region53: #{_lambda_.11} parent=15 // pred_check
        %p428 = pneg %p290
      $region54: #{_lambda_.11} parent=15 // pred_check_branch
        %430 = sbr.rel (%p428) target = $region56
      $region55: #{_lambda_.11} parent=15 // pred_region
        %p431 = scmp.lt.s32.totalorder %s32, 2
        %s432 = scalar_select %p431, %s32, 2
        %s433 = scalar_lea.vmem %s10, %s432
      $region56: #{_lambda_.11} parent=15 // pred_fallthru
        _
      // Predicated region
      $region57: #{_lambda_.11} parent=15 // pred_check
        %p434 = pneg %p316
      $region58: #{_lambda_.11} parent=15 // pred_check_branch
        %436 = sbr.rel (%p434) target = $region60
      $region59: #{_lambda_.11} parent=15 // pred_region
        %p437 = scmp.lt.s32.totalorder %s32, 2
        %s438 = scalar_select %p437, %s32, 2
        %s439 = scalar_lea.vmem %s11, %s438
      $region60: #{_lambda_.11} parent=15 // pred_fallthru
        _
    $region16: #{_lambda_.11} parent=5 // pred_fallthru
      _
    %p440 = scmp.le.s32.totalorder 1, %s24
    %p441 = scmp.lt.s32.totalorder %s24, 7
    %p442 = pnand %p440, %p441
    %p443 = pneg %p442
    // Predicated region
    $region61: #{_lambda_.11} parent=5 // pred_check
      _
    $region62: #{_lambda_.11} parent=5 // pred_check_branch
      %445 = sbr.rel (%p442) target = $region64
    $region63: #{_lambda_.11} parent=5 // pred_region
      %s446 = ssub.s32 %s24, 1
      %p447 = scmp.lt.s32.totalorder %s33, 1
      %s448 = scalar_select %p447, %s33, 1
      %s449 = smul.addr %s448, 8
      %s450 = scalar_lea.vmem %s1, %s449
      %p451 = pneg %p62
      %p452 = pneg %p59
      %p453 = scmp.lt.s32.totalorder %s34, 2
      %s454 = scalar_select %p453, %s34, 2
      %s455 = smul.addr %s454, 12
      %s456 = smul.addr %s455, 4
      %s457 = scalar_lea.vmem %s2, %s456
      %p458 = pneg %p88
      %p459 = pneg %p85
      %p460 = scmp.lt.s32.totalorder %s34, 2
      %s461 = scalar_select %p460, %s34, 2
      %s462 = scalar_lea.vmem %s3, %s461
      %p463 = pneg %p114
      %p464 = pneg %p111
      %p465 = scmp.lt.s32.totalorder %s34, 2
      %s466 = scalar_select %p465, %s34, 2
      %s467 = scalar_lea.vmem %s4, %s466
      %p468 = pneg %p140
      %p469 = pneg %p137
      %p470 = scmp.lt.s32.totalorder %s34, 2
      %s471 = scalar_select %p470, %s34, 2
      %s472 = scalar_lea.vmem %s5, %s471
      %p473 = pneg %p166
      %p474 = pneg %p163
      %p475 = scmp.lt.s32.totalorder %s34, 2
      %s476 = scalar_select %p475, %s34, 2
      %s477 = smul.addr %s476, 12
      %s478 = smul.addr %s477, 4
      %s479 = scalar_lea.vmem %s6, %s478
      %p480 = pneg %p192
      %p481 = pneg %p189
      %p482 = scmp.lt.s32.totalorder %s34, 2
      %s483 = scalar_select %p482, %s34, 2
      %s484 = scalar_lea.vmem %s7, %s483
      %p485 = pneg %p218
      %p486 = pneg %p215
      %p487 = scmp.lt.s32.totalorder %s34, 2
      %s488 = scalar_select %p487, %s34, 2
      %s489 = scalar_lea.vmem %s8, %s488
      %p490 = pneg %p244
      %p491 = pneg %p241
      %p492 = scmp.lt.s32.totalorder %s34, 2
      %s493 = scalar_select %p492, %s34, 2
      %s494 = scalar_lea.vmem %s9, %s493
      %p495 = pneg %p270
      %p496 = pneg %p267
      %p497 = scmp.lt.s32.totalorder %s34, 2
      %s498 = scalar_select %p497, %s34, 2
      %s499 = scalar_lea.vmem %s10, %s498
      %p500 = pneg %p296
      %p501 = pneg %p293
      %p502 = scmp.lt.s32.totalorder %s34, 2
      %s503 = scalar_select %p502, %s34, 2
      %s504 = scalar_lea.vmem %s11, %s503
      %p505 = pneg %p322
      %p506 = pneg %p319
      %p507 = pneg %p350
      %p508 = pneg %p347
      %p509 = scmp.lt.s32.totalorder %s34, 2
      %s510 = scalar_select %p509, %s34, 2
      %p511 = scmp.lt.s32.totalorder %s33, 1
      %s512 = scalar_select %p511, %s33, 1
      %s513 = smul.addr %s510, 2
      %s514 = sadd.s32 %s512, %s513
      %s515 = scalar_lea.vmem %s12, %s514
      %p516 = scmp.lt.s32.totalorder %s33, 1
      %s517 = scalar_select %p516, %s33, 1
      %s518 = smul.addr %s517, 8
      %s519 = scalar_lea.vmem %s1, %s518
      %p520 = scmp.lt.s32.totalorder %s34, 2
      %s521 = scalar_select %p520, %s34, 2
      %s522 = smul.addr %s521, 12
      %s523 = smul.addr %s522, 4
      %s524 = scalar_lea.vmem %s2, %s523
      %p525 = scmp.lt.s32.totalorder %s34, 2
      %s526 = scalar_select %p525, %s34, 2
      %s527 = scalar_lea.vmem %s3, %s526
      %p528 = scmp.lt.s32.totalorder %s34, 2
      %s529 = scalar_select %p528, %s34, 2
      %s530 = scalar_lea.vmem %s4, %s529
      %p531 = scmp.lt.s32.totalorder %s34, 2
      %s532 = scalar_select %p531, %s34, 2
      %s533 = scalar_lea.vmem %s5, %s532
      %p534 = scmp.lt.s32.totalorder %s34, 2
      %s535 = scalar_select %p534, %s34, 2
      %s536 = smul.addr %s535, 12
      %s537 = smul.addr %s536, 4
      %s538 = scalar_lea.vmem %s6, %s537
      %p539 = scmp.lt.s32.totalorder %s34, 2
      %s540 = scalar_select %p539, %s34, 2
      %s541 = scalar_lea.vmem %s7, %s540
      %p542 = scmp.lt.s32.totalorder %s34, 2
      %s543 = scalar_select %p542, %s34, 2
      %s544 = scalar_lea.vmem %s8, %s543
      %p545 = scmp.lt.s32.totalorder %s34, 2
      %s546 = scalar_select %p545, %s34, 2
      %s547 = scalar_lea.vmem %s9, %s546
      %p548 = scmp.lt.s32.totalorder %s34, 2
      %s549 = scalar_select %p548, %s34, 2
      %s550 = scalar_lea.vmem %s10, %s549
      %p551 = scmp.lt.s32.totalorder %s34, 2
      %s552 = scalar_select %p551, %s34, 2
      %s553 = scalar_lea.vmem %s11, %s552
      %p554 = scmp.lt.s32.totalorder %s34, 2
      %s555 = scalar_select %p554, %s34, 2
      %p556 = scmp.lt.s32.totalorder %s33, 1
      %s557 = scalar_select %p556, %s33, 1
      %s558 = smul.addr %s555, 2
      %s559 = sadd.s32 %s557, %s558
      %s560 = scalar_lea.vmem %s12, %s559
      %s562 = sld [smem:[#allocation3 + %s33]]
      %v563 = vlaneseq
      %v564 = vshrl.u32 %v563, 7
      %v565 = vstv %s562
      %vm566 = vcmp.lt.s32.totalorder %v564, %v565
      %v567 = vld [vmem:[%s519] sm:$0xff]
      %v568 = vsel %vm566, 1, 0
      %vm569 = vcmp.eq.s32.totalorder %v568, 1
      %v570 = vsel %vm569, %v567, 0.0
      %v571 = vld [vmem:[%s524] sm:$0xf]
      %v572 = vld [vmem:[%s524 + $0x4] sm:$0xf]
      %v573 = vld [vmem:[%s524 + $0x8] sm:$0xf]
      %v574 = vld [vmem:[%s524 + $0xc] sm:$0xf]
      %v575 = vld [vmem:[%s524 + $0x10] sm:$0xf]
      %v576 = vld [vmem:[%s524 + $0x14] sm:$0xf]
      %v577 = vld [vmem:[%s524 + $0x18] sm:$0xf]
      %v578 = vld [vmem:[%s524 + $0x1c] sm:$0xf]
      %v579 = vld [vmem:[%s524 + $0x20] sm:$0xf]
      %v580 = vld [vmem:[%s524 + $0x24] sm:$0xf]
      %v581 = vld [vmem:[%s524 + $0x28] sm:$0xf]
      %v582 = vld [vmem:[%s524 + $0x2c] sm:$0xf]
      %v583 = vld [vmem:[%s527] sm:$0x1]
      %v584 = vrot.slane %v570, 7
      %v585 = vadd.s32 %v564, 4294967295
      %vm586 = vcmp.ge.s32.totalorder %v585, 0
      %vm587 = vcmp.lt.s32.totalorder %v585, 8
      %vm588 = vmand %vm586, %vm587
      %v589 = vsel %vm588, 1, 0
      %vm590 = vcmp.eq.s32.totalorder %v589, 1
      %v591 = vsel %vm590, %v584, 0.0
      %v592 = vrot.slane %v570, 1
      %v593 = vadd.s32 %v564, 1
      %vm594 = vcmp.ge.s32.totalorder %v593, 0
      %vm595 = vcmp.lt.s32.totalorder %v593, 8
      %vm596 = vmand %vm594, %vm595
      %v597 = vsel %vm596, 1, 0
      %vm598 = vcmp.eq.s32.totalorder %v597, 1
      %v599 = vsel %vm598, %v592, 0.0
      %601 = vrot.lane.b32.xlu0 %v570, 32
      %v602 = vpop.permute.xlu0 %601
      %605 = vrot.lane.b32.xlu0 %v599, 64
      %v606 = vpop.permute.xlu0 %605
      %vm608 = vcmask 261120
      %v609 = vsel %vm608, %v591, %v602
      %vm610 = vcmask 523264
      %v611 = vsel %vm610, %v609, %v606
      %v612 = vpack.c.bf16 %v611, %v611
      %v614 = vlaneseq
      %v615 = vshrl.u32 %v614, 7
      %v616 = vsub.s32 0, %v615
      %v617 = vrot.slane %v583, %v616
      %v631 = vunpack.c.l.b16 %v571
      %v632 = vunpack.c.l.b16 %v572
      %v633 = vunpack.c.l.b16 %v573
      %v634 = vunpack.c.l.b16 %v574
      %v635 = vunpack.c.l.b16 %v575
      %v636 = vunpack.c.l.b16 %v576
      %v637 = vunpack.c.l.b16 %v577
      %v638 = vunpack.c.l.b16 %v578
      %v639 = vunpack.c.l.b16 %v579
      %v640 = vunpack.c.l.b16 %v580
      %v641 = vunpack.c.l.b16 %v581
      %v642 = vunpack.c.l.b16 %v582
      %v643 = vpack.c.b16 %v632, %v631
      %v644 = vpack.c.b16 %v634, %v633
      %v645 = vpack.c.b16 %v636, %v635
      %v646 = vpack.c.b16 %v638, %v637
      %v647 = vpack.c.b16 %v640, %v639
      %v648 = vpack.c.b16 %v642, %v641
      %vm655 = vcmask 785408
      %v657 = vsel %vm655, %v612, 0
      %659 = vmatprep.subr.bf16.mxu0 0
      %660 = vmatpush1.bf16.msra.mxu0 %v643
      %661 = vmatprep.subr.bf16.mxu0 0
      %662 = vmatpush1.bf16.msra.mxu0 %v644
      %663 = vmatprep.subr.bf16.mxu0 0
      %664 = vmatpush1.bf16.msra.mxu0 %v645
      %665 = vmatprep.subr.bf16.mxu0 0
      %666 = vmatpush1.bf16.msra.mxu0 %v646
      %667 = vmatprep.subr.bf16.mxu0 0
      %668 = vmatpush1.bf16.msra.mxu0 %v647
      %669 = vmatprep.subr.bf16.mxu0 0
      %670 = vmatpush1.bf16.msra.mxu0 %v648
      %671 = vmatprep.subr.bf16.mxu0 0
      %672 = vmatpush1.bf16.msra.mxu0 0
      %673 = vmatprep.subr.bf16.mxu0 0
      %674 = vmatpush1.bf16.msra.mxu0 0
      %675 = vmatprep.subr.bf16.mxu0 0
      %676 = vmatpush1.bf16.msra.mxu0 0
      %677 = vmatprep.subr.bf16.mxu0 0
      %678 = vmatpush1.bf16.msra.mxu0 0
      %679 = vmatprep.subr.bf16.mxu0 0
      %680 = vmatpush1.bf16.msra.mxu0 0
      %681 = vmatprep.subr.bf16.mxu0 0
      %682 = vmatpush1.bf16.msra.mxu0 0
      %683 = vmatprep.subr.bf16.mxu0 0
      %684 = vmatpush1.bf16.msra.mxu0 0
      %685 = vmatprep.subr.bf16.mxu0 0
      %686 = vmatpush1.bf16.msra.mxu0 0
      %687 = vmatprep.subr.bf16.mxu0 0
      %688 = vmatpush1.bf16.msra.mxu0 0
      %689 = vmatprep.subr.bf16.mxu0 0
      %690 = vmatpush1.bf16.msra.mxu0 0
      %691 = vmatprep.mubr.bf16.mxu0 0
      %692 = vmatmul.mubr.bf16.gmra.mrb[0].mxu0 %v657
      %v693 = vpop.f32.mrb[0].mxu0
      %v694 = vadd.f32 %v617, %v693
      %v695 = vpop.f32.mrb[0].mxu0
      %v696 = vpop.f32.mrb[0].mxu0
      %v697 = vpop.f32.mrb[0].mxu0
      %698 = vdwg.mxu0
      %v699 = vmax.f32 %v694, 0.0
      %v700 = vld [vmem:[%s530] sm:$0x1]
      %v701 = vld [vmem:[%s533] sm:$0x1]
      %v702 = vsel %vm608, %v699, 0.0
      %703 = vadd.xlane.f32.xlu0 %v702
      %v704 = vpop.xlane.xlu0 %703
      %v705 = vrcp.pop 32.0
      %v706 = vmul.f32 %v704, %v705
      %v707 = vsub.f32 %v699, %v706
      %v708 = vmul.f32 %v707, %v707
      %v709 = vsel %vm608, %v708, 0.0
      %710 = vadd.xlane.f32.xlu0 %v709
      %v711 = vpop.xlane.xlu0 %710
      %v712 = vmul.f32 %v711, %v705
      %v713 = vadd.f32 %v712, 0.0001
      %v714 = vrsqrt.pop %v713
      %v715 = vmul.f32 %v707, %v714
      %v717 = vlaneseq
      %v718 = vshrl.u32 %v717, 7
      %v719 = vsub.s32 0, %v718
      %v720 = vrot.slane %v700, %v719
      %v722 = vmul.f32 %v715, %v720
      %v724 = vlaneseq
      %v725 = vshrl.u32 %v724, 7
      %v726 = vsub.s32 0, %v725
      %v727 = vrot.slane %v701, %v726
      %v729 = vadd.f32 %v722, %v727
      %v730 = vsel %vm569, %v729, 0.0
      %v731 = vld [vmem:[%s538] sm:$0xf]
      %v732 = vld [vmem:[%s538 + $0x4] sm:$0xf]
      %v733 = vld [vmem:[%s538 + $0x8] sm:$0xf]
      %v734 = vld [vmem:[%s538 + $0xc] sm:$0xf]
      %v735 = vld [vmem:[%s538 + $0x10] sm:$0xf]
      %v736 = vld [vmem:[%s538 + $0x14] sm:$0xf]
      %v737 = vld [vmem:[%s538 + $0x18] sm:$0xf]
      %v738 = vld [vmem:[%s538 + $0x1c] sm:$0xf]
      %v739 = vld [vmem:[%s538 + $0x20] sm:$0xf]
      %v740 = vld [vmem:[%s538 + $0x24] sm:$0xf]
      %v741 = vld [vmem:[%s538 + $0x28] sm:$0xf]
      %v742 = vld [vmem:[%s538 + $0x2c] sm:$0xf]
      %v743 = vld [vmem:[%s541] sm:$0x1]
      %v744 = vrot.slane %v730, 7
      %v745 = vsel %vm590, %v744, 0.0
      %v746 = vrot.slane %v730, 1
      %v747 = vsel %vm598, %v746, 0.0
      %749 = vrot.lane.b32.xlu0 %v730, 32
      %v750 = vpop.permute.xlu0 %749
      %753 = vrot.lane.b32.xlu0 %v747, 64
      %v754 = vpop.permute.xlu0 %753
      %v756 = vsel %vm608, %v745, %v750
      %v757 = vsel %vm610, %v756, %v754
      %v758 = vpack.c.bf16 %v757, %v757
      %v760 = vlaneseq
      %v761 = vshrl.u32 %v760, 7
      %v762 = vsub.s32 0, %v761
      %v763 = vrot.slane %v743, %v762
      %v777 = vunpack.c.l.b16 %v731
      %v778 = vunpack.c.l.b16 %v732
      %v779 = vunpack.c.l.b16 %v733
      %v780 = vunpack.c.l.b16 %v734
      %v781 = vunpack.c.l.b16 %v735
      %v782 = vunpack.c.l.b16 %v736
      %v783 = vunpack.c.l.b16 %v737
      %v784 = vunpack.c.l.b16 %v738
      %v785 = vunpack.c.l.b16 %v739
      %v786 = vunpack.c.l.b16 %v740
      %v787 = vunpack.c.l.b16 %v741
      %v788 = vunpack.c.l.b16 %v742
      %v789 = vpack.c.b16 %v778, %v777
      %v790 = vpack.c.b16 %v780, %v779
      %v791 = vpack.c.b16 %v782, %v781
      %v792 = vpack.c.b16 %v784, %v783
      %v793 = vpack.c.b16 %v786, %v785
      %v794 = vpack.c.b16 %v788, %v787
      %v802 = vsel %vm655, %v758, 0
      %804 = vmatprep.subr.bf16.mxu0 0
      %805 = vmatpush1.bf16.msra.mxu0 %v789
      %806 = vmatprep.subr.bf16.mxu0 0
      %807 = vmatpush1.bf16.msra.mxu0 %v790
      %808 = vmatprep.subr.bf16.mxu0 0
      %809 = vmatpush1.bf16.msra.mxu0 %v791
      %810 = vmatprep.subr.bf16.mxu0 0
      %811 = vmatpush1.bf16.msra.mxu0 %v792
      %812 = vmatprep.subr.bf16.mxu0 0
      %813 = vmatpush1.bf16.msra.mxu0 %v793
      %814 = vmatprep.subr.bf16.mxu0 0
      %815 = vmatpush1.bf16.msra.mxu0 %v794
      %816 = vmatprep.subr.bf16.mxu0 0
      %817 = vmatpush1.bf16.msra.mxu0 0
      %818 = vmatprep.subr.bf16.mxu0 0
      %819 = vmatpush1.bf16.msra.mxu0 0
      %820 = vmatprep.subr.bf16.mxu0 0
      %821 = vmatpush1.bf16.msra.mxu0 0
      %822 = vmatprep.subr.bf16.mxu0 0
      %823 = vmatpush1.bf16.msra.mxu0 0
      %824 = vmatprep.subr.bf16.mxu0 0
      %825 = vmatpush1.bf16.msra.mxu0 0
      %826 = vmatprep.subr.bf16.mxu0 0
      %827 = vmatpush1.bf16.msra.mxu0 0
      %828 = vmatprep.subr.bf16.mxu0 0
      %829 = vmatpush1.bf16.msra.mxu0 0
      %830 = vmatprep.subr.bf16.mxu0 0
      %831 = vmatpush1.bf16.msra.mxu0 0
      %832 = vmatprep.subr.bf16.mxu0 0
      %833 = vmatpush1.bf16.msra.mxu0 0
      %834 = vmatprep.subr.bf16.mxu0 0
      %835 = vmatpush1.bf16.msra.mxu0 0
      %836 = vmatprep.mubr.bf16.mxu0 0
      %837 = vmatmul.mubr.bf16.gmra.mrb[0].mxu0 %v802
      %v838 = vpop.f32.mrb[0].mxu0
      %v839 = vadd.f32 %v763, %v838
      %v840 = vpop.f32.mrb[0].mxu0
      %v841 = vpop.f32.mrb[0].mxu0
      %v842 = vpop.f32.mrb[0].mxu0
      %843 = vdwg.mxu0
      %v844 = vmax.f32 %v839, 0.0
      %v845 = vld [vmem:[%s544] sm:$0x1]
      %v846 = vld [vmem:[%s547] sm:$0x1]
      %v847 = vsel %vm608, %v844, 0.0
      %848 = vadd.xlane.f32.xlu0 %v847
      %v849 = vpop.xlane.xlu0 %848
      %v850 = vmul.f32 %v849, %v705
      %v851 = vsub.f32 %v844, %v850
      %v852 = vmul.f32 %v851, %v851
      %v853 = vsel %vm608, %v852, 0.0
      %854 = vadd.xlane.f32.xlu0 %v853
      %v855 = vpop.xlane.xlu0 %854
      %v856 = vmul.f32 %v855, %v705
      %v857 = vadd.f32 %v856, 0.0001
      %v858 = vrsqrt.pop %v857
      %v859 = vmul.f32 %v851, %v858
      %v861 = vlaneseq
      %v862 = vshrl.u32 %v861, 7
      %v863 = vsub.s32 0, %v862
      %v864 = vrot.slane %v845, %v863
      %v866 = vmul.f32 %v859, %v864
      %v868 = vlaneseq
      %v869 = vshrl.u32 %v868, 7
      %v870 = vsub.s32 0, %v869
      %v871 = vrot.slane %v846, %v870
      %v873 = vadd.f32 %v866, %v871
      %v874 = vsel %vm569, %v873, 0.0
      %v875 = vpack.c.bf16 %v874, %v874
      %v876 = vld [vmem:[%s550] sm:$0x1]
      %v877 = vld [vmem:[%s553] sm:$0x1]
      %879 = vset.pattern.permute.xlu0 0
      %880 = vperm.xlu0 %879, %v877
      %v881 = vpop.permute.xlu0 %880
      %v883 = vlaneseq
      %v884 = vshrl.u32 %v883, 7
      %v885 = vsub.s32 0, %v884
      %v886 = vrot.slane %v881, %v885
      %v888 = vsel %vm608, %v876, 0
      %v891 = vsel %vm608, %v875, 0
      %893 = vmatprep.subr.bf16.mxu0 0
      %894 = vmatpush1.bf16.xpose.msra.mxu0 %v891
      %895 = vmatprep.subr.bf16.mxu0 0
      %896 = vmatpush1.bf16.xpose.msra.mxu0 0
      %897 = vmatprep.subr.bf16.mxu0 0
      %898 = vmatpush1.bf16.xpose.msra.mxu0 0
      %899 = vmatprep.subr.bf16.mxu0 0
      %900 = vmatpush1.bf16.xpose.msra.mxu0 0
      %901 = vmatprep.subr.bf16.mxu0 0
      %902 = vmatpush1.bf16.xpose.msra.mxu0 0
      %903 = vmatprep.subr.bf16.mxu0 0
      %904 = vmatpush1.bf16.xpose.msra.mxu0 0
      %905 = vmatprep.subr.bf16.mxu0 0
      %906 = vmatpush1.bf16.xpose.msra.mxu0 0
      %907 = vmatprep.subr.bf16.mxu0 0
      %908 = vmatpush1.bf16.xpose.msra.mxu0 0
      %909 = vmatprep.subr.bf16.mxu0 0
      %910 = vmatpush1.bf16.xpose.msra.mxu0 0
      %911 = vmatprep.subr.bf16.mxu0 0
      %912 = vmatpush1.bf16.xpose.msra.mxu0 0
      %913 = vmatprep.subr.bf16.mxu0 0
      %914 = vmatpush1.bf16.xpose.msra.mxu0 0
      %915 = vmatprep.subr.bf16.mxu0 0
      %916 = vmatpush1.bf16.xpose.msra.mxu0 0
      %917 = vmatprep.subr.bf16.mxu0 0
      %918 = vmatpush1.bf16.xpose.msra.mxu0 0
      %919 = vmatprep.subr.bf16.mxu0 0
      %920 = vmatpush1.bf16.xpose.msra.mxu0 0
      %921 = vmatprep.subr.bf16.mxu0 0
      %922 = vmatpush1.bf16.xpose.msra.mxu0 0
      %923 = vmatprep.subr.bf16.mxu0 0
      %924 = vmatpush1.bf16.xpose.msra.mxu0 0
      %925 = vmatprep.mubr.bf16.mxu0 0
      %926 = vmatmul.mubr.bf16.gmra.mrb[0].mxu0 %v888
      %v927 = vpop.f32.mrb[0].mxu0
      %v928 = vadd.f32 %v886, %v927
      %v929 = vpop.f32.mrb[0].mxu0
      %v930 = vpop.f32.mrb[0].mxu0
      %v931 = vpop.f32.mrb[0].mxu0
      %932 = vdwg.mxu0
      %v933 = vlaneseq
      %v934 = vand.u32 %v933, 127
      %vm935 = vcmp.lt.s32.totalorder %v934, %v565
      %v936 = vsel %vm935, %v928, 0.0
      %vm937 = vcmask 57344
      %938 = vst.msk [vmem:[%s560] sm:$0x1] %vm937, %v936
      %p939 = scmp.lt.s32.totalorder %s34, 2
      %s940 = scalar_select %p939, %s34, 2
      %p941 = scmp.lt.s32.totalorder %s33, 1
      %s942 = scalar_select %p941, %s33, 1
      %s943 = smul.addr %s940, 2
      %s944 = sadd.s32 %s942, %s943
      %s945 = scalar_lea.vmem %s12, %s944
      // Predicated region
      $region65: #{_lambda_.11} parent=63 // pred_check
        %p946 = pneg %p347
      $region66: #{_lambda_.11} parent=63 // pred_check_branch
        %948 = sbr.rel (%p946) target = $region68
      $region67: #{_lambda_.11} parent=63 // pred_region
        _
      $region68: #{_lambda_.11} parent=63 // pred_fallthru
        _
    $region64: #{_lambda_.11} parent=5 // pred_fallthru
      _
    %p949 = scmp.le.s32.totalorder 2, %s24
    // Predicated region
    $region69: #{_lambda_.11} parent=5 // pred_check
      %p950 = pneg %p949
    $region70: #{_lambda_.11} parent=5 // pred_check_branch
      %952 = sbr.rel (%p950) target = $region72
    $region71: #{_lambda_.11} parent=5 // pred_region
      %s953 = ssub.s32 %s24, 2
      // Predicated region
      $region73: #{_lambda_.11} parent=71 // pred_check
        %p954 = pneg %p353
      $region74: #{_lambda_.11} parent=71 // pred_check_branch
        %956 = sbr.rel (%p954) target = $region76
      $region75: #{_lambda_.11} parent=71 // pred_region
        %p957 = scmp.lt.s32.totalorder %s36, 2
        %s958 = scalar_select %p957, %s36, 2
        %p959 = scmp.lt.s32.totalorder %s35, 1
        %s960 = scalar_select %p959, %s35, 1
        %s961 = smul.addr %s958, 2
        %s962 = sadd.s32 %s960, %s961
        %s963 = scalar_lea.vmem %s12, %s962
      $region76: #{_lambda_.11} parent=71 // pred_fallthru
        _
    $region72: #{_lambda_.11} parent=5 // pred_fallthru
      _
  $region6: #{_lambda_.11} parent=0 // loop_footer
    %s28 = sadd.s32 1, %s24
  $region7: #{_lambda_.11} parent=0 // loop_footer_branch
    %23 = sbr.rel target = $region3
  $region8: #{_lambda_.11} parent=0 // loop_exit
    _

</llo_original>
